<compile_context>
chip_gen: v6e
topology: v6e:2x2x1
jax: 0.10.0
libtpu: 0.0.40
codegen_flags: <defaults>
</compile_context>

<pallas_src>
import functools

import jax
import jax.numpy as jnp
from jax import lax
from jax.experimental import pallas as pl
from jax.experimental.pallas import tpu as pltpu


def _scoped_vmem_limit_bytes():
    """Generation-aware scoped VMEM limit: ~3/4 of physical, <= 100 MiB."""
    try:
        cap = int(pltpu.get_tpu_info().vmem_capacity_bytes)
        return min(100 * 1024 * 1024, (cap * 3) // 4)
    except Exception:
        return 32 * 1024 * 1024  # conservative fallback, safe on all gens


def _hausdorff_er_kernel(pred_ref, target_ref, sum_ref, *, erosions, alpha,
                         seg_w, n_seg, total_b):
    # pred_ref/target_ref blocks: (1, H, n_seg*seg_w); sum_ref block: (1,1,1).
    p = jax.nn.sigmoid(pred_ref[0].astype(jnp.float32))
    t = target_ref[0].astype(jnp.float32)
    b = (p - t) ** 2
    H, Wp = b.shape  # Wp == n_seg * seg_w

    # Loop-invariant boundary masks (bool), hoisted once.
    row = lax.broadcasted_iota(jnp.int32, (H, Wp), 0)
    col = lax.broadcasted_iota(jnp.int32, (H, Wp), 1)
    if n_seg == 1:
        scol = col
    else:
        # seg_w is guaranteed to be a power of two when n_seg > 1.
        scol = jnp.bitwise_and(col, seg_w - 1)
        scol1 = jnp.bitwise_and(
            lax.broadcasted_iota(jnp.int32, (1, Wp), 1), seg_w - 1)
    m_up = row > 0
    m_down = row < H - 1
    m_left = scol > 0
    m_right = scol < seg_w - 1

    acc = jnp.zeros((H, Wp), jnp.float32)

    # Static unroll: `erosions` is a Python int; weights fold to constants.
    for k in range(erosions):
        # 5-point cross stencil with zero ("constant", cval=0.0) boundary.
        # pltpu.roll needs shift >= 0, so backward shifts use (size - 1);
        # wrapped rows / columns (and columns crossing a packed-image
        # boundary) are zeroed by the masks.
        up = jnp.where(m_up, pltpu.roll(b, 1, 0), 0.0)
        down = jnp.where(m_down, pltpu.roll(b, H - 1, 0), 0.0)
        left = jnp.where(m_left, pltpu.roll(b, 1, 1), 0.0)
        right = jnp.where(m_right, pltpu.roll(b, Wp - 1, 1), 0.0)
        # 0.2 stencil scale folded into the normalization scalars below:
        # relu(0.2*s - 0.5) == 0.2 * relu(s - 2.5).
        r = jnp.maximum(b + up + down + left + right - 2.5, 0.0)

        # Per-image min / max: sublane (VPU) reduce first, lanes last.
        mn = jnp.min(r, axis=0, keepdims=True)   # (1, Wp)
        mx = jnp.max(r, axis=0, keepdims=True)   # (1, Wp)
        if n_seg == 1:
            mn = jnp.min(mn, axis=1, keepdims=True)   # (1, 1)
            mx = jnp.max(mx, axis=1, keepdims=True)
        else:
            # Segmented cyclic all-reduce across lanes (segments of width
            # seg_w, a power of two): after log2(seg_w) dual-roll steps each
            # lane holds the min / max of its own packed image.
            shift = 1
            while shift < seg_w:
                wrap = Wp - seg_w + shift
                ok = scol1 >= shift
                mn = jnp.minimum(mn, jnp.where(ok, pltpu.roll(mn, shift, 1),
                                               pltpu.roll(mn, wrap, 1)))
                mx = jnp.maximum(mx, jnp.where(ok, pltpu.roll(mx, shift, 1),
                                               pltpu.roll(mx, wrap, 1)))
                shift *= 2

        # Per-image min/max normalization with ptp == 0 passthrough (matches
        # the reference).  Since normalization is scale invariant the 0.2
        # only survives in the passthrough branch (inv = 0.2).
        ptp = mx - mn
        has_range = ptp > 0.0
        inv = jnp.where(has_range, 1.0, 0.2) / jnp.where(has_range, ptp, 1.0)
        offset = jnp.where(has_range, mn, 0.0)
        b = (r - offset) * inv                   # broadcasts over rows

        acc = acc + float((k + 1) ** alpha) * b  # weight is a Python const

    # Single deferred weighted-sum reduction: sublanes first, lanes last.
    rowsum = jnp.sum(acc, axis=0, keepdims=True)   # (1, Wp)
    if total_b % n_seg != 0:
        # Padded batch segments (only possible in this static case) are
        # masked out of the sum; they never contaminate real segments since
        # the stencil / normalization are segment-isolated.
        valid = total_b - pl.program_id(0) * n_seg
        col1 = lax.broadcasted_iota(jnp.int32, (1, Wp), 1)
        rowsum = jnp.where(col1 < valid * seg_w, rowsum, 0.0)
    sum_ref[0] = jnp.sum(rowsum, axis=1, keepdims=True)


def hausdorff_er_loss(pred, target, alpha=2.0, erosions=10):
    """pred, target: (B, 1, H, W) logits / binary mask -> scalar loss."""
    # TODO(synk): 3D volumetric branch ((b,1,x,y,z) with kernel3D) and the
    # debug=True erosion-snapshot return of the PyTorch module are not
    # implemented; only the 2D forward loss is.
    B, C, H, W = pred.shape
    assert C == 1, "Only a single binary channel is supported"
    p = pred.reshape(B, H, W)      # native dtype; cast to f32 inside kernel
    t = target.reshape(B, H, W)

    # Lane-density transpose only when it actually changes occupancy
    # (W < 128 <= H).  Stencil / reductions are symmetric in H/W, so exact.
    if W < 128 <= H:
        p = jnp.swapaxes(p, 1, 2)
        t = jnp.swapaxes(t, 1, 2)
        H, W = W, H

    # Pack several batch images side by side along the lane axis when the
    # image is narrow (W < 128).  The segmented lane reduction needs W to be
    # a power of two.
    # TODO(synk): non-power-of-two narrow W falls back to unpacked (n_seg=1).
    n_seg = 1
    g_max = max(1, 128 // W)
    if g_max > 1 and B > 1 and (W & (W - 1)) == 0:
        n_seg = max(d for d in range(1, min(B, g_max) + 1) if B % d == 0)
        if n_seg == 1:                       # awkward B: pad instead
            n_seg = min(B, g_max)
    Bp = ((B + n_seg - 1) // n_seg) * n_seg
    if Bp != B:                              # padded segments are masked out
        pad = Bp - B                         # of the in-kernel sum
        p = jnp.concatenate([p, jnp.zeros((pad, H, W), p.dtype)], axis=0)
        t = jnp.concatenate([t, jnp.zeros((pad, H, W), t.dtype)], axis=0)
    G = Bp // n_seg
    Wp = n_seg * W
    if n_seg > 1:
        p = p.reshape(G, n_seg, H, W).transpose(0, 2, 1, 3).reshape(G, H, Wp)
        t = t.reshape(G, n_seg, H, W).transpose(0, 2, 1, 3).reshape(G, H, Wp)
    else:
        p = p.reshape(G, H, Wp)
        t = t.reshape(G, H, Wp)

    kernel = functools.partial(_hausdorff_er_kernel, erosions=erosions,
                               alpha=alpha, seg_w=W, n_seg=n_seg, total_b=B)
    sums = pl.pallas_call(
        kernel,
        out_shape=jax.ShapeDtypeStruct((G, 1, 1), jnp.float32),
        grid_spec=pltpu.PrefetchScalarGridSpec(
            num_scalar_prefetch=0,
            grid=(G,),
            in_specs=[
                pl.BlockSpec((1, H, Wp), lambda g: (g, 0, 0)),
                pl.BlockSpec((1, H, Wp), lambda g: (g, 0, 0)),
            ],
            out_specs=pl.BlockSpec((1, 1, 1), lambda g: (g, 0, 0)),
        ),
        compiler_params=pltpu.CompilerParams(
            dimension_semantics=("parallel",),
            vmem_limit_bytes=_scoped_vmem_limit_bytes(),
        ),
    )(p, t)
    # eroted.mean() over (B, 1, H, W) == sum of per-image sums / (B*H*W).
    return jnp.sum(sums) / (B * H * W)


def _reference_loss(pred, target, alpha=2.0, erosions=10):
    """Pure-JAX reference replicating the numpy/scipy forward pass."""
    p = jax.nn.sigmoid(pred.astype(jnp.float32))[:, 0]
    t = target.astype(jnp.float32)[:, 0]
    bound = (p - t) ** 2
    acc = jnp.zeros_like(bound)
    for k in range(erosions):
        pad = jnp.pad(bound, ((0, 0), (1, 1), (1, 1)))
        dil = 0.2 * (
            pad[:, 1:-1, 1:-1]
            + pad[:, :-2, 1:-1]
            + pad[:, 2:, 1:-1]
            + pad[:, 1:-1, :-2]
            + pad[:, 1:-1, 2:]
        )
        ero = jnp.maximum(dil - 0.5, 0.0)
        mn = ero.min(axis=(1, 2), keepdims=True)
        mx = ero.max(axis=(1, 2), keepdims=True)
        ptp = mx - mn
        ero = jnp.where(ptp != 0.0, (ero - mn) / jnp.where(ptp == 0.0, 1.0, ptp), ero)
        bound = ero
        acc = acc + ero * float(k + 1) ** alpha
    return acc.mean()


def _check(pred, target, alpha=2.0, erosions=10):
    loss = hausdorff_er_loss(pred, target, alpha=alpha, erosions=erosions)
    loss = jax.block_until_ready(loss)
    ref = _reference_loss(pred, target, alpha=alpha, erosions=erosions)
    tol = 1e-4 * max(1.0, abs(float(ref)))
    assert abs(float(loss) - float(ref)) < tol, (float(loss), float(ref))


if __name__ == "__main__":
    key = jax.random.PRNGKey(0)
    k1, k2, k3, k4 = jax.random.split(key, 4)

    # Primary case: (B, 1, H, W) = (2, 1, 16, 16) -> packs 2 images per block.
    B, C, H, W = 2, 1, 16, 16
    pred = 2.0 * jax.random.normal(k1, (B, C, H, W), dtype=jnp.float32)
    target = (jax.random.uniform(k2, (B, C, H, W)) > 0.5).astype(jnp.float32)
    _check(pred, target)

    # Secondary case exercising the padded-segment path (B=3, pack=2, pad=1).
    B2, H2, W2 = 3, 8, 64
    pred2 = 2.0 * jax.random.normal(k3, (B2, 1, H2, W2), dtype=jnp.float32)
    target2 = (jax.random.uniform(k4, (B2, 1, H2, W2)) > 0.5).astype(jnp.float32)
    _check(pred2, target2)

    print("KERNEL_OK")
</pallas_src>

<mosaic_0001>
module attributes {stable_mosaic.version = 11 : i64} {
  func.func @_hausdorff_er_kernel(%arg0: i32, %arg1: memref<1x16x32xf32, #tpu.memory_space<vmem>>, %arg2: memref<1x16x32xf32, #tpu.memory_space<vmem>>, %arg3: memref<1x1x1xf32, #tpu.memory_space<vmem>>) attributes {dimension_semantics = [#tpu.dimension_semantics<parallel>], iteration_bounds = array<i64: 1>, scalar_prefetch = 0 : i64, scratch_operands = 0 : i64, tpu.core_type = #tpu.core_type<tc>, window_params = [{transform_indices = @transform_0, window_bounds = array<i64: 1, 16, 32>}, {transform_indices = @transform_1, window_bounds = array<i64: 1, 16, 32>}, {transform_indices = @transform_2, window_bounds = array<i64: 1, 1, 1>}]} {
    %c0 = arith.constant 0 : index
    %c0_0 = arith.constant 0 : index
    %c0_1 = arith.constant 0 : index
    %0 = vector.load %arg1[%c0, %c0_0, %c0_1] : memref<1x16x32xf32, #tpu.memory_space<vmem>>, vector<1x16x32xf32>
    %1 = vector.shape_cast %0 : vector<1x16x32xf32> to vector<16x32xf32>
    %2 = arith.negf %1 : vector<16x32xf32>
    %3 = math.exp %2 : vector<16x32xf32>
    %cst = arith.constant 1.000000e+00 : f32
    %4 = vector.broadcast %cst : f32 to vector<16x32xf32>
    %5 = arith.addf %4, %3 : vector<16x32xf32>
    %6 = arith.divf %4, %5 : vector<16x32xf32>
    %c0_2 = arith.constant 0 : index
    %c0_3 = arith.constant 0 : index
    %c0_4 = arith.constant 0 : index
    %7 = vector.load %arg2[%c0_2, %c0_3, %c0_4] : memref<1x16x32xf32, #tpu.memory_space<vmem>>, vector<1x16x32xf32>
    %8 = vector.shape_cast %7 : vector<1x16x32xf32> to vector<16x32xf32>
    %9 = arith.subf %6, %8 : vector<16x32xf32>
    %10 = arith.mulf %9, %9 : vector<16x32xf32>
    %11 = tpu.iota {dimensions = array<i32: 0>} : vector<16x32xi32>
    %12 = tpu.iota {dimensions = array<i32: 1>} : vector<16x32xi32>
    %c15_i32 = arith.constant 15 : i32
    %13 = vector.broadcast %c15_i32 : i32 to vector<16x32xi32>
    %14 = arith.andi %12, %13 : vector<16x32xi32>
    %15 = tpu.iota {dimensions = array<i32: 1>} : vector<1x32xi32>
    %c15_i32_5 = arith.constant 15 : i32
    %16 = vector.broadcast %c15_i32_5 : i32 to vector<1x32xi32>
    %17 = arith.andi %15, %16 : vector<1x32xi32>
    %c0_i32 = arith.constant 0 : i32
    %18 = vector.broadcast %c0_i32 : i32 to vector<16x32xi32>
    %19 = arith.cmpi sgt, %11, %18 : vector<16x32xi32>
    %c15_i32_6 = arith.constant 15 : i32
    %20 = vector.broadcast %c15_i32_6 : i32 to vector<16x32xi32>
    %21 = arith.cmpi slt, %11, %20 : vector<16x32xi32>
    %c0_i32_7 = arith.constant 0 : i32
    %22 = vector.broadcast %c0_i32_7 : i32 to vector<16x32xi32>
    %23 = arith.cmpi sgt, %14, %22 : vector<16x32xi32>
    %c15_i32_8 = arith.constant 15 : i32
    %24 = vector.broadcast %c15_i32_8 : i32 to vector<16x32xi32>
    %25 = arith.cmpi slt, %14, %24 : vector<16x32xi32>
    %cst_9 = arith.constant 0.000000e+00 : f32
    %26 = vector.broadcast %cst_9 : f32 to vector<16x32xf32>
    %c1_i32 = arith.constant 1 : i32
    %27 = tpu.dynamic_rotate %10 by %c1_i32 dim 0 : vector<16x32xf32>, i32 -> vector<16x32xf32>
    %cst_10 = arith.constant 0.000000e+00 : f32
    %28 = vector.broadcast %cst_10 : f32 to vector<16x32xf32>
    %29 = arith.select %19, %27, %28 : vector<16x32xi1>, vector<16x32xf32>
    %c15_i32_11 = arith.constant 15 : i32
    %30 = tpu.dynamic_rotate %10 by %c15_i32_11 dim 0 : vector<16x32xf32>, i32 -> vector<16x32xf32>
    %cst_12 = arith.constant 0.000000e+00 : f32
    %31 = vector.broadcast %cst_12 : f32 to vector<16x32xf32>
    %32 = arith.select %21, %30, %31 : vector<16x32xi1>, vector<16x32xf32>
    %c1_i32_13 = arith.constant 1 : i32
    %33 = tpu.dynamic_rotate %10 by %c1_i32_13 dim 1 : vector<16x32xf32>, i32 -> vector<16x32xf32>
    %cst_14 = arith.constant 0.000000e+00 : f32
    %34 = vector.broadcast %cst_14 : f32 to vector<16x32xf32>
    %35 = arith.select %23, %33, %34 : vector<16x32xi1>, vector<16x32xf32>
    %c31_i32 = arith.constant 31 : i32
    %36 = tpu.dynamic_rotate %10 by %c31_i32 dim 1 : vector<16x32xf32>, i32 -> vector<16x32xf32>
    %cst_15 = arith.constant 0.000000e+00 : f32
    %37 = vector.broadcast %cst_15 : f32 to vector<16x32xf32>
    %38 = arith.select %25, %36, %37 : vector<16x32xi1>, vector<16x32xf32>
    %39 = arith.addf %10, %29 : vector<16x32xf32>
    %40 = arith.addf %39, %32 : vector<16x32xf32>
    %41 = arith.addf %40, %35 : vector<16x32xf32>
    %42 = arith.addf %41, %38 : vector<16x32xf32>
    %cst_16 = arith.constant 2.500000e+00 : f32
    %43 = vector.broadcast %cst_16 : f32 to vector<16x32xf32>
    %44 = arith.subf %42, %43 : vector<16x32xf32>
    %cst_17 = arith.constant 0.000000e+00 : f32
    %45 = vector.broadcast %cst_17 : f32 to vector<16x32xf32>
    %46 = arith.maximumf %44, %45 : vector<16x32xf32>
    %cst_18 = arith.constant dense<0x7F800000> : vector<32xf32>
    %47 = vector.multi_reduction <minimumf>, %46, %cst_18 [0] : vector<16x32xf32> to vector<32xf32>
    %48 = vector.shape_cast %47 : vector<32xf32> to vector<1x32xf32>
    %cst_19 = arith.constant dense<0xFF800000> : vector<32xf32>
    %49 = vector.multi_reduction <maximumf>, %46, %cst_19 [0] : vector<16x32xf32> to vector<32xf32>
    %50 = vector.shape_cast %49 : vector<32xf32> to vector<1x32xf32>
    %c1_i32_20 = arith.constant 1 : i32
    %51 = vector.broadcast %c1_i32_20 : i32 to vector<1x32xi32>
    %52 = arith.cmpi sge, %17, %51 : vector<1x32xi32>
    %c1_i32_21 = arith.constant 1 : i32
    %53 = tpu.dynamic_rotate %48 by %c1_i32_21 dim 1 : vector<1x32xf32>, i32 -> vector<1x32xf32>
    %c17_i32 = arith.constant 17 : i32
    %54 = tpu.dynamic_rotate %48 by %c17_i32 dim 1 : vector<1x32xf32>, i32 -> vector<1x32xf32>
    %55 = arith.select %52, %53, %54 : vector<1x32xi1>, vector<1x32xf32>
    %56 = arith.minimumf %48, %55 : vector<1x32xf32>
    %c1_i32_22 = arith.constant 1 : i32
    %57 = tpu.dynamic_rotate %50 by %c1_i32_22 dim 1 : vector<1x32xf32>, i32 -> vector<1x32xf32>
    %c17_i32_23 = arith.constant 17 : i32
    %58 = tpu.dynamic_rotate %50 by %c17_i32_23 dim 1 : vector<1x32xf32>, i32 -> vector<1x32xf32>
    %59 = arith.select %52, %57, %58 : vector<1x32xi1>, vector<1x32xf32>
    %60 = arith.maximumf %50, %59 : vector<1x32xf32>
    %c2_i32 = arith.constant 2 : i32
    %61 = vector.broadcast %c2_i32 : i32 to vector<1x32xi32>
    %62 = arith.cmpi sge, %17, %61 : vector<1x32xi32>
    %c2_i32_24 = arith.constant 2 : i32
    %63 = tpu.dynamic_rotate %56 by %c2_i32_24 dim 1 : vector<1x32xf32>, i32 -> vector<1x32xf32>
    %c18_i32 = arith.constant 18 : i32
    %64 = tpu.dynamic_rotate %56 by %c18_i32 dim 1 : vector<1x32xf32>, i32 -> vector<1x32xf32>
    %65 = arith.select %62, %63, %64 : vector<1x32xi1>, vector<1x32xf32>
    %66 = arith.minimumf %56, %65 : vector<1x32xf32>
    %c2_i32_25 = arith.constant 2 : i32
    %67 = tpu.dynamic_rotate %60 by %c2_i32_25 dim 1 : vector<1x32xf32>, i32 -> vector<1x32xf32>
    %c18_i32_26 = arith.constant 18 : i32
    %68 = tpu.dynamic_rotate %60 by %c18_i32_26 dim 1 : vector<1x32xf32>, i32 -> vector<1x32xf32>
    %69 = arith.select %62, %67, %68 : vector<1x32xi1>, vector<1x32xf32>
    %70 = arith.maximumf %60, %69 : vector<1x32xf32>
    %c4_i32 = arith.constant 4 : i32
    %71 = vector.broadcast %c4_i32 : i32 to vector<1x32xi32>
    %72 = arith.cmpi sge, %17, %71 : vector<1x32xi32>
    %c4_i32_27 = arith.constant 4 : i32
    %73 = tpu.dynamic_rotate %66 by %c4_i32_27 dim 1 : vector<1x32xf32>, i32 -> vector<1x32xf32>
    %c20_i32 = arith.constant 20 : i32
    %74 = tpu.dynamic_rotate %66 by %c20_i32 dim 1 : vector<1x32xf32>, i32 -> vector<1x32xf32>
    %75 = arith.select %72, %73, %74 : vector<1x32xi1>, vector<1x32xf32>
    %76 = arith.minimumf %66, %75 : vector<1x32xf32>
    %c4_i32_28 = arith.constant 4 : i32
    %77 = tpu.dynamic_rotate %70 by %c4_i32_28 dim 1 : vector<1x32xf32>, i32 -> vector<1x32xf32>
    %c20_i32_29 = arith.constant 20 : i32
    %78 = tpu.dynamic_rotate %70 by %c20_i32_29 dim 1 : vector<1x32xf32>, i32 -> vector<1x32xf32>
    %79 = arith.select %72, %77, %78 : vector<1x32xi1>, vector<1x32xf32>
    %80 = arith.maximumf %70, %79 : vector<1x32xf32>
    %c8_i32 = arith.constant 8 : i32
    %81 = vector.broadcast %c8_i32 : i32 to vector<1x32xi32>
    %82 = arith.cmpi sge, %17, %81 : vector<1x32xi32>
    %c8_i32_30 = arith.constant 8 : i32
    %83 = tpu.dynamic_rotate %76 by %c8_i32_30 dim 1 : vector<1x32xf32>, i32 -> vector<1x32xf32>
    %c24_i32 = arith.constant 24 : i32
    %84 = tpu.dynamic_rotate %76 by %c24_i32 dim 1 : vector<1x32xf32>, i32 -> vector<1x32xf32>
    %85 = arith.select %82, %83, %84 : vector<1x32xi1>, vector<1x32xf32>
    %86 = arith.minimumf %76, %85 : vector<1x32xf32>
    %c8_i32_31 = arith.constant 8 : i32
    %87 = tpu.dynamic_rotate %80 by %c8_i32_31 dim 1 : vector<1x32xf32>, i32 -> vector<1x32xf32>
    %c24_i32_32 = arith.constant 24 : i32
    %88 = tpu.dynamic_rotate %80 by %c24_i32_32 dim 1 : vector<1x32xf32>, i32 -> vector<1x32xf32>
    %89 = arith.select %82, %87, %88 : vector<1x32xi1>, vector<1x32xf32>
    %90 = arith.maximumf %80, %89 : vector<1x32xf32>
    %91 = arith.subf %90, %86 : vector<1x32xf32>
    %cst_33 = arith.constant 0.000000e+00 : f32
    %92 = vector.broadcast %cst_33 : f32 to vector<1x32xf32>
    %93 = arith.cmpf ogt, %91, %92 : vector<1x32xf32>
    %cst_34 = arith.constant 1.000000e+00 : f32
    %cst_35 = arith.constant 2.000000e-01 : f32
    %94 = vector.broadcast %cst_34 : f32 to vector<1x32xf32>
    %95 = vector.broadcast %cst_35 : f32 to vector<1x32xf32>
    %96 = arith.select %93, %94, %95 : vector<1x32xi1>, vector<1x32xf32>
    %cst_36 = arith.constant 1.000000e+00 : f32
    %97 = vector.broadcast %cst_36 : f32 to vector<1x32xf32>
    %98 = arith.select %93, %91, %97 : vector<1x32xi1>, vector<1x32xf32>
    %99 = arith.divf %96, %98 : vector<1x32xf32>
    %cst_37 = arith.constant 0.000000e+00 : f32
    %100 = vector.broadcast %cst_37 : f32 to vector<1x32xf32>
    %101 = arith.select %93, %86, %100 : vector<1x32xi1>, vector<1x32xf32>
    %102 = vector.broadcast %101 : vector<1x32xf32> to vector<16x32xf32>
    %103 = arith.subf %46, %102 : vector<16x32xf32>
    %104 = vector.broadcast %99 : vector<1x32xf32> to vector<16x32xf32>
    %105 = arith.mulf %103, %104 : vector<16x32xf32>
    %cst_38 = arith.constant 1.000000e+00 : f32
    %106 = vector.broadcast %cst_38 : f32 to vector<16x32xf32>
    %107 = arith.mulf %106, %105 : vector<16x32xf32>
    %108 = arith.addf %26, %107 : vector<16x32xf32>
    %c1_i32_39 = arith.constant 1 : i32
    %109 = tpu.dynamic_rotate %105 by %c1_i32_39 dim 0 : vector<16x32xf32>, i32 -> vector<16x32xf32>
    %cst_40 = arith.constant 0.000000e+00 : f32
    %110 = vector.broadcast %cst_40 : f32 to vector<16x32xf32>
    %111 = arith.select %19, %109, %110 : vector<16x32xi1>, vector<16x32xf32>
    %c15_i32_41 = arith.constant 15 : i32
    %112 = tpu.dynamic_rotate %105 by %c15_i32_41 dim 0 : vector<16x32xf32>, i32 -> vector<16x32xf32>
    %cst_42 = arith.constant 0.000000e+00 : f32
    %113 = vector.broadcast %cst_42 : f32 to vector<16x32xf32>
    %114 = arith.select %21, %112, %113 : vector<16x32xi1>, vector<16x32xf32>
    %c1_i32_43 = arith.constant 1 : i32
    %115 = tpu.dynamic_rotate %105 by %c1_i32_43 dim 1 : vector<16x32xf32>, i32 -> vector<16x32xf32>
    %cst_44 = arith.constant 0.000000e+00 : f32
    %116 = vector.broadcast %cst_44 : f32 to vector<16x32xf32>
    %117 = arith.select %23, %115, %116 : vector<16x32xi1>, vector<16x32xf32>
    %c31_i32_45 = arith.constant 31 : i32
    %118 = tpu.dynamic_rotate %105 by %c31_i32_45 dim 1 : vector<16x32xf32>, i32 -> vector<16x32xf32>
    %cst_46 = arith.constant 0.000000e+00 : f32
    %119 = vector.broadcast %cst_46 : f32 to vector<16x32xf32>
    %120 = arith.select %25, %118, %119 : vector<16x32xi1>, vector<16x32xf32>
    %121 = arith.addf %105, %111 : vector<16x32xf32>
    %122 = arith.addf %121, %114 : vector<16x32xf32>
    %123 = arith.addf %122, %117 : vector<16x32xf32>
    %124 = arith.addf %123, %120 : vector<16x32xf32>
    %cst_47 = arith.constant 2.500000e+00 : f32
    %125 = vector.broadcast %cst_47 : f32 to vector<16x32xf32>
    %126 = arith.subf %124, %125 : vector<16x32xf32>
    %cst_48 = arith.constant 0.000000e+00 : f32
    %127 = vector.broadcast %cst_48 : f32 to vector<16x32xf32>
    %128 = arith.maximumf %126, %127 : vector<16x32xf32>
    %cst_49 = arith.constant dense<0x7F800000> : vector<32xf32>
    %129 = vector.multi_reduction <minimumf>, %128, %cst_49 [0] : vector<16x32xf32> to vector<32xf32>
    %130 = vector.shape_cast %129 : vector<32xf32> to vector<1x32xf32>
    %cst_50 = arith.constant dense<0xFF800000> : vector<32xf32>
    %131 = vector.multi_reduction <maximumf>, %128, %cst_50 [0] : vector<16x32xf32> to vector<32xf32>
    %132 = vector.shape_cast %131 : vector<32xf32> to vector<1x32xf32>
    %c1_i32_51 = arith.constant 1 : i32
    %133 = vector.broadcast %c1_i32_51 : i32 to vector<1x32xi32>
    %134 = arith.cmpi sge, %17, %133 : vector<1x32xi32>
    %c1_i32_52 = arith.constant 1 : i32
    %135 = tpu.dynamic_rotate %130 by %c1_i32_52 dim 1 : vector<1x32xf32>, i32 -> vector<1x32xf32>
    %c17_i32_53 = arith.constant 17 : i32
    %136 = tpu.dynamic_rotate %130 by %c17_i32_53 dim 1 : vector<1x32xf32>, i32 -> vector<1x32xf32>
    %137 = arith.select %134, %135, %136 : vector<1x32xi1>, vector<1x32xf32>
    %138 = arith.minimumf %130, %137 : vector<1x32xf32>
    %c1_i32_54 = arith.constant 1 : i32
    %139 = tpu.dynamic_rotate %132 by %c1_i32_54 dim 1 : vector<1x32xf32>, i32 -> vector<1x32xf32>
    %c17_i32_55 = arith.constant 17 : i32
    %140 = tpu.dynamic_rotate %132 by %c17_i32_55 dim 1 : vector<1x32xf32>, i32 -> vector<1x32xf32>
    %141 = arith.select %134, %139, %140 : vector<1x32xi1>, vector<1x32xf32>
    %142 = arith.maximumf %132, %141 : vector<1x32xf32>
    %c2_i32_56 = arith.constant 2 : i32
    %143 = vector.broadcast %c2_i32_56 : i32 to vector<1x32xi32>
    %144 = arith.cmpi sge, %17, %143 : vector<1x32xi32>
    %c2_i32_57 = arith.constant 2 : i32
    %145 = tpu.dynamic_rotate %138 by %c2_i32_57 dim 1 : vector<1x32xf32>, i32 -> vector<1x32xf32>
    %c18_i32_58 = arith.constant 18 : i32
    %146 = tpu.dynamic_rotate %138 by %c18_i32_58 dim 1 : vector<1x32xf32>, i32 -> vector<1x32xf32>
    %147 = arith.select %144, %145, %146 : vector<1x32xi1>, vector<1x32xf32>
    %148 = arith.minimumf %138, %147 : vector<1x32xf32>
    %c2_i32_59 = arith.constant 2 : i32
    %149 = tpu.dynamic_rotate %142 by %c2_i32_59 dim 1 : vector<1x32xf32>, i32 -> vector<1x32xf32>
    %c18_i32_60 = arith.constant 18 : i32
    %150 = tpu.dynamic_rotate %142 by %c18_i32_60 dim 1 : vector<1x32xf32>, i32 -> vector<1x32xf32>
    %151 = arith.select %144, %149, %150 : vector<1x32xi1>, vector<1x32xf32>
    %152 = arith.maximumf %142, %151 : vector<1x32xf32>
    %c4_i32_61 = arith.constant 4 : i32
    %153 = vector.broadcast %c4_i32_61 : i32 to vector<1x32xi32>
    %154 = arith.cmpi sge, %17, %153 : vector<1x32xi32>
    %c4_i32_62 = arith.constant 4 : i32
    %155 = tpu.dynamic_rotate %148 by %c4_i32_62 dim 1 : vector<1x32xf32>, i32 -> vector<1x32xf32>
    %c20_i32_63 = arith.constant 20 : i32
    %156 = tpu.dynamic_rotate %148 by %c20_i32_63 dim 1 : vector<1x32xf32>, i32 -> vector<1x32xf32>
    %157 = arith.select %154, %155, %156 : vector<1x32xi1>, vector<1x32xf32>
    %158 = arith.minimumf %148, %157 : vector<1x32xf32>
    %c4_i32_64 = arith.constant 4 : i32
    %159 = tpu.dynamic_rotate %152 by %c4_i32_64 dim 1 : vector<1x32xf32>, i32 -> vector<1x32xf32>
    %c20_i32_65 = arith.constant 20 : i32
    %160 = tpu.dynamic_rotate %152 by %c20_i32_65 dim 1 : vector<1x32xf32>, i32 -> vector<1x32xf32>
    %161 = arith.select %154, %159, %160 : vector<1x32xi1>, vector<1x32xf32>
    %162 = arith.maximumf %152, %161 : vector<1x32xf32>
    %c8_i32_66 = arith.constant 8 : i32
    %163 = vector.broadcast %c8_i32_66 : i32 to vector<1x32xi32>
    %164 = arith.cmpi sge, %17, %163 : vector<1x32xi32>
    %c8_i32_67 = arith.constant 8 : i32
    %165 = tpu.dynamic_rotate %158 by %c8_i32_67 dim 1 : vector<1x32xf32>, i32 -> vector<1x32xf32>
    %c24_i32_68 = arith.constant 24 : i32
    %166 = tpu.dynamic_rotate %158 by %c24_i32_68 dim 1 : vector<1x32xf32>, i32 -> vector<1x32xf32>
    %167 = arith.select %164, %165, %166 : vector<1x32xi1>, vector<1x32xf32>
    %168 = arith.minimumf %158, %167 : vector<1x32xf32>
    %c8_i32_69 = arith.constant 8 : i32
    %169 = tpu.dynamic_rotate %162 by %c8_i32_69 dim 1 : vector<1x32xf32>, i32 -> vector<1x32xf32>
    %c24_i32_70 = arith.constant 24 : i32
    %170 = tpu.dynamic_rotate %162 by %c24_i32_70 dim 1 : vector<1x32xf32>, i32 -> vector<1x32xf32>
    %171 = arith.select %164, %169, %170 : vector<1x32xi1>, vector<1x32xf32>
    %172 = arith.maximumf %162, %171 : vector<1x32xf32>
    %173 = arith.subf %172, %168 : vector<1x32xf32>
    %cst_71 = arith.constant 0.000000e+00 : f32
    %174 = vector.broadcast %cst_71 : f32 to vector<1x32xf32>
    %175 = arith.cmpf ogt, %173, %174 : vector<1x32xf32>
    %cst_72 = arith.constant 1.000000e+00 : f32
    %cst_73 = arith.constant 2.000000e-01 : f32
    %176 = vector.broadcast %cst_72 : f32 to vector<1x32xf32>
    %177 = vector.broadcast %cst_73 : f32 to vector<1x32xf32>
    %178 = arith.select %175, %176, %177 : vector<1x32xi1>, vector<1x32xf32>
    %cst_74 = arith.constant 1.000000e+00 : f32
    %179 = vector.broadcast %cst_74 : f32 to vector<1x32xf32>
    %180 = arith.select %175, %173, %179 : vector<1x32xi1>, vector<1x32xf32>
    %181 = arith.divf %178, %180 : vector<1x32xf32>
    %cst_75 = arith.constant 0.000000e+00 : f32
    %182 = vector.broadcast %cst_75 : f32 to vector<1x32xf32>
    %183 = arith.select %175, %168, %182 : vector<1x32xi1>, vector<1x32xf32>
    %184 = vector.broadcast %183 : vector<1x32xf32> to vector<16x32xf32>
    %185 = arith.subf %128, %184 : vector<16x32xf32>
    %186 = vector.broadcast %181 : vector<1x32xf32> to vector<16x32xf32>
    %187 = arith.mulf %185, %186 : vector<16x32xf32>
    %cst_76 = arith.constant 4.000000e+00 : f32
    %188 = vector.broadcast %cst_76 : f32 to vector<16x32xf32>
    %189 = arith.mulf %188, %187 : vector<16x32xf32>
    %190 = arith.addf %108, %189 : vector<16x32xf32>
    %c1_i32_77 = arith.constant 1 : i32
    %191 = tpu.dynamic_rotate %187 by %c1_i32_77 dim 0 : vector<16x32xf32>, i32 -> vector<16x32xf32>
    %cst_78 = arith.constant 0.000000e+00 : f32
    %192 = vector.broadcast %cst_78 : f32 to vector<16x32xf32>
    %193 = arith.select %19, %191, %192 : vector<16x32xi1>, vector<16x32xf32>
    %c15_i32_79 = arith.constant 15 : i32
    %194 = tpu.dynamic_rotate %187 by %c15_i32_79 dim 0 : vector<16x32xf32>, i32 -> vector<16x32xf32>
    %cst_80 = arith.constant 0.000000e+00 : f32
    %195 = vector.broadcast %cst_80 : f32 to vector<16x32xf32>
    %196 = arith.select %21, %194, %195 : vector<16x32xi1>, vector<16x32xf32>
    %c1_i32_81 = arith.constant 1 : i32
    %197 = tpu.dynamic_rotate %187 by %c1_i32_81 dim 1 : vector<16x32xf32>, i32 -> vector<16x32xf32>
    %cst_82 = arith.constant 0.000000e+00 : f32
    %198 = vector.broadcast %cst_82 : f32 to vector<16x32xf32>
    %199 = arith.select %23, %197, %198 : vector<16x32xi1>, vector<16x32xf32>
    %c31_i32_83 = arith.constant 31 : i32
    %200 = tpu.dynamic_rotate %187 by %c31_i32_83 dim 1 : vector<16x32xf32>, i32 -> vector<16x32xf32>
    %cst_84 = arith.constant 0.000000e+00 : f32
    %201 = vector.broadcast %cst_84 : f32 to vector<16x32xf32>
    %202 = arith.select %25, %200, %201 : vector<16x32xi1>, vector<16x32xf32>
    %203 = arith.addf %187, %193 : vector<16x32xf32>
    %204 = arith.addf %203, %196 : vector<16x32xf32>
    %205 = arith.addf %204, %199 : vector<16x32xf32>
    %206 = arith.addf %205, %202 : vector<16x32xf32>
    %cst_85 = arith.constant 2.500000e+00 : f32
    %207 = vector.broadcast %cst_85 : f32 to vector<16x32xf32>
    %208 = arith.subf %206, %207 : vector<16x32xf32>
    %cst_86 = arith.constant 0.000000e+00 : f32
    %209 = vector.broadcast %cst_86 : f32 to vector<16x32xf32>
    %210 = arith.maximumf %208, %209 : vector<16x32xf32>
    %cst_87 = arith.constant dense<0x7F800000> : vector<32xf32>
    %211 = vector.multi_reduction <minimumf>, %210, %cst_87 [0] : vector<16x32xf32> to vector<32xf32>
    %212 = vector.shape_cast %211 : vector<32xf32> to vector<1x32xf32>
    %cst_88 = arith.constant dense<0xFF800000> : vector<32xf32>
    %213 = vector.multi_reduction <maximumf>, %210, %cst_88 [0] : vector<16x32xf32> to vector<32xf32>
    %214 = vector.shape_cast %213 : vector<32xf32> to vector<1x32xf32>
    %c1_i32_89 = arith.constant 1 : i32
    %215 = vector.broadcast %c1_i32_89 : i32 to vector<1x32xi32>
    %216 = arith.cmpi sge, %17, %215 : vector<1x32xi32>
    %c1_i32_90 = arith.constant 1 : i32
    %217 = tpu.dynamic_rotate %212 by %c1_i32_90 dim 1 : vector<1x32xf32>, i32 -> vector<1x32xf32>
    %c17_i32_91 = arith.constant 17 : i32
    %218 = tpu.dynamic_rotate %212 by %c17_i32_91 dim 1 : vector<1x32xf32>, i32 -> vector<1x32xf32>
    %219 = arith.select %216, %217, %218 : vector<1x32xi1>, vector<1x32xf32>
    %220 = arith.minimumf %212, %219 : vector<1x32xf32>
    %c1_i32_92 = arith.constant 1 : i32
    %221 = tpu.dynamic_rotate %214 by %c1_i32_92 dim 1 : vector<1x32xf32>, i32 -> vector<1x32xf32>
    %c17_i32_93 = arith.constant 17 : i32
    %222 = tpu.dynamic_rotate %214 by %c17_i32_93 dim 1 : vector<1x32xf32>, i32 -> vector<1x32xf32>
    %223 = arith.select %216, %221, %222 : vector<1x32xi1>, vector<1x32xf32>
    %224 = arith.maximumf %214, %223 : vector<1x32xf32>
    %c2_i32_94 = arith.constant 2 : i32
    %225 = vector.broadcast %c2_i32_94 : i32 to vector<1x32xi32>
    %226 = arith.cmpi sge, %17, %225 : vector<1x32xi32>
    %c2_i32_95 = arith.constant 2 : i32
    %227 = tpu.dynamic_rotate %220 by %c2_i32_95 dim 1 : vector<1x32xf32>, i32 -> vector<1x32xf32>
    %c18_i32_96 = arith.constant 18 : i32
    %228 = tpu.dynamic_rotate %220 by %c18_i32_96 dim 1 : vector<1x32xf32>, i32 -> vector<1x32xf32>
    %229 = arith.select %226, %227, %228 : vector<1x32xi1>, vector<1x32xf32>
    %230 = arith.minimumf %220, %229 : vector<1x32xf32>
    %c2_i32_97 = arith.constant 2 : i32
    %231 = tpu.dynamic_rotate %224 by %c2_i32_97 dim 1 : vector<1x32xf32>, i32 -> vector<1x32xf32>
    %c18_i32_98 = arith.constant 18 : i32
    %232 = tpu.dynamic_rotate %224 by %c18_i32_98 dim 1 : vector<1x32xf32>, i32 -> vector<1x32xf32>
    %233 = arith.select %226, %231, %232 : vector<1x32xi1>, vector<1x32xf32>
    %234 = arith.maximumf %224, %233 : vector<1x32xf32>
    %c4_i32_99 = arith.constant 4 : i32
    %235 = vector.broadcast %c4_i32_99 : i32 to vector<1x32xi32>
    %236 = arith.cmpi sge, %17, %235 : vector<1x32xi32>
    %c4_i32_100 = arith.constant 4 : i32
    %237 = tpu.dynamic_rotate %230 by %c4_i32_100 dim 1 : vector<1x32xf32>, i32 -> vector<1x32xf32>
    %c20_i32_101 = arith.constant 20 : i32
    %238 = tpu.dynamic_rotate %230 by %c20_i32_101 dim 1 : vector<1x32xf32>, i32 -> vector<1x32xf32>
    %239 = arith.select %236, %237, %238 : vector<1x32xi1>, vector<1x32xf32>
    %240 = arith.minimumf %230, %239 : vector<1x32xf32>
    %c4_i32_102 = arith.constant 4 : i32
    %241 = tpu.dynamic_rotate %234 by %c4_i32_102 dim 1 : vector<1x32xf32>, i32 -> vector<1x32xf32>
    %c20_i32_103 = arith.constant 20 : i32
    %242 = tpu.dynamic_rotate %234 by %c20_i32_103 dim 1 : vector<1x32xf32>, i32 -> vector<1x32xf32>
    %243 = arith.select %236, %241, %242 : vector<1x32xi1>, vector<1x32xf32>
    %244 = arith.maximumf %234, %243 : vector<1x32xf32>
    %c8_i32_104 = arith.constant 8 : i32
    %245 = vector.broadcast %c8_i32_104 : i32 to vector<1x32xi32>
    %246 = arith.cmpi sge, %17, %245 : vector<1x32xi32>
    %c8_i32_105 = arith.constant 8 : i32
    %247 = tpu.dynamic_rotate %240 by %c8_i32_105 dim 1 : vector<1x32xf32>, i32 -> vector<1x32xf32>
    %c24_i32_106 = arith.constant 24 : i32
    %248 = tpu.dynamic_rotate %240 by %c24_i32_106 dim 1 : vector<1x32xf32>, i32 -> vector<1x32xf32>
    %249 = arith.select %246, %247, %248 : vector<1x32xi1>, vector<1x32xf32>
    %250 = arith.minimumf %240, %249 : vector<1x32xf32>
    %c8_i32_107 = arith.constant 8 : i32
    %251 = tpu.dynamic_rotate %244 by %c8_i32_107 dim 1 : vector<1x32xf32>, i32 -> vector<1x32xf32>
    %c24_i32_108 = arith.constant 24 : i32
    %252 = tpu.dynamic_rotate %244 by %c24_i32_108 dim 1 : vector<1x32xf32>, i32 -> vector<1x32xf32>
    %253 = arith.select %246, %251, %252 : vector<1x32xi1>, vector<1x32xf32>
    %254 = arith.maximumf %244, %253 : vector<1x32xf32>
    %255 = arith.subf %254, %250 : vector<1x32xf32>
    %cst_109 = arith.constant 0.000000e+00 : f32
    %256 = vector.broadcast %cst_109 : f32 to vector<1x32xf32>
    %257 = arith.cmpf ogt, %255, %256 : vector<1x32xf32>
    %cst_110 = arith.constant 1.000000e+00 : f32
    %cst_111 = arith.constant 2.000000e-01 : f32
    %258 = vector.broadcast %cst_110 : f32 to vector<1x32xf32>
    %259 = vector.broadcast %cst_111 : f32 to vector<1x32xf32>
    %260 = arith.select %257, %258, %259 : vector<1x32xi1>, vector<1x32xf32>
    %cst_112 = arith.constant 1.000000e+00 : f32
    %261 = vector.broadcast %cst_112 : f32 to vector<1x32xf32>
    %262 = arith.select %257, %255, %261 : vector<1x32xi1>, vector<1x32xf32>
    %263 = arith.divf %260, %262 : vector<1x32xf32>
    %cst_113 = arith.constant 0.000000e+00 : f32
    %264 = vector.broadcast %cst_113 : f32 to vector<1x32xf32>
    %265 = arith.select %257, %250, %264 : vector<1x32xi1>, vector<1x32xf32>
    %266 = vector.broadcast %265 : vector<1x32xf32> to vector<16x32xf32>
    %267 = arith.subf %210, %266 : vector<16x32xf32>
    %268 = vector.broadcast %263 : vector<1x32xf32> to vector<16x32xf32>
    %269 = arith.mulf %267, %268 : vector<16x32xf32>
    %cst_114 = arith.constant 9.000000e+00 : f32
    %270 = vector.broadcast %cst_114 : f32 to vector<16x32xf32>
    %271 = arith.mulf %270, %269 : vector<16x32xf32>
    %272 = arith.addf %190, %271 : vector<16x32xf32>
    %c1_i32_115 = arith.constant 1 : i32
    %273 = tpu.dynamic_rotate %269 by %c1_i32_115 dim 0 : vector<16x32xf32>, i32 -> vector<16x32xf32>
    %cst_116 = arith.constant 0.000000e+00 : f32
    %274 = vector.broadcast %cst_116 : f32 to vector<16x32xf32>
    %275 = arith.select %19, %273, %274 : vector<16x32xi1>, vector<16x32xf32>
    %c15_i32_117 = arith.constant 15 : i32
    %276 = tpu.dynamic_rotate %269 by %c15_i32_117 dim 0 : vector<16x32xf32>, i32 -> vector<16x32xf32>
    %cst_118 = arith.constant 0.000000e+00 : f32
    %277 = vector.broadcast %cst_118 : f32 to vector<16x32xf32>
    %278 = arith.select %21, %276, %277 : vector<16x32xi1>, vector<16x32xf32>
    %c1_i32_119 = arith.constant 1 : i32
    %279 = tpu.dynamic_rotate %269 by %c1_i32_119 dim 1 : vector<16x32xf32>, i32 -> vector<16x32xf32>
    %cst_120 = arith.constant 0.000000e+00 : f32
    %280 = vector.broadcast %cst_120 : f32 to vector<16x32xf32>
    %281 = arith.select %23, %279, %280 : vector<16x32xi1>, vector<16x32xf32>
    %c31_i32_121 = arith.constant 31 : i32
    %282 = tpu.dynamic_rotate %269 by %c31_i32_121 dim 1 : vector<16x32xf32>, i32 -> vector<16x32xf32>
    %cst_122 = arith.constant 0.000000e+00 : f32
    %283 = vector.broadcast %cst_122 : f32 to vector<16x32xf32>
    %284 = arith.select %25, %282, %283 : vector<16x32xi1>, vector<16x32xf32>
    %285 = arith.addf %269, %275 : vector<16x32xf32>
    %286 = arith.addf %285, %278 : vector<16x32xf32>
    %287 = arith.addf %286, %281 : vector<16x32xf32>
    %288 = arith.addf %287, %284 : vector<16x32xf32>
    %cst_123 = arith.constant 2.500000e+00 : f32
    %289 = vector.broadcast %cst_123 : f32 to vector<16x32xf32>
    %290 = arith.subf %288, %289 : vector<16x32xf32>
    %cst_124 = arith.constant 0.000000e+00 : f32
    %291 = vector.broadcast %cst_124 : f32 to vector<16x32xf32>
    %292 = arith.maximumf %290, %291 : vector<16x32xf32>
    %cst_125 = arith.constant dense<0x7F800000> : vector<32xf32>
    %293 = vector.multi_reduction <minimumf>, %292, %cst_125 [0] : vector<16x32xf32> to vector<32xf32>
    %294 = vector.shape_cast %293 : vector<32xf32> to vector<1x32xf32>
    %cst_126 = arith.constant dense<0xFF800000> : vector<32xf32>
    %295 = vector.multi_reduction <maximumf>, %292, %cst_126 [0] : vector<16x32xf32> to vector<32xf32>
    %296 = vector.shape_cast %295 : vector<32xf32> to vector<1x32xf32>
    %c1_i32_127 = arith.constant 1 : i32
    %297 = vector.broadcast %c1_i32_127 : i32 to vector<1x32xi32>
    %298 = arith.cmpi sge, %17, %297 : vector<1x32xi32>
    %c1_i32_128 = arith.constant 1 : i32
    %299 = tpu.dynamic_rotate %294 by %c1_i32_128 dim 1 : vector<1x32xf32>, i32 -> vector<1x32xf32>
    %c17_i32_129 = arith.constant 17 : i32
    %300 = tpu.dynamic_rotate %294 by %c17_i32_129 dim 1 : vector<1x32xf32>, i32 -> vector<1x32xf32>
    %301 = arith.select %298, %299, %300 : vector<1x32xi1>, vector<1x32xf32>
    %302 = arith.minimumf %294, %301 : vector<1x32xf32>
    %c1_i32_130 = arith.constant 1 : i32
    %303 = tpu.dynamic_rotate %296 by %c1_i32_130 dim 1 : vector<1x32xf32>, i32 -> vector<1x32xf32>
    %c17_i32_131 = arith.constant 17 : i32
    %304 = tpu.dynamic_rotate %296 by %c17_i32_131 dim 1 : vector<1x32xf32>, i32 -> vector<1x32xf32>
    %305 = arith.select %298, %303, %304 : vector<1x32xi1>, vector<1x32xf32>
    %306 = arith.maximumf %296, %305 : vector<1x32xf32>
    %c2_i32_132 = arith.constant 2 : i32
    %307 = vector.broadcast %c2_i32_132 : i32 to vector<1x32xi32>
    %308 = arith.cmpi sge, %17, %307 : vector<1x32xi32>
    %c2_i32_133 = arith.constant 2 : i32
    %309 = tpu.dynamic_rotate %302 by %c2_i32_133 dim 1 : vector<1x32xf32>, i32 -> vector<1x32xf32>
    %c18_i32_134 = arith.constant 18 : i32
    %310 = tpu.dynamic_rotate %302 by %c18_i32_134 dim 1 : vector<1x32xf32>, i32 -> vector<1x32xf32>
    %311 = arith.select %308, %309, %310 : vector<1x32xi1>, vector<1x32xf32>
    %312 = arith.minimumf %302, %311 : vector<1x32xf32>
    %c2_i32_135 = arith.constant 2 : i32
    %313 = tpu.dynamic_rotate %306 by %c2_i32_135 dim 1 : vector<1x32xf32>, i32 -> vector<1x32xf32>
    %c18_i32_136 = arith.constant 18 : i32
    %314 = tpu.dynamic_rotate %306 by %c18_i32_136 dim 1 : vector<1x32xf32>, i32 -> vector<1x32xf32>
    %315 = arith.select %308, %313, %314 : vector<1x32xi1>, vector<1x32xf32>
    %316 = arith.maximumf %306, %315 : vector<1x32xf32>
    %c4_i32_137 = arith.constant 4 : i32
    %317 = vector.broadcast %c4_i32_137 : i32 to vector<1x32xi32>
    %318 = arith.cmpi sge, %17, %317 : vector<1x32xi32>
    %c4_i32_138 = arith.constant 4 : i32
    %319 = tpu.dynamic_rotate %312 by %c4_i32_138 dim 1 : vector<1x32xf32>, i32 -> vector<1x32xf32>
    %c20_i32_139 = arith.constant 20 : i32
    %320 = tpu.dynamic_rotate %312 by %c20_i32_139 dim 1 : vector<1x32xf32>, i32 -> vector<1x32xf32>
    %321 = arith.select %318, %319, %320 : vector<1x32xi1>, vector<1x32xf32>
    %322 = arith.minimumf %312, %321 : vector<1x32xf32>
    %c4_i32_140 = arith.constant 4 : i32
    %323 = tpu.dynamic_rotate %316 by %c4_i32_140 dim 1 : vector<1x32xf32>, i32 -> vector<1x32xf32>
    %c20_i32_141 = arith.constant 20 : i32
    %324 = tpu.dynamic_rotate %316 by %c20_i32_141 dim 1 : vector<1x32xf32>, i32 -> vector<1x32xf32>
    %325 = arith.select %318, %323, %324 : vector<1x32xi1>, vector<1x32xf32>
    %326 = arith.maximumf %316, %325 : vector<1x32xf32>
    %c8_i32_142 = arith.constant 8 : i32
    %327 = vector.broadcast %c8_i32_142 : i32 to vector<1x32xi32>
    %328 = arith.cmpi sge, %17, %327 : vector<1x32xi32>
    %c8_i32_143 = arith.constant 8 : i32
    %329 = tpu.dynamic_rotate %322 by %c8_i32_143 dim 1 : vector<1x32xf32>, i32 -> vector<1x32xf32>
    %c24_i32_144 = arith.constant 24 : i32
    %330 = tpu.dynamic_rotate %322 by %c24_i32_144 dim 1 : vector<1x32xf32>, i32 -> vector<1x32xf32>
    %331 = arith.select %328, %329, %330 : vector<1x32xi1>, vector<1x32xf32>
    %332 = arith.minimumf %322, %331 : vector<1x32xf32>
    %c8_i32_145 = arith.constant 8 : i32
    %333 = tpu.dynamic_rotate %326 by %c8_i32_145 dim 1 : vector<1x32xf32>, i32 -> vector<1x32xf32>
    %c24_i32_146 = arith.constant 24 : i32
    %334 = tpu.dynamic_rotate %326 by %c24_i32_146 dim 1 : vector<1x32xf32>, i32 -> vector<1x32xf32>
    %335 = arith.select %328, %333, %334 : vector<1x32xi1>, vector<1x32xf32>
    %336 = arith.maximumf %326, %335 : vector<1x32xf32>
    %337 = arith.subf %336, %332 : vector<1x32xf32>
    %cst_147 = arith.constant 0.000000e+00 : f32
    %338 = vector.broadcast %cst_147 : f32 to vector<1x32xf32>
    %339 = arith.cmpf ogt, %337, %338 : vector<1x32xf32>
    %cst_148 = arith.constant 1.000000e+00 : f32
    %cst_149 = arith.constant 2.000000e-01 : f32
    %340 = vector.broadcast %cst_148 : f32 to vector<1x32xf32>
    %341 = vector.broadcast %cst_149 : f32 to vector<1x32xf32>
    %342 = arith.select %339, %340, %341 : vector<1x32xi1>, vector<1x32xf32>
    %cst_150 = arith.constant 1.000000e+00 : f32
    %343 = vector.broadcast %cst_150 : f32 to vector<1x32xf32>
    %344 = arith.select %339, %337, %343 : vector<1x32xi1>, vector<1x32xf32>
    %345 = arith.divf %342, %344 : vector<1x32xf32>
    %cst_151 = arith.constant 0.000000e+00 : f32
    %346 = vector.broadcast %cst_151 : f32 to vector<1x32xf32>
    %347 = arith.select %339, %332, %346 : vector<1x32xi1>, vector<1x32xf32>
    %348 = vector.broadcast %347 : vector<1x32xf32> to vector<16x32xf32>
    %349 = arith.subf %292, %348 : vector<16x32xf32>
    %350 = vector.broadcast %345 : vector<1x32xf32> to vector<16x32xf32>
    %351 = arith.mulf %349, %350 : vector<16x32xf32>
    %cst_152 = arith.constant 1.600000e+01 : f32
    %352 = vector.broadcast %cst_152 : f32 to vector<16x32xf32>
    %353 = arith.mulf %352, %351 : vector<16x32xf32>
    %354 = arith.addf %272, %353 : vector<16x32xf32>
    %c1_i32_153 = arith.constant 1 : i32
    %355 = tpu.dynamic_rotate %351 by %c1_i32_153 dim 0 : vector<16x32xf32>, i32 -> vector<16x32xf32>
    %cst_154 = arith.constant 0.000000e+00 : f32
    %356 = vector.broadcast %cst_154 : f32 to vector<16x32xf32>
    %357 = arith.select %19, %355, %356 : vector<16x32xi1>, vector<16x32xf32>
    %c15_i32_155 = arith.constant 15 : i32
    %358 = tpu.dynamic_rotate %351 by %c15_i32_155 dim 0 : vector<16x32xf32>, i32 -> vector<16x32xf32>
    %cst_156 = arith.constant 0.000000e+00 : f32
    %359 = vector.broadcast %cst_156 : f32 to vector<16x32xf32>
    %360 = arith.select %21, %358, %359 : vector<16x32xi1>, vector<16x32xf32>
    %c1_i32_157 = arith.constant 1 : i32
    %361 = tpu.dynamic_rotate %351 by %c1_i32_157 dim 1 : vector<16x32xf32>, i32 -> vector<16x32xf32>
    %cst_158 = arith.constant 0.000000e+00 : f32
    %362 = vector.broadcast %cst_158 : f32 to vector<16x32xf32>
    %363 = arith.select %23, %361, %362 : vector<16x32xi1>, vector<16x32xf32>
    %c31_i32_159 = arith.constant 31 : i32
    %364 = tpu.dynamic_rotate %351 by %c31_i32_159 dim 1 : vector<16x32xf32>, i32 -> vector<16x32xf32>
    %cst_160 = arith.constant 0.000000e+00 : f32
    %365 = vector.broadcast %cst_160 : f32 to vector<16x32xf32>
    %366 = arith.select %25, %364, %365 : vector<16x32xi1>, vector<16x32xf32>
    %367 = arith.addf %351, %357 : vector<16x32xf32>
    %368 = arith.addf %367, %360 : vector<16x32xf32>
    %369 = arith.addf %368, %363 : vector<16x32xf32>
    %370 = arith.addf %369, %366 : vector<16x32xf32>
    %cst_161 = arith.constant 2.500000e+00 : f32
    %371 = vector.broadcast %cst_161 : f32 to vector<16x32xf32>
    %372 = arith.subf %370, %371 : vector<16x32xf32>
    %cst_162 = arith.constant 0.000000e+00 : f32
    %373 = vector.broadcast %cst_162 : f32 to vector<16x32xf32>
    %374 = arith.maximumf %372, %373 : vector<16x32xf32>
    %cst_163 = arith.constant dense<0x7F800000> : vector<32xf32>
    %375 = vector.multi_reduction <minimumf>, %374, %cst_163 [0] : vector<16x32xf32> to vector<32xf32>
    %376 = vector.shape_cast %375 : vector<32xf32> to vector<1x32xf32>
    %cst_164 = arith.constant dense<0xFF800000> : vector<32xf32>
    %377 = vector.multi_reduction <maximumf>, %374, %cst_164 [0] : vector<16x32xf32> to vector<32xf32>
    %378 = vector.shape_cast %377 : vector<32xf32> to vector<1x32xf32>
    %c1_i32_165 = arith.constant 1 : i32
    %379 = vector.broadcast %c1_i32_165 : i32 to vector<1x32xi32>
    %380 = arith.cmpi sge, %17, %379 : vector<1x32xi32>
    %c1_i32_166 = arith.constant 1 : i32
    %381 = tpu.dynamic_rotate %376 by %c1_i32_166 dim 1 : vector<1x32xf32>, i32 -> vector<1x32xf32>
    %c17_i32_167 = arith.constant 17 : i32
    %382 = tpu.dynamic_rotate %376 by %c17_i32_167 dim 1 : vector<1x32xf32>, i32 -> vector<1x32xf32>
    %383 = arith.select %380, %381, %382 : vector<1x32xi1>, vector<1x32xf32>
    %384 = arith.minimumf %376, %383 : vector<1x32xf32>
    %c1_i32_168 = arith.constant 1 : i32
    %385 = tpu.dynamic_rotate %378 by %c1_i32_168 dim 1 : vector<1x32xf32>, i32 -> vector<1x32xf32>
    %c17_i32_169 = arith.constant 17 : i32
    %386 = tpu.dynamic_rotate %378 by %c17_i32_169 dim 1 : vector<1x32xf32>, i32 -> vector<1x32xf32>
    %387 = arith.select %380, %385, %386 : vector<1x32xi1>, vector<1x32xf32>
    %388 = arith.maximumf %378, %387 : vector<1x32xf32>
    %c2_i32_170 = arith.constant 2 : i32
    %389 = vector.broadcast %c2_i32_170 : i32 to vector<1x32xi32>
    %390 = arith.cmpi sge, %17, %389 : vector<1x32xi32>
    %c2_i32_171 = arith.constant 2 : i32
    %391 = tpu.dynamic_rotate %384 by %c2_i32_171 dim 1 : vector<1x32xf32>, i32 -> vector<1x32xf32>
    %c18_i32_172 = arith.constant 18 : i32
    %392 = tpu.dynamic_rotate %384 by %c18_i32_172 dim 1 : vector<1x32xf32>, i32 -> vector<1x32xf32>
    %393 = arith.select %390, %391, %392 : vector<1x32xi1>, vector<1x32xf32>
    %394 = arith.minimumf %384, %393 : vector<1x32xf32>
    %c2_i32_173 = arith.constant 2 : i32
    %395 = tpu.dynamic_rotate %388 by %c2_i32_173 dim 1 : vector<1x32xf32>, i32 -> vector<1x32xf32>
    %c18_i32_174 = arith.constant 18 : i32
    %396 = tpu.dynamic_rotate %388 by %c18_i32_174 dim 1 : vector<1x32xf32>, i32 -> vector<1x32xf32>
    %397 = arith.select %390, %395, %396 : vector<1x32xi1>, vector<1x32xf32>
    %398 = arith.maximumf %388, %397 : vector<1x32xf32>
    %c4_i32_175 = arith.constant 4 : i32
    %399 = vector.broadcast %c4_i32_175 : i32 to vector<1x32xi32>
    %400 = arith.cmpi sge, %17, %399 : vector<1x32xi32>
    %c4_i32_176 = arith.constant 4 : i32
    %401 = tpu.dynamic_rotate %394 by %c4_i32_176 dim 1 : vector<1x32xf32>, i32 -> vector<1x32xf32>
    %c20_i32_177 = arith.constant 20 : i32
    %402 = tpu.dynamic_rotate %394 by %c20_i32_177 dim 1 : vector<1x32xf32>, i32 -> vector<1x32xf32>
    %403 = arith.select %400, %401, %402 : vector<1x32xi1>, vector<1x32xf32>
    %404 = arith.minimumf %394, %403 : vector<1x32xf32>
    %c4_i32_178 = arith.constant 4 : i32
    %405 = tpu.dynamic_rotate %398 by %c4_i32_178 dim 1 : vector<1x32xf32>, i32 -> vector<1x32xf32>
    %c20_i32_179 = arith.constant 20 : i32
    %406 = tpu.dynamic_rotate %398 by %c20_i32_179 dim 1 : vector<1x32xf32>, i32 -> vector<1x32xf32>
    %407 = arith.select %400, %405, %406 : vector<1x32xi1>, vector<1x32xf32>
    %408 = arith.maximumf %398, %407 : vector<1x32xf32>
    %c8_i32_180 = arith.constant 8 : i32
    %409 = vector.broadcast %c8_i32_180 : i32 to vector<1x32xi32>
    %410 = arith.cmpi sge, %17, %409 : vector<1x32xi32>
    %c8_i32_181 = arith.constant 8 : i32
    %411 = tpu.dynamic_rotate %404 by %c8_i32_181 dim 1 : vector<1x32xf32>, i32 -> vector<1x32xf32>
    %c24_i32_182 = arith.constant 24 : i32
    %412 = tpu.dynamic_rotate %404 by %c24_i32_182 dim 1 : vector<1x32xf32>, i32 -> vector<1x32xf32>
    %413 = arith.select %410, %411, %412 : vector<1x32xi1>, vector<1x32xf32>
    %414 = arith.minimumf %404, %413 : vector<1x32xf32>
    %c8_i32_183 = arith.constant 8 : i32
    %415 = tpu.dynamic_rotate %408 by %c8_i32_183 dim 1 : vector<1x32xf32>, i32 -> vector<1x32xf32>
    %c24_i32_184 = arith.constant 24 : i32
    %416 = tpu.dynamic_rotate %408 by %c24_i32_184 dim 1 : vector<1x32xf32>, i32 -> vector<1x32xf32>
    %417 = arith.select %410, %415, %416 : vector<1x32xi1>, vector<1x32xf32>
    %418 = arith.maximumf %408, %417 : vector<1x32xf32>
    %419 = arith.subf %418, %414 : vector<1x32xf32>
    %cst_185 = arith.constant 0.000000e+00 : f32
    %420 = vector.broadcast %cst_185 : f32 to vector<1x32xf32>
    %421 = arith.cmpf ogt, %419, %420 : vector<1x32xf32>
    %cst_186 = arith.constant 1.000000e+00 : f32
    %cst_187 = arith.constant 2.000000e-01 : f32
    %422 = vector.broadcast %cst_186 : f32 to vector<1x32xf32>
    %423 = vector.broadcast %cst_187 : f32 to vector<1x32xf32>
    %424 = arith.select %421, %422, %423 : vector<1x32xi1>, vector<1x32xf32>
    %cst_188 = arith.constant 1.000000e+00 : f32
    %425 = vector.broadcast %cst_188 : f32 to vector<1x32xf32>
    %426 = arith.select %421, %419, %425 : vector<1x32xi1>, vector<1x32xf32>
    %427 = arith.divf %424, %426 : vector<1x32xf32>
    %cst_189 = arith.constant 0.000000e+00 : f32
    %428 = vector.broadcast %cst_189 : f32 to vector<1x32xf32>
    %429 = arith.select %421, %414, %428 : vector<1x32xi1>, vector<1x32xf32>
    %430 = vector.broadcast %429 : vector<1x32xf32> to vector<16x32xf32>
    %431 = arith.subf %374, %430 : vector<16x32xf32>
    %432 = vector.broadcast %427 : vector<1x32xf32> to vector<16x32xf32>
    %433 = arith.mulf %431, %432 : vector<16x32xf32>
    %cst_190 = arith.constant 2.500000e+01 : f32
    %434 = vector.broadcast %cst_190 : f32 to vector<16x32xf32>
    %435 = arith.mulf %434, %433 : vector<16x32xf32>
    %436 = arith.addf %354, %435 : vector<16x32xf32>
    %c1_i32_191 = arith.constant 1 : i32
    %437 = tpu.dynamic_rotate %433 by %c1_i32_191 dim 0 : vector<16x32xf32>, i32 -> vector<16x32xf32>
    %cst_192 = arith.constant 0.000000e+00 : f32
    %438 = vector.broadcast %cst_192 : f32 to vector<16x32xf32>
    %439 = arith.select %19, %437, %438 : vector<16x32xi1>, vector<16x32xf32>
    %c15_i32_193 = arith.constant 15 : i32
    %440 = tpu.dynamic_rotate %433 by %c15_i32_193 dim 0 : vector<16x32xf32>, i32 -> vector<16x32xf32>
    %cst_194 = arith.constant 0.000000e+00 : f32
    %441 = vector.broadcast %cst_194 : f32 to vector<16x32xf32>
    %442 = arith.select %21, %440, %441 : vector<16x32xi1>, vector<16x32xf32>
    %c1_i32_195 = arith.constant 1 : i32
    %443 = tpu.dynamic_rotate %433 by %c1_i32_195 dim 1 : vector<16x32xf32>, i32 -> vector<16x32xf32>
    %cst_196 = arith.constant 0.000000e+00 : f32
    %444 = vector.broadcast %cst_196 : f32 to vector<16x32xf32>
    %445 = arith.select %23, %443, %444 : vector<16x32xi1>, vector<16x32xf32>
    %c31_i32_197 = arith.constant 31 : i32
    %446 = tpu.dynamic_rotate %433 by %c31_i32_197 dim 1 : vector<16x32xf32>, i32 -> vector<16x32xf32>
    %cst_198 = arith.constant 0.000000e+00 : f32
    %447 = vector.broadcast %cst_198 : f32 to vector<16x32xf32>
    %448 = arith.select %25, %446, %447 : vector<16x32xi1>, vector<16x32xf32>
    %449 = arith.addf %433, %439 : vector<16x32xf32>
    %450 = arith.addf %449, %442 : vector<16x32xf32>
    %451 = arith.addf %450, %445 : vector<16x32xf32>
    %452 = arith.addf %451, %448 : vector<16x32xf32>
    %cst_199 = arith.constant 2.500000e+00 : f32
    %453 = vector.broadcast %cst_199 : f32 to vector<16x32xf32>
    %454 = arith.subf %452, %453 : vector<16x32xf32>
    %cst_200 = arith.constant 0.000000e+00 : f32
    %455 = vector.broadcast %cst_200 : f32 to vector<16x32xf32>
    %456 = arith.maximumf %454, %455 : vector<16x32xf32>
    %cst_201 = arith.constant dense<0x7F800000> : vector<32xf32>
    %457 = vector.multi_reduction <minimumf>, %456, %cst_201 [0] : vector<16x32xf32> to vector<32xf32>
    %458 = vector.shape_cast %457 : vector<32xf32> to vector<1x32xf32>
    %cst_202 = arith.constant dense<0xFF800000> : vector<32xf32>
    %459 = vector.multi_reduction <maximumf>, %456, %cst_202 [0] : vector<16x32xf32> to vector<32xf32>
    %460 = vector.shape_cast %459 : vector<32xf32> to vector<1x32xf32>
    %c1_i32_203 = arith.constant 1 : i32
    %461 = vector.broadcast %c1_i32_203 : i32 to vector<1x32xi32>
    %462 = arith.cmpi sge, %17, %461 : vector<1x32xi32>
    %c1_i32_204 = arith.constant 1 : i32
    %463 = tpu.dynamic_rotate %458 by %c1_i32_204 dim 1 : vector<1x32xf32>, i32 -> vector<1x32xf32>
    %c17_i32_205 = arith.constant 17 : i32
    %464 = tpu.dynamic_rotate %458 by %c17_i32_205 dim 1 : vector<1x32xf32>, i32 -> vector<1x32xf32>
    %465 = arith.select %462, %463, %464 : vector<1x32xi1>, vector<1x32xf32>
    %466 = arith.minimumf %458, %465 : vector<1x32xf32>
    %c1_i32_206 = arith.constant 1 : i32
    %467 = tpu.dynamic_rotate %460 by %c1_i32_206 dim 1 : vector<1x32xf32>, i32 -> vector<1x32xf32>
    %c17_i32_207 = arith.constant 17 : i32
    %468 = tpu.dynamic_rotate %460 by %c17_i32_207 dim 1 : vector<1x32xf32>, i32 -> vector<1x32xf32>
    %469 = arith.select %462, %467, %468 : vector<1x32xi1>, vector<1x32xf32>
    %470 = arith.maximumf %460, %469 : vector<1x32xf32>
    %c2_i32_208 = arith.constant 2 : i32
    %471 = vector.broadcast %c2_i32_208 : i32 to vector<1x32xi32>
    %472 = arith.cmpi sge, %17, %471 : vector<1x32xi32>
    %c2_i32_209 = arith.constant 2 : i32
    %473 = tpu.dynamic_rotate %466 by %c2_i32_209 dim 1 : vector<1x32xf32>, i32 -> vector<1x32xf32>
    %c18_i32_210 = arith.constant 18 : i32
    %474 = tpu.dynamic_rotate %466 by %c18_i32_210 dim 1 : vector<1x32xf32>, i32 -> vector<1x32xf32>
    %475 = arith.select %472, %473, %474 : vector<1x32xi1>, vector<1x32xf32>
    %476 = arith.minimumf %466, %475 : vector<1x32xf32>
    %c2_i32_211 = arith.constant 2 : i32
    %477 = tpu.dynamic_rotate %470 by %c2_i32_211 dim 1 : vector<1x32xf32>, i32 -> vector<1x32xf32>
    %c18_i32_212 = arith.constant 18 : i32
    %478 = tpu.dynamic_rotate %470 by %c18_i32_212 dim 1 : vector<1x32xf32>, i32 -> vector<1x32xf32>
    %479 = arith.select %472, %477, %478 : vector<1x32xi1>, vector<1x32xf32>
    %480 = arith.maximumf %470, %479 : vector<1x32xf32>
    %c4_i32_213 = arith.constant 4 : i32
    %481 = vector.broadcast %c4_i32_213 : i32 to vector<1x32xi32>
    %482 = arith.cmpi sge, %17, %481 : vector<1x32xi32>
    %c4_i32_214 = arith.constant 4 : i32
    %483 = tpu.dynamic_rotate %476 by %c4_i32_214 dim 1 : vector<1x32xf32>, i32 -> vector<1x32xf32>
    %c20_i32_215 = arith.constant 20 : i32
    %484 = tpu.dynamic_rotate %476 by %c20_i32_215 dim 1 : vector<1x32xf32>, i32 -> vector<1x32xf32>
    %485 = arith.select %482, %483, %484 : vector<1x32xi1>, vector<1x32xf32>
    %486 = arith.minimumf %476, %485 : vector<1x32xf32>
    %c4_i32_216 = arith.constant 4 : i32
    %487 = tpu.dynamic_rotate %480 by %c4_i32_216 dim 1 : vector<1x32xf32>, i32 -> vector<1x32xf32>
    %c20_i32_217 = arith.constant 20 : i32
    %488 = tpu.dynamic_rotate %480 by %c20_i32_217 dim 1 : vector<1x32xf32>, i32 -> vector<1x32xf32>
    %489 = arith.select %482, %487, %488 : vector<1x32xi1>, vector<1x32xf32>
    %490 = arith.maximumf %480, %489 : vector<1x32xf32>
    %c8_i32_218 = arith.constant 8 : i32
    %491 = vector.broadcast %c8_i32_218 : i32 to vector<1x32xi32>
    %492 = arith.cmpi sge, %17, %491 : vector<1x32xi32>
    %c8_i32_219 = arith.constant 8 : i32
    %493 = tpu.dynamic_rotate %486 by %c8_i32_219 dim 1 : vector<1x32xf32>, i32 -> vector<1x32xf32>
    %c24_i32_220 = arith.constant 24 : i32
    %494 = tpu.dynamic_rotate %486 by %c24_i32_220 dim 1 : vector<1x32xf32>, i32 -> vector<1x32xf32>
    %495 = arith.select %492, %493, %494 : vector<1x32xi1>, vector<1x32xf32>
    %496 = arith.minimumf %486, %495 : vector<1x32xf32>
    %c8_i32_221 = arith.constant 8 : i32
    %497 = tpu.dynamic_rotate %490 by %c8_i32_221 dim 1 : vector<1x32xf32>, i32 -> vector<1x32xf32>
    %c24_i32_222 = arith.constant 24 : i32
    %498 = tpu.dynamic_rotate %490 by %c24_i32_222 dim 1 : vector<1x32xf32>, i32 -> vector<1x32xf32>
    %499 = arith.select %492, %497, %498 : vector<1x32xi1>, vector<1x32xf32>
    %500 = arith.maximumf %490, %499 : vector<1x32xf32>
    %501 = arith.subf %500, %496 : vector<1x32xf32>
    %cst_223 = arith.constant 0.000000e+00 : f32
    %502 = vector.broadcast %cst_223 : f32 to vector<1x32xf32>
    %503 = arith.cmpf ogt, %501, %502 : vector<1x32xf32>
    %cst_224 = arith.constant 1.000000e+00 : f32
    %cst_225 = arith.constant 2.000000e-01 : f32
    %504 = vector.broadcast %cst_224 : f32 to vector<1x32xf32>
    %505 = vector.broadcast %cst_225 : f32 to vector<1x32xf32>
    %506 = arith.select %503, %504, %505 : vector<1x32xi1>, vector<1x32xf32>
    %cst_226 = arith.constant 1.000000e+00 : f32
    %507 = vector.broadcast %cst_226 : f32 to vector<1x32xf32>
    %508 = arith.select %503, %501, %507 : vector<1x32xi1>, vector<1x32xf32>
    %509 = arith.divf %506, %508 : vector<1x32xf32>
    %cst_227 = arith.constant 0.000000e+00 : f32
    %510 = vector.broadcast %cst_227 : f32 to vector<1x32xf32>
    %511 = arith.select %503, %496, %510 : vector<1x32xi1>, vector<1x32xf32>
    %512 = vector.broadcast %511 : vector<1x32xf32> to vector<16x32xf32>
    %513 = arith.subf %456, %512 : vector<16x32xf32>
    %514 = vector.broadcast %509 : vector<1x32xf32> to vector<16x32xf32>
    %515 = arith.mulf %513, %514 : vector<16x32xf32>
    %cst_228 = arith.constant 3.600000e+01 : f32
    %516 = vector.broadcast %cst_228 : f32 to vector<16x32xf32>
    %517 = arith.mulf %516, %515 : vector<16x32xf32>
    %518 = arith.addf %436, %517 : vector<16x32xf32>
    %c1_i32_229 = arith.constant 1 : i32
    %519 = tpu.dynamic_rotate %515 by %c1_i32_229 dim 0 : vector<16x32xf32>, i32 -> vector<16x32xf32>
    %cst_230 = arith.constant 0.000000e+00 : f32
    %520 = vector.broadcast %cst_230 : f32 to vector<16x32xf32>
    %521 = arith.select %19, %519, %520 : vector<16x32xi1>, vector<16x32xf32>
    %c15_i32_231 = arith.constant 15 : i32
    %522 = tpu.dynamic_rotate %515 by %c15_i32_231 dim 0 : vector<16x32xf32>, i32 -> vector<16x32xf32>
    %cst_232 = arith.constant 0.000000e+00 : f32
    %523 = vector.broadcast %cst_232 : f32 to vector<16x32xf32>
    %524 = arith.select %21, %522, %523 : vector<16x32xi1>, vector<16x32xf32>
    %c1_i32_233 = arith.constant 1 : i32
    %525 = tpu.dynamic_rotate %515 by %c1_i32_233 dim 1 : vector<16x32xf32>, i32 -> vector<16x32xf32>
    %cst_234 = arith.constant 0.000000e+00 : f32
    %526 = vector.broadcast %cst_234 : f32 to vector<16x32xf32>
    %527 = arith.select %23, %525, %526 : vector<16x32xi1>, vector<16x32xf32>
    %c31_i32_235 = arith.constant 31 : i32
    %528 = tpu.dynamic_rotate %515 by %c31_i32_235 dim 1 : vector<16x32xf32>, i32 -> vector<16x32xf32>
    %cst_236 = arith.constant 0.000000e+00 : f32
    %529 = vector.broadcast %cst_236 : f32 to vector<16x32xf32>
    %530 = arith.select %25, %528, %529 : vector<16x32xi1>, vector<16x32xf32>
    %531 = arith.addf %515, %521 : vector<16x32xf32>
    %532 = arith.addf %531, %524 : vector<16x32xf32>
    %533 = arith.addf %532, %527 : vector<16x32xf32>
    %534 = arith.addf %533, %530 : vector<16x32xf32>
    %cst_237 = arith.constant 2.500000e+00 : f32
    %535 = vector.broadcast %cst_237 : f32 to vector<16x32xf32>
    %536 = arith.subf %534, %535 : vector<16x32xf32>
    %cst_238 = arith.constant 0.000000e+00 : f32
    %537 = vector.broadcast %cst_238 : f32 to vector<16x32xf32>
    %538 = arith.maximumf %536, %537 : vector<16x32xf32>
    %cst_239 = arith.constant dense<0x7F800000> : vector<32xf32>
    %539 = vector.multi_reduction <minimumf>, %538, %cst_239 [0] : vector<16x32xf32> to vector<32xf32>
    %540 = vector.shape_cast %539 : vector<32xf32> to vector<1x32xf32>
    %cst_240 = arith.constant dense<0xFF800000> : vector<32xf32>
    %541 = vector.multi_reduction <maximumf>, %538, %cst_240 [0] : vector<16x32xf32> to vector<32xf32>
    %542 = vector.shape_cast %541 : vector<32xf32> to vector<1x32xf32>
    %c1_i32_241 = arith.constant 1 : i32
    %543 = vector.broadcast %c1_i32_241 : i32 to vector<1x32xi32>
    %544 = arith.cmpi sge, %17, %543 : vector<1x32xi32>
    %c1_i32_242 = arith.constant 1 : i32
    %545 = tpu.dynamic_rotate %540 by %c1_i32_242 dim 1 : vector<1x32xf32>, i32 -> vector<1x32xf32>
    %c17_i32_243 = arith.constant 17 : i32
    %546 = tpu.dynamic_rotate %540 by %c17_i32_243 dim 1 : vector<1x32xf32>, i32 -> vector<1x32xf32>
    %547 = arith.select %544, %545, %546 : vector<1x32xi1>, vector<1x32xf32>
    %548 = arith.minimumf %540, %547 : vector<1x32xf32>
    %c1_i32_244 = arith.constant 1 : i32
    %549 = tpu.dynamic_rotate %542 by %c1_i32_244 dim 1 : vector<1x32xf32>, i32 -> vector<1x32xf32>
    %c17_i32_245 = arith.constant 17 : i32
    %550 = tpu.dynamic_rotate %542 by %c17_i32_245 dim 1 : vector<1x32xf32>, i32 -> vector<1x32xf32>
    %551 = arith.select %544, %549, %550 : vector<1x32xi1>, vector<1x32xf32>
    %552 = arith.maximumf %542, %551 : vector<1x32xf32>
    %c2_i32_246 = arith.constant 2 : i32
    %553 = vector.broadcast %c2_i32_246 : i32 to vector<1x32xi32>
    %554 = arith.cmpi sge, %17, %553 : vector<1x32xi32>
    %c2_i32_247 = arith.constant 2 : i32
    %555 = tpu.dynamic_rotate %548 by %c2_i32_247 dim 1 : vector<1x32xf32>, i32 -> vector<1x32xf32>
    %c18_i32_248 = arith.constant 18 : i32
    %556 = tpu.dynamic_rotate %548 by %c18_i32_248 dim 1 : vector<1x32xf32>, i32 -> vector<1x32xf32>
    %557 = arith.select %554, %555, %556 : vector<1x32xi1>, vector<1x32xf32>
    %558 = arith.minimumf %548, %557 : vector<1x32xf32>
    %c2_i32_249 = arith.constant 2 : i32
    %559 = tpu.dynamic_rotate %552 by %c2_i32_249 dim 1 : vector<1x32xf32>, i32 -> vector<1x32xf32>
    %c18_i32_250 = arith.constant 18 : i32
    %560 = tpu.dynamic_rotate %552 by %c18_i32_250 dim 1 : vector<1x32xf32>, i32 -> vector<1x32xf32>
    %561 = arith.select %554, %559, %560 : vector<1x32xi1>, vector<1x32xf32>
    %562 = arith.maximumf %552, %561 : vector<1x32xf32>
    %c4_i32_251 = arith.constant 4 : i32
    %563 = vector.broadcast %c4_i32_251 : i32 to vector<1x32xi32>
    %564 = arith.cmpi sge, %17, %563 : vector<1x32xi32>
    %c4_i32_252 = arith.constant 4 : i32
    %565 = tpu.dynamic_rotate %558 by %c4_i32_252 dim 1 : vector<1x32xf32>, i32 -> vector<1x32xf32>
    %c20_i32_253 = arith.constant 20 : i32
    %566 = tpu.dynamic_rotate %558 by %c20_i32_253 dim 1 : vector<1x32xf32>, i32 -> vector<1x32xf32>
    %567 = arith.select %564, %565, %566 : vector<1x32xi1>, vector<1x32xf32>
    %568 = arith.minimumf %558, %567 : vector<1x32xf32>
    %c4_i32_254 = arith.constant 4 : i32
    %569 = tpu.dynamic_rotate %562 by %c4_i32_254 dim 1 : vector<1x32xf32>, i32 -> vector<1x32xf32>
    %c20_i32_255 = arith.constant 20 : i32
    %570 = tpu.dynamic_rotate %562 by %c20_i32_255 dim 1 : vector<1x32xf32>, i32 -> vector<1x32xf32>
    %571 = arith.select %564, %569, %570 : vector<1x32xi1>, vector<1x32xf32>
    %572 = arith.maximumf %562, %571 : vector<1x32xf32>
    %c8_i32_256 = arith.constant 8 : i32
    %573 = vector.broadcast %c8_i32_256 : i32 to vector<1x32xi32>
    %574 = arith.cmpi sge, %17, %573 : vector<1x32xi32>
    %c8_i32_257 = arith.constant 8 : i32
    %575 = tpu.dynamic_rotate %568 by %c8_i32_257 dim 1 : vector<1x32xf32>, i32 -> vector<1x32xf32>
    %c24_i32_258 = arith.constant 24 : i32
    %576 = tpu.dynamic_rotate %568 by %c24_i32_258 dim 1 : vector<1x32xf32>, i32 -> vector<1x32xf32>
    %577 = arith.select %574, %575, %576 : vector<1x32xi1>, vector<1x32xf32>
    %578 = arith.minimumf %568, %577 : vector<1x32xf32>
    %c8_i32_259 = arith.constant 8 : i32
    %579 = tpu.dynamic_rotate %572 by %c8_i32_259 dim 1 : vector<1x32xf32>, i32 -> vector<1x32xf32>
    %c24_i32_260 = arith.constant 24 : i32
    %580 = tpu.dynamic_rotate %572 by %c24_i32_260 dim 1 : vector<1x32xf32>, i32 -> vector<1x32xf32>
    %581 = arith.select %574, %579, %580 : vector<1x32xi1>, vector<1x32xf32>
    %582 = arith.maximumf %572, %581 : vector<1x32xf32>
    %583 = arith.subf %582, %578 : vector<1x32xf32>
    %cst_261 = arith.constant 0.000000e+00 : f32
    %584 = vector.broadcast %cst_261 : f32 to vector<1x32xf32>
    %585 = arith.cmpf ogt, %583, %584 : vector<1x32xf32>
    %cst_262 = arith.constant 1.000000e+00 : f32
    %cst_263 = arith.constant 2.000000e-01 : f32
    %586 = vector.broadcast %cst_262 : f32 to vector<1x32xf32>
    %587 = vector.broadcast %cst_263 : f32 to vector<1x32xf32>
    %588 = arith.select %585, %586, %587 : vector<1x32xi1>, vector<1x32xf32>
    %cst_264 = arith.constant 1.000000e+00 : f32
    %589 = vector.broadcast %cst_264 : f32 to vector<1x32xf32>
    %590 = arith.select %585, %583, %589 : vector<1x32xi1>, vector<1x32xf32>
    %591 = arith.divf %588, %590 : vector<1x32xf32>
    %cst_265 = arith.constant 0.000000e+00 : f32
    %592 = vector.broadcast %cst_265 : f32 to vector<1x32xf32>
    %593 = arith.select %585, %578, %592 : vector<1x32xi1>, vector<1x32xf32>
    %594 = vector.broadcast %593 : vector<1x32xf32> to vector<16x32xf32>
    %595 = arith.subf %538, %594 : vector<16x32xf32>
    %596 = vector.broadcast %591 : vector<1x32xf32> to vector<16x32xf32>
    %597 = arith.mulf %595, %596 : vector<16x32xf32>
    %cst_266 = arith.constant 4.900000e+01 : f32
    %598 = vector.broadcast %cst_266 : f32 to vector<16x32xf32>
    %599 = arith.mulf %598, %597 : vector<16x32xf32>
    %600 = arith.addf %518, %599 : vector<16x32xf32>
    %c1_i32_267 = arith.constant 1 : i32
    %601 = tpu.dynamic_rotate %597 by %c1_i32_267 dim 0 : vector<16x32xf32>, i32 -> vector<16x32xf32>
    %cst_268 = arith.constant 0.000000e+00 : f32
    %602 = vector.broadcast %cst_268 : f32 to vector<16x32xf32>
    %603 = arith.select %19, %601, %602 : vector<16x32xi1>, vector<16x32xf32>
    %c15_i32_269 = arith.constant 15 : i32
    %604 = tpu.dynamic_rotate %597 by %c15_i32_269 dim 0 : vector<16x32xf32>, i32 -> vector<16x32xf32>
    %cst_270 = arith.constant 0.000000e+00 : f32
    %605 = vector.broadcast %cst_270 : f32 to vector<16x32xf32>
    %606 = arith.select %21, %604, %605 : vector<16x32xi1>, vector<16x32xf32>
    %c1_i32_271 = arith.constant 1 : i32
    %607 = tpu.dynamic_rotate %597 by %c1_i32_271 dim 1 : vector<16x32xf32>, i32 -> vector<16x32xf32>
    %cst_272 = arith.constant 0.000000e+00 : f32
    %608 = vector.broadcast %cst_272 : f32 to vector<16x32xf32>
    %609 = arith.select %23, %607, %608 : vector<16x32xi1>, vector<16x32xf32>
    %c31_i32_273 = arith.constant 31 : i32
    %610 = tpu.dynamic_rotate %597 by %c31_i32_273 dim 1 : vector<16x32xf32>, i32 -> vector<16x32xf32>
    %cst_274 = arith.constant 0.000000e+00 : f32
    %611 = vector.broadcast %cst_274 : f32 to vector<16x32xf32>
    %612 = arith.select %25, %610, %611 : vector<16x32xi1>, vector<16x32xf32>
    %613 = arith.addf %597, %603 : vector<16x32xf32>
    %614 = arith.addf %613, %606 : vector<16x32xf32>
    %615 = arith.addf %614, %609 : vector<16x32xf32>
    %616 = arith.addf %615, %612 : vector<16x32xf32>
    %cst_275 = arith.constant 2.500000e+00 : f32
    %617 = vector.broadcast %cst_275 : f32 to vector<16x32xf32>
    %618 = arith.subf %616, %617 : vector<16x32xf32>
    %cst_276 = arith.constant 0.000000e+00 : f32
    %619 = vector.broadcast %cst_276 : f32 to vector<16x32xf32>
    %620 = arith.maximumf %618, %619 : vector<16x32xf32>
    %cst_277 = arith.constant dense<0x7F800000> : vector<32xf32>
    %621 = vector.multi_reduction <minimumf>, %620, %cst_277 [0] : vector<16x32xf32> to vector<32xf32>
    %622 = vector.shape_cast %621 : vector<32xf32> to vector<1x32xf32>
    %cst_278 = arith.constant dense<0xFF800000> : vector<32xf32>
    %623 = vector.multi_reduction <maximumf>, %620, %cst_278 [0] : vector<16x32xf32> to vector<32xf32>
    %624 = vector.shape_cast %623 : vector<32xf32> to vector<1x32xf32>
    %c1_i32_279 = arith.constant 1 : i32
    %625 = vector.broadcast %c1_i32_279 : i32 to vector<1x32xi32>
    %626 = arith.cmpi sge, %17, %625 : vector<1x32xi32>
    %c1_i32_280 = arith.constant 1 : i32
    %627 = tpu.dynamic_rotate %622 by %c1_i32_280 dim 1 : vector<1x32xf32>, i32 -> vector<1x32xf32>
    %c17_i32_281 = arith.constant 17 : i32
    %628 = tpu.dynamic_rotate %622 by %c17_i32_281 dim 1 : vector<1x32xf32>, i32 -> vector<1x32xf32>
    %629 = arith.select %626, %627, %628 : vector<1x32xi1>, vector<1x32xf32>
    %630 = arith.minimumf %622, %629 : vector<1x32xf32>
    %c1_i32_282 = arith.constant 1 : i32
    %631 = tpu.dynamic_rotate %624 by %c1_i32_282 dim 1 : vector<1x32xf32>, i32 -> vector<1x32xf32>
    %c17_i32_283 = arith.constant 17 : i32
    %632 = tpu.dynamic_rotate %624 by %c17_i32_283 dim 1 : vector<1x32xf32>, i32 -> vector<1x32xf32>
    %633 = arith.select %626, %631, %632 : vector<1x32xi1>, vector<1x32xf32>
    %634 = arith.maximumf %624, %633 : vector<1x32xf32>
    %c2_i32_284 = arith.constant 2 : i32
    %635 = vector.broadcast %c2_i32_284 : i32 to vector<1x32xi32>
    %636 = arith.cmpi sge, %17, %635 : vector<1x32xi32>
    %c2_i32_285 = arith.constant 2 : i32
    %637 = tpu.dynamic_rotate %630 by %c2_i32_285 dim 1 : vector<1x32xf32>, i32 -> vector<1x32xf32>
    %c18_i32_286 = arith.constant 18 : i32
    %638 = tpu.dynamic_rotate %630 by %c18_i32_286 dim 1 : vector<1x32xf32>, i32 -> vector<1x32xf32>
    %639 = arith.select %636, %637, %638 : vector<1x32xi1>, vector<1x32xf32>
    %640 = arith.minimumf %630, %639 : vector<1x32xf32>
    %c2_i32_287 = arith.constant 2 : i32
    %641 = tpu.dynamic_rotate %634 by %c2_i32_287 dim 1 : vector<1x32xf32>, i32 -> vector<1x32xf32>
    %c18_i32_288 = arith.constant 18 : i32
    %642 = tpu.dynamic_rotate %634 by %c18_i32_288 dim 1 : vector<1x32xf32>, i32 -> vector<1x32xf32>
    %643 = arith.select %636, %641, %642 : vector<1x32xi1>, vector<1x32xf32>
    %644 = arith.maximumf %634, %643 : vector<1x32xf32>
    %c4_i32_289 = arith.constant 4 : i32
    %645 = vector.broadcast %c4_i32_289 : i32 to vector<1x32xi32>
    %646 = arith.cmpi sge, %17, %645 : vector<1x32xi32>
    %c4_i32_290 = arith.constant 4 : i32
    %647 = tpu.dynamic_rotate %640 by %c4_i32_290 dim 1 : vector<1x32xf32>, i32 -> vector<1x32xf32>
    %c20_i32_291 = arith.constant 20 : i32
    %648 = tpu.dynamic_rotate %640 by %c20_i32_291 dim 1 : vector<1x32xf32>, i32 -> vector<1x32xf32>
    %649 = arith.select %646, %647, %648 : vector<1x32xi1>, vector<1x32xf32>
    %650 = arith.minimumf %640, %649 : vector<1x32xf32>
    %c4_i32_292 = arith.constant 4 : i32
    %651 = tpu.dynamic_rotate %644 by %c4_i32_292 dim 1 : vector<1x32xf32>, i32 -> vector<1x32xf32>
    %c20_i32_293 = arith.constant 20 : i32
    %652 = tpu.dynamic_rotate %644 by %c20_i32_293 dim 1 : vector<1x32xf32>, i32 -> vector<1x32xf32>
    %653 = arith.select %646, %651, %652 : vector<1x32xi1>, vector<1x32xf32>
    %654 = arith.maximumf %644, %653 : vector<1x32xf32>
    %c8_i32_294 = arith.constant 8 : i32
    %655 = vector.broadcast %c8_i32_294 : i32 to vector<1x32xi32>
    %656 = arith.cmpi sge, %17, %655 : vector<1x32xi32>
    %c8_i32_295 = arith.constant 8 : i32
    %657 = tpu.dynamic_rotate %650 by %c8_i32_295 dim 1 : vector<1x32xf32>, i32 -> vector<1x32xf32>
    %c24_i32_296 = arith.constant 24 : i32
    %658 = tpu.dynamic_rotate %650 by %c24_i32_296 dim 1 : vector<1x32xf32>, i32 -> vector<1x32xf32>
    %659 = arith.select %656, %657, %658 : vector<1x32xi1>, vector<1x32xf32>
    %660 = arith.minimumf %650, %659 : vector<1x32xf32>
    %c8_i32_297 = arith.constant 8 : i32
    %661 = tpu.dynamic_rotate %654 by %c8_i32_297 dim 1 : vector<1x32xf32>, i32 -> vector<1x32xf32>
    %c24_i32_298 = arith.constant 24 : i32
    %662 = tpu.dynamic_rotate %654 by %c24_i32_298 dim 1 : vector<1x32xf32>, i32 -> vector<1x32xf32>
    %663 = arith.select %656, %661, %662 : vector<1x32xi1>, vector<1x32xf32>
    %664 = arith.maximumf %654, %663 : vector<1x32xf32>
    %665 = arith.subf %664, %660 : vector<1x32xf32>
    %cst_299 = arith.constant 0.000000e+00 : f32
    %666 = vector.broadcast %cst_299 : f32 to vector<1x32xf32>
    %667 = arith.cmpf ogt, %665, %666 : vector<1x32xf32>
    %cst_300 = arith.constant 1.000000e+00 : f32
    %cst_301 = arith.constant 2.000000e-01 : f32
    %668 = vector.broadcast %cst_300 : f32 to vector<1x32xf32>
    %669 = vector.broadcast %cst_301 : f32 to vector<1x32xf32>
    %670 = arith.select %667, %668, %669 : vector<1x32xi1>, vector<1x32xf32>
    %cst_302 = arith.constant 1.000000e+00 : f32
    %671 = vector.broadcast %cst_302 : f32 to vector<1x32xf32>
    %672 = arith.select %667, %665, %671 : vector<1x32xi1>, vector<1x32xf32>
    %673 = arith.divf %670, %672 : vector<1x32xf32>
    %cst_303 = arith.constant 0.000000e+00 : f32
    %674 = vector.broadcast %cst_303 : f32 to vector<1x32xf32>
    %675 = arith.select %667, %660, %674 : vector<1x32xi1>, vector<1x32xf32>
    %676 = vector.broadcast %675 : vector<1x32xf32> to vector<16x32xf32>
    %677 = arith.subf %620, %676 : vector<16x32xf32>
    %678 = vector.broadcast %673 : vector<1x32xf32> to vector<16x32xf32>
    %679 = arith.mulf %677, %678 : vector<16x32xf32>
    %cst_304 = arith.constant 6.400000e+01 : f32
    %680 = vector.broadcast %cst_304 : f32 to vector<16x32xf32>
    %681 = arith.mulf %680, %679 : vector<16x32xf32>
    %682 = arith.addf %600, %681 : vector<16x32xf32>
    %c1_i32_305 = arith.constant 1 : i32
    %683 = tpu.dynamic_rotate %679 by %c1_i32_305 dim 0 : vector<16x32xf32>, i32 -> vector<16x32xf32>
    %cst_306 = arith.constant 0.000000e+00 : f32
    %684 = vector.broadcast %cst_306 : f32 to vector<16x32xf32>
    %685 = arith.select %19, %683, %684 : vector<16x32xi1>, vector<16x32xf32>
    %c15_i32_307 = arith.constant 15 : i32
    %686 = tpu.dynamic_rotate %679 by %c15_i32_307 dim 0 : vector<16x32xf32>, i32 -> vector<16x32xf32>
    %cst_308 = arith.constant 0.000000e+00 : f32
    %687 = vector.broadcast %cst_308 : f32 to vector<16x32xf32>
    %688 = arith.select %21, %686, %687 : vector<16x32xi1>, vector<16x32xf32>
    %c1_i32_309 = arith.constant 1 : i32
    %689 = tpu.dynamic_rotate %679 by %c1_i32_309 dim 1 : vector<16x32xf32>, i32 -> vector<16x32xf32>
    %cst_310 = arith.constant 0.000000e+00 : f32
    %690 = vector.broadcast %cst_310 : f32 to vector<16x32xf32>
    %691 = arith.select %23, %689, %690 : vector<16x32xi1>, vector<16x32xf32>
    %c31_i32_311 = arith.constant 31 : i32
    %692 = tpu.dynamic_rotate %679 by %c31_i32_311 dim 1 : vector<16x32xf32>, i32 -> vector<16x32xf32>
    %cst_312 = arith.constant 0.000000e+00 : f32
    %693 = vector.broadcast %cst_312 : f32 to vector<16x32xf32>
    %694 = arith.select %25, %692, %693 : vector<16x32xi1>, vector<16x32xf32>
    %695 = arith.addf %679, %685 : vector<16x32xf32>
    %696 = arith.addf %695, %688 : vector<16x32xf32>
    %697 = arith.addf %696, %691 : vector<16x32xf32>
    %698 = arith.addf %697, %694 : vector<16x32xf32>
    %cst_313 = arith.constant 2.500000e+00 : f32
    %699 = vector.broadcast %cst_313 : f32 to vector<16x32xf32>
    %700 = arith.subf %698, %699 : vector<16x32xf32>
    %cst_314 = arith.constant 0.000000e+00 : f32
    %701 = vector.broadcast %cst_314 : f32 to vector<16x32xf32>
    %702 = arith.maximumf %700, %701 : vector<16x32xf32>
    %cst_315 = arith.constant dense<0x7F800000> : vector<32xf32>
    %703 = vector.multi_reduction <minimumf>, %702, %cst_315 [0] : vector<16x32xf32> to vector<32xf32>
    %704 = vector.shape_cast %703 : vector<32xf32> to vector<1x32xf32>
    %cst_316 = arith.constant dense<0xFF800000> : vector<32xf32>
    %705 = vector.multi_reduction <maximumf>, %702, %cst_316 [0] : vector<16x32xf32> to vector<32xf32>
    %706 = vector.shape_cast %705 : vector<32xf32> to vector<1x32xf32>
    %c1_i32_317 = arith.constant 1 : i32
    %707 = vector.broadcast %c1_i32_317 : i32 to vector<1x32xi32>
    %708 = arith.cmpi sge, %17, %707 : vector<1x32xi32>
    %c1_i32_318 = arith.constant 1 : i32
    %709 = tpu.dynamic_rotate %704 by %c1_i32_318 dim 1 : vector<1x32xf32>, i32 -> vector<1x32xf32>
    %c17_i32_319 = arith.constant 17 : i32
    %710 = tpu.dynamic_rotate %704 by %c17_i32_319 dim 1 : vector<1x32xf32>, i32 -> vector<1x32xf32>
    %711 = arith.select %708, %709, %710 : vector<1x32xi1>, vector<1x32xf32>
    %712 = arith.minimumf %704, %711 : vector<1x32xf32>
    %c1_i32_320 = arith.constant 1 : i32
    %713 = tpu.dynamic_rotate %706 by %c1_i32_320 dim 1 : vector<1x32xf32>, i32 -> vector<1x32xf32>
    %c17_i32_321 = arith.constant 17 : i32
    %714 = tpu.dynamic_rotate %706 by %c17_i32_321 dim 1 : vector<1x32xf32>, i32 -> vector<1x32xf32>
    %715 = arith.select %708, %713, %714 : vector<1x32xi1>, vector<1x32xf32>
    %716 = arith.maximumf %706, %715 : vector<1x32xf32>
    %c2_i32_322 = arith.constant 2 : i32
    %717 = vector.broadcast %c2_i32_322 : i32 to vector<1x32xi32>
    %718 = arith.cmpi sge, %17, %717 : vector<1x32xi32>
    %c2_i32_323 = arith.constant 2 : i32
    %719 = tpu.dynamic_rotate %712 by %c2_i32_323 dim 1 : vector<1x32xf32>, i32 -> vector<1x32xf32>
    %c18_i32_324 = arith.constant 18 : i32
    %720 = tpu.dynamic_rotate %712 by %c18_i32_324 dim 1 : vector<1x32xf32>, i32 -> vector<1x32xf32>
    %721 = arith.select %718, %719, %720 : vector<1x32xi1>, vector<1x32xf32>
    %722 = arith.minimumf %712, %721 : vector<1x32xf32>
    %c2_i32_325 = arith.constant 2 : i32
    %723 = tpu.dynamic_rotate %716 by %c2_i32_325 dim 1 : vector<1x32xf32>, i32 -> vector<1x32xf32>
    %c18_i32_326 = arith.constant 18 : i32
    %724 = tpu.dynamic_rotate %716 by %c18_i32_326 dim 1 : vector<1x32xf32>, i32 -> vector<1x32xf32>
    %725 = arith.select %718, %723, %724 : vector<1x32xi1>, vector<1x32xf32>
    %726 = arith.maximumf %716, %725 : vector<1x32xf32>
    %c4_i32_327 = arith.constant 4 : i32
    %727 = vector.broadcast %c4_i32_327 : i32 to vector<1x32xi32>
    %728 = arith.cmpi sge, %17, %727 : vector<1x32xi32>
    %c4_i32_328 = arith.constant 4 : i32
    %729 = tpu.dynamic_rotate %722 by %c4_i32_328 dim 1 : vector<1x32xf32>, i32 -> vector<1x32xf32>
    %c20_i32_329 = arith.constant 20 : i32
    %730 = tpu.dynamic_rotate %722 by %c20_i32_329 dim 1 : vector<1x32xf32>, i32 -> vector<1x32xf32>
    %731 = arith.select %728, %729, %730 : vector<1x32xi1>, vector<1x32xf32>
    %732 = arith.minimumf %722, %731 : vector<1x32xf32>
    %c4_i32_330 = arith.constant 4 : i32
    %733 = tpu.dynamic_rotate %726 by %c4_i32_330 dim 1 : vector<1x32xf32>, i32 -> vector<1x32xf32>
    %c20_i32_331 = arith.constant 20 : i32
    %734 = tpu.dynamic_rotate %726 by %c20_i32_331 dim 1 : vector<1x32xf32>, i32 -> vector<1x32xf32>
    %735 = arith.select %728, %733, %734 : vector<1x32xi1>, vector<1x32xf32>
    %736 = arith.maximumf %726, %735 : vector<1x32xf32>
    %c8_i32_332 = arith.constant 8 : i32
    %737 = vector.broadcast %c8_i32_332 : i32 to vector<1x32xi32>
    %738 = arith.cmpi sge, %17, %737 : vector<1x32xi32>
    %c8_i32_333 = arith.constant 8 : i32
    %739 = tpu.dynamic_rotate %732 by %c8_i32_333 dim 1 : vector<1x32xf32>, i32 -> vector<1x32xf32>
    %c24_i32_334 = arith.constant 24 : i32
    %740 = tpu.dynamic_rotate %732 by %c24_i32_334 dim 1 : vector<1x32xf32>, i32 -> vector<1x32xf32>
    %741 = arith.select %738, %739, %740 : vector<1x32xi1>, vector<1x32xf32>
    %742 = arith.minimumf %732, %741 : vector<1x32xf32>
    %c8_i32_335 = arith.constant 8 : i32
    %743 = tpu.dynamic_rotate %736 by %c8_i32_335 dim 1 : vector<1x32xf32>, i32 -> vector<1x32xf32>
    %c24_i32_336 = arith.constant 24 : i32
    %744 = tpu.dynamic_rotate %736 by %c24_i32_336 dim 1 : vector<1x32xf32>, i32 -> vector<1x32xf32>
    %745 = arith.select %738, %743, %744 : vector<1x32xi1>, vector<1x32xf32>
    %746 = arith.maximumf %736, %745 : vector<1x32xf32>
    %747 = arith.subf %746, %742 : vector<1x32xf32>
    %cst_337 = arith.constant 0.000000e+00 : f32
    %748 = vector.broadcast %cst_337 : f32 to vector<1x32xf32>
    %749 = arith.cmpf ogt, %747, %748 : vector<1x32xf32>
    %cst_338 = arith.constant 1.000000e+00 : f32
    %cst_339 = arith.constant 2.000000e-01 : f32
    %750 = vector.broadcast %cst_338 : f32 to vector<1x32xf32>
    %751 = vector.broadcast %cst_339 : f32 to vector<1x32xf32>
    %752 = arith.select %749, %750, %751 : vector<1x32xi1>, vector<1x32xf32>
    %cst_340 = arith.constant 1.000000e+00 : f32
    %753 = vector.broadcast %cst_340 : f32 to vector<1x32xf32>
    %754 = arith.select %749, %747, %753 : vector<1x32xi1>, vector<1x32xf32>
    %755 = arith.divf %752, %754 : vector<1x32xf32>
    %cst_341 = arith.constant 0.000000e+00 : f32
    %756 = vector.broadcast %cst_341 : f32 to vector<1x32xf32>
    %757 = arith.select %749, %742, %756 : vector<1x32xi1>, vector<1x32xf32>
    %758 = vector.broadcast %757 : vector<1x32xf32> to vector<16x32xf32>
    %759 = arith.subf %702, %758 : vector<16x32xf32>
    %760 = vector.broadcast %755 : vector<1x32xf32> to vector<16x32xf32>
    %761 = arith.mulf %759, %760 : vector<16x32xf32>
    %cst_342 = arith.constant 8.100000e+01 : f32
    %762 = vector.broadcast %cst_342 : f32 to vector<16x32xf32>
    %763 = arith.mulf %762, %761 : vector<16x32xf32>
    %764 = arith.addf %682, %763 : vector<16x32xf32>
    %c1_i32_343 = arith.constant 1 : i32
    %765 = tpu.dynamic_rotate %761 by %c1_i32_343 dim 0 : vector<16x32xf32>, i32 -> vector<16x32xf32>
    %cst_344 = arith.constant 0.000000e+00 : f32
    %766 = vector.broadcast %cst_344 : f32 to vector<16x32xf32>
    %767 = arith.select %19, %765, %766 : vector<16x32xi1>, vector<16x32xf32>
    %c15_i32_345 = arith.constant 15 : i32
    %768 = tpu.dynamic_rotate %761 by %c15_i32_345 dim 0 : vector<16x32xf32>, i32 -> vector<16x32xf32>
    %cst_346 = arith.constant 0.000000e+00 : f32
    %769 = vector.broadcast %cst_346 : f32 to vector<16x32xf32>
    %770 = arith.select %21, %768, %769 : vector<16x32xi1>, vector<16x32xf32>
    %c1_i32_347 = arith.constant 1 : i32
    %771 = tpu.dynamic_rotate %761 by %c1_i32_347 dim 1 : vector<16x32xf32>, i32 -> vector<16x32xf32>
    %cst_348 = arith.constant 0.000000e+00 : f32
    %772 = vector.broadcast %cst_348 : f32 to vector<16x32xf32>
    %773 = arith.select %23, %771, %772 : vector<16x32xi1>, vector<16x32xf32>
    %c31_i32_349 = arith.constant 31 : i32
    %774 = tpu.dynamic_rotate %761 by %c31_i32_349 dim 1 : vector<16x32xf32>, i32 -> vector<16x32xf32>
    %cst_350 = arith.constant 0.000000e+00 : f32
    %775 = vector.broadcast %cst_350 : f32 to vector<16x32xf32>
    %776 = arith.select %25, %774, %775 : vector<16x32xi1>, vector<16x32xf32>
    %777 = arith.addf %761, %767 : vector<16x32xf32>
    %778 = arith.addf %777, %770 : vector<16x32xf32>
    %779 = arith.addf %778, %773 : vector<16x32xf32>
    %780 = arith.addf %779, %776 : vector<16x32xf32>
    %cst_351 = arith.constant 2.500000e+00 : f32
    %781 = vector.broadcast %cst_351 : f32 to vector<16x32xf32>
    %782 = arith.subf %780, %781 : vector<16x32xf32>
    %cst_352 = arith.constant 0.000000e+00 : f32
    %783 = vector.broadcast %cst_352 : f32 to vector<16x32xf32>
    %784 = arith.maximumf %782, %783 : vector<16x32xf32>
    %cst_353 = arith.constant dense<0x7F800000> : vector<32xf32>
    %785 = vector.multi_reduction <minimumf>, %784, %cst_353 [0] : vector<16x32xf32> to vector<32xf32>
    %786 = vector.shape_cast %785 : vector<32xf32> to vector<1x32xf32>
    %cst_354 = arith.constant dense<0xFF800000> : vector<32xf32>
    %787 = vector.multi_reduction <maximumf>, %784, %cst_354 [0] : vector<16x32xf32> to vector<32xf32>
    %788 = vector.shape_cast %787 : vector<32xf32> to vector<1x32xf32>
    %c1_i32_355 = arith.constant 1 : i32
    %789 = vector.broadcast %c1_i32_355 : i32 to vector<1x32xi32>
    %790 = arith.cmpi sge, %17, %789 : vector<1x32xi32>
    %c1_i32_356 = arith.constant 1 : i32
    %791 = tpu.dynamic_rotate %786 by %c1_i32_356 dim 1 : vector<1x32xf32>, i32 -> vector<1x32xf32>
    %c17_i32_357 = arith.constant 17 : i32
    %792 = tpu.dynamic_rotate %786 by %c17_i32_357 dim 1 : vector<1x32xf32>, i32 -> vector<1x32xf32>
    %793 = arith.select %790, %791, %792 : vector<1x32xi1>, vector<1x32xf32>
    %794 = arith.minimumf %786, %793 : vector<1x32xf32>
    %c1_i32_358 = arith.constant 1 : i32
    %795 = tpu.dynamic_rotate %788 by %c1_i32_358 dim 1 : vector<1x32xf32>, i32 -> vector<1x32xf32>
    %c17_i32_359 = arith.constant 17 : i32
    %796 = tpu.dynamic_rotate %788 by %c17_i32_359 dim 1 : vector<1x32xf32>, i32 -> vector<1x32xf32>
    %797 = arith.select %790, %795, %796 : vector<1x32xi1>, vector<1x32xf32>
    %798 = arith.maximumf %788, %797 : vector<1x32xf32>
    %c2_i32_360 = arith.constant 2 : i32
    %799 = vector.broadcast %c2_i32_360 : i32 to vector<1x32xi32>
    %800 = arith.cmpi sge, %17, %799 : vector<1x32xi32>
    %c2_i32_361 = arith.constant 2 : i32
    %801 = tpu.dynamic_rotate %794 by %c2_i32_361 dim 1 : vector<1x32xf32>, i32 -> vector<1x32xf32>
    %c18_i32_362 = arith.constant 18 : i32
    %802 = tpu.dynamic_rotate %794 by %c18_i32_362 dim 1 : vector<1x32xf32>, i32 -> vector<1x32xf32>
    %803 = arith.select %800, %801, %802 : vector<1x32xi1>, vector<1x32xf32>
    %804 = arith.minimumf %794, %803 : vector<1x32xf32>
    %c2_i32_363 = arith.constant 2 : i32
    %805 = tpu.dynamic_rotate %798 by %c2_i32_363 dim 1 : vector<1x32xf32>, i32 -> vector<1x32xf32>
    %c18_i32_364 = arith.constant 18 : i32
    %806 = tpu.dynamic_rotate %798 by %c18_i32_364 dim 1 : vector<1x32xf32>, i32 -> vector<1x32xf32>
    %807 = arith.select %800, %805, %806 : vector<1x32xi1>, vector<1x32xf32>
    %808 = arith.maximumf %798, %807 : vector<1x32xf32>
    %c4_i32_365 = arith.constant 4 : i32
    %809 = vector.broadcast %c4_i32_365 : i32 to vector<1x32xi32>
    %810 = arith.cmpi sge, %17, %809 : vector<1x32xi32>
    %c4_i32_366 = arith.constant 4 : i32
    %811 = tpu.dynamic_rotate %804 by %c4_i32_366 dim 1 : vector<1x32xf32>, i32 -> vector<1x32xf32>
    %c20_i32_367 = arith.constant 20 : i32
    %812 = tpu.dynamic_rotate %804 by %c20_i32_367 dim 1 : vector<1x32xf32>, i32 -> vector<1x32xf32>
    %813 = arith.select %810, %811, %812 : vector<1x32xi1>, vector<1x32xf32>
    %814 = arith.minimumf %804, %813 : vector<1x32xf32>
    %c4_i32_368 = arith.constant 4 : i32
    %815 = tpu.dynamic_rotate %808 by %c4_i32_368 dim 1 : vector<1x32xf32>, i32 -> vector<1x32xf32>
    %c20_i32_369 = arith.constant 20 : i32
    %816 = tpu.dynamic_rotate %808 by %c20_i32_369 dim 1 : vector<1x32xf32>, i32 -> vector<1x32xf32>
    %817 = arith.select %810, %815, %816 : vector<1x32xi1>, vector<1x32xf32>
    %818 = arith.maximumf %808, %817 : vector<1x32xf32>
    %c8_i32_370 = arith.constant 8 : i32
    %819 = vector.broadcast %c8_i32_370 : i32 to vector<1x32xi32>
    %820 = arith.cmpi sge, %17, %819 : vector<1x32xi32>
    %c8_i32_371 = arith.constant 8 : i32
    %821 = tpu.dynamic_rotate %814 by %c8_i32_371 dim 1 : vector<1x32xf32>, i32 -> vector<1x32xf32>
    %c24_i32_372 = arith.constant 24 : i32
    %822 = tpu.dynamic_rotate %814 by %c24_i32_372 dim 1 : vector<1x32xf32>, i32 -> vector<1x32xf32>
    %823 = arith.select %820, %821, %822 : vector<1x32xi1>, vector<1x32xf32>
    %824 = arith.minimumf %814, %823 : vector<1x32xf32>
    %c8_i32_373 = arith.constant 8 : i32
    %825 = tpu.dynamic_rotate %818 by %c8_i32_373 dim 1 : vector<1x32xf32>, i32 -> vector<1x32xf32>
    %c24_i32_374 = arith.constant 24 : i32
    %826 = tpu.dynamic_rotate %818 by %c24_i32_374 dim 1 : vector<1x32xf32>, i32 -> vector<1x32xf32>
    %827 = arith.select %820, %825, %826 : vector<1x32xi1>, vector<1x32xf32>
    %828 = arith.maximumf %818, %827 : vector<1x32xf32>
    %829 = arith.subf %828, %824 : vector<1x32xf32>
    %cst_375 = arith.constant 0.000000e+00 : f32
    %830 = vector.broadcast %cst_375 : f32 to vector<1x32xf32>
    %831 = arith.cmpf ogt, %829, %830 : vector<1x32xf32>
    %cst_376 = arith.constant 1.000000e+00 : f32
    %cst_377 = arith.constant 2.000000e-01 : f32
    %832 = vector.broadcast %cst_376 : f32 to vector<1x32xf32>
    %833 = vector.broadcast %cst_377 : f32 to vector<1x32xf32>
    %834 = arith.select %831, %832, %833 : vector<1x32xi1>, vector<1x32xf32>
    %cst_378 = arith.constant 1.000000e+00 : f32
    %835 = vector.broadcast %cst_378 : f32 to vector<1x32xf32>
    %836 = arith.select %831, %829, %835 : vector<1x32xi1>, vector<1x32xf32>
    %837 = arith.divf %834, %836 : vector<1x32xf32>
    %cst_379 = arith.constant 0.000000e+00 : f32
    %838 = vector.broadcast %cst_379 : f32 to vector<1x32xf32>
    %839 = arith.select %831, %824, %838 : vector<1x32xi1>, vector<1x32xf32>
    %840 = vector.broadcast %839 : vector<1x32xf32> to vector<16x32xf32>
    %841 = arith.subf %784, %840 : vector<16x32xf32>
    %842 = vector.broadcast %837 : vector<1x32xf32> to vector<16x32xf32>
    %843 = arith.mulf %841, %842 : vector<16x32xf32>
    %cst_380 = arith.constant 1.000000e+02 : f32
    %844 = vector.broadcast %cst_380 : f32 to vector<16x32xf32>
    %845 = arith.mulf %844, %843 : vector<16x32xf32>
    %846 = arith.addf %764, %845 : vector<16x32xf32>
    %cst_381 = arith.constant dense<0.000000e+00> : vector<32xf32>
    %847 = vector.multi_reduction <add>, %846, %cst_381 [0] : vector<16x32xf32> to vector<32xf32>
    %848 = vector.shape_cast %847 : vector<32xf32> to vector<1x32xf32>
    %cst_382 = arith.constant dense<0.000000e+00> : vector<1xf32>
    %849 = vector.multi_reduction <add>, %848, %cst_382 [1] : vector<1x32xf32> to vector<1xf32>
    %850 = vector.shape_cast %849 : vector<1xf32> to vector<1x1xf32>
    %c0_383 = arith.constant 0 : index
    %c0_384 = arith.constant 0 : index
    %c0_385 = arith.constant 0 : index
    %851 = vector.load %arg3[%c0_383, %c0_384, %c0_385] : memref<1x1x1xf32, #tpu.memory_space<vmem>>, vector<1x1x1xf32>
    %852 = vector.shape_cast %851 : vector<1x1x1xf32> to vector<1x1xf32>
    %853 = vector.shape_cast %850 : vector<1x1xf32> to vector<1x1x1xf32>
    tpu.vector_store %arg3[%c0_383, %c0_384, %c0_385], %853 {strides = array<i32>} : memref<1x1x1xf32, #tpu.memory_space<vmem>>, vector<1x1x1xf32>,
    return
  }
  func.func @transform_0(%arg0: i32) -> (i32, i32, i32) {
    %c0_i32 = arith.constant 0 : i32
    %c0_i32_0 = arith.constant 0 : i32
    %c0_i32_1 = arith.constant 0 : i32
    return %arg0, %c0_i32, %c0_i32_0 : i32, i32, i32
  }
  func.func @transform_1(%arg0: i32) -> (i32, i32, i32) {
    %c0_i32 = arith.constant 0 : i32
    %c0_i32_0 = arith.constant 0 : i32
    %c0_i32_1 = arith.constant 0 : i32
    return %arg0, %c0_i32, %c0_i32_0 : i32, i32, i32
  }
  func.func @transform_2(%arg0: i32) -> (i32, i32, i32) {
    %c0_i32 = arith.constant 0 : i32
    %c0_i32_0 = arith.constant 0 : i32
    %c0_i32_1 = arith.constant 0 : i32
    return %arg0, %c0_i32, %c0_i32_0 : i32, i32, i32
  }
}

</mosaic_0001>

<llo_original>
// kernel: tpu_custom_call.1
$region0: #{tpu_custom_call.1}
  #allocation0 [shape = 'u32[]', space=smem, size = 0x4, offset = 0x4, fixed_abs, tag = 'smem constant byte address 0x4 - core index']
  #allocation1 [shape = 'u32[144,128]{1,0:T(1,128)}', space=vmem, size = 0x12000, scoped, tag = 'internal scratch']
  %s0 = inlined_call_operand.hbm [shape: f32[1,16,32], index: 0, kind: input, shape index: {}]
  %s1 = inlined_call_operand.hbm [shape: f32[1,16,32], index: 1, kind: input, shape index: {}]
  %s2 = inlined_call_operand.hbm [shape: f32[1,1,1], index: 2, kind: output, shape index: {}]
  %s3 = sld [smem:[#allocation0]]
  $region26: #{tpu_custom_call.1} parent=0
    _
  %s5 = ssub.s32 1, %s3
  %s6 = scalar_select 0, %s5, %s3
  $region1: #{tpu_custom_call.1} parent=0
    #allocation2 [shape = 'u8[8192]{0}', space=vmem, size = 0x2000, scoped, tag = 'input window, operand 0, single buffered']
    #allocation3 [shape = 's32[1]{0}', space=sflag, size = 0x4, scoped, tag = 'scoped memory for tpu_custom_call.1']
    #allocation4 [shape = 's32[1]{0}', space=sflag, size = 0x4, scoped, tag = 'scoped memory for tpu_custom_call.1']
    #allocation5 [shape = 'u8[8192]{0}', space=vmem, size = 0x2000, scoped, tag = 'input window, operand 1, single buffered']
    #allocation6 [shape = 's32[1]{0}', space=sflag, size = 0x4, scoped, tag = 'scoped memory for tpu_custom_call.1']
    #allocation7 [shape = 'u8[512]{0}', space=vmem, size = 0x400, scoped, tag = 'output window, operand 0, single buffered']
    %7 = vsyncpa [#allocation3], 0
    %8 = vsyncpa [#allocation6], 0
    %9 = vsyncpa [#allocation4], 0
    // Predicated region
    $region2: #{tpu_custom_call.1} parent=1 // pred_check
      _
    $region3: #{tpu_custom_call.1} parent=1 // pred_check_branch
      %11 = sbr.rel (0) target = $region5
    $region4: #{tpu_custom_call.1} parent=1 // pred_region
      %s13 = ssub.s32 256, 256
      %14 = vsyncadd [#allocation3], %s13
      %s15 = sshll.u32 [#allocation2], 4
      %s16 = int_to_ptr.vmem [resolvable:$true] %s15
      %21 = dma.hbm_to_vmem [thread:$0]  %s0, 256, %s16, [#allocation3], 128, 128, 8
    $region5: #{tpu_custom_call.1} parent=1 // pred_fallthru
      _
    // Predicated region
    $region6: #{tpu_custom_call.1} parent=1 // pred_check
      _
    $region7: #{tpu_custom_call.1} parent=1 // pred_check_branch
      %23 = sbr.rel (0) target = $region9
    $region8: #{tpu_custom_call.1} parent=1 // pred_region
      %s25 = ssub.s32 256, 256
      %26 = vsyncadd [#allocation6], %s25
      %s27 = sshll.u32 [#allocation5], 4
      %s28 = int_to_ptr.vmem [resolvable:$true] %s27
      %33 = dma.hbm_to_vmem [thread:$0]  %s1, 256, %s28, [#allocation6], 128, 128, 8
    $region9: #{tpu_custom_call.1} parent=1 // pred_fallthru
      _
    // Predicated region
    $region10: #{tpu_custom_call.1} parent=1 // pred_check
      _
    $region11: #{tpu_custom_call.1} parent=1 // pred_check_branch
      %35 = sbr.rel (0) target = $region13
    $region12: #{tpu_custom_call.1} parent=1 // pred_region
      %36 = dma.done [#allocation3], 256
    $region13: #{tpu_custom_call.1} parent=1 // pred_fallthru
      _
    // Predicated region
    $region14: #{tpu_custom_call.1} parent=1 // pred_check
      _
    $region15: #{tpu_custom_call.1} parent=1 // pred_check_branch
      %38 = sbr.rel (0) target = $region17
    $region16: #{tpu_custom_call.1} parent=1 // pred_region
      %39 = dma.done [#allocation6], 256
    $region17: #{tpu_custom_call.1} parent=1 // pred_fallthru
      _
    %v40 = vld [vmem:[#allocation2] sm:$0xff]
    %v41 = vld [vmem:[#allocation2 + $0x8] sm:$0xff]
    %v42 = vxor.u32 %v40, 2147483648
    %v43 = vxor.u32 %v41, 2147483648
    %v44 = vmul.f32 %v42, 1.442695
    %v45 = vpow.pop %v44
    %v46 = vmul.f32 %v43, 1.442695
    %v47 = vpow.pop %v46
    %v48 = vadd.f32 %v45, 1.0
    %v49 = vadd.f32 %v47, 1.0
    %v50 = vrcp.pop %v48
    %v51 = vmul.f32 1.0, %v50
    %v52 = vrcp.pop %v49
    %v53 = vmul.f32 1.0, %v52
    %v54 = vld [vmem:[#allocation5] sm:$0xff]
    %v55 = vld [vmem:[#allocation5 + $0x8] sm:$0xff]
    %v56 = vsub.f32 %v51, %v54
    %v57 = vsub.f32 %v53, %v55
    %v58 = vmul.f32 %v56, %v56
    %v59 = vmul.f32 %v57, %v57
    %v60 = vlaneseq
    %v61 = vshrl.u32 %v60, 7
    %v62 = vadd.s32 %v61, 8
    %v63 = vlaneseq
    %v64 = vand.u32 %v63, 127
    %v65 = vand.u32 %v64, 15
    %vm66 = vcmp.gt.s32.totalorder %v61, 0
    %vm67 = vcmp.gt.s32.totalorder %v62, 0
    %vm68 = vcmp.lt.s32.totalorder %v61, 15
    %vm69 = vcmp.lt.s32.totalorder %v62, 15
    %vm70 = vcmp.gt.s32.totalorder %v65, 0
    %vm71 = vcmp.lt.s32.totalorder %v65, 15
    %v72 = vrot.slane %v58, 7
    %v73 = vrot.slane %v59, 7
    %vm74 = vcmp.lt.s32.totalorder %v61, 1
    %v75 = vsel %vm74, %v72, %v73
    %v76 = vsel %vm74, %v73, %v72
    %v77 = vsel %vm66, %v76, 0.0
    %v78 = vsel %vm67, %v75, 0.0
    %v79 = vrot.slane %v58, 1
    %v80 = vrot.slane %v59, 1
    %vm81 = vcmp.lt.s32.totalorder %v61, 7
    %v82 = vsel %vm81, %v79, %v80
    %v83 = vsel %vm81, %v80, %v79
    %v84 = vsel %vm68, %v82, 0.0
    %v85 = vsel %vm69, %v83, 0.0
    %vm86 = vcmask 1047808
    %87 = vrot.lane.b32.xlu0 %v58, 32
    %v88 = vpop.permute.xlu0 %87
    %v89 = vsel %vm86, %v88, %v58
    %90 = vrot.lane.b32.xlu0 %v59, 32
    %v91 = vpop.permute.xlu0 %90
    %v92 = vsel %vm86, %v91, %v59
    %93 = vrot.lane.b32.xlu0 %v89, 32
    %v94 = vpop.permute.xlu0 %93
    %95 = vrot.lane.b32.xlu0 %v92, 32
    %v96 = vpop.permute.xlu0 %95
    %v97 = vsel %vm86, %v94, %v58
    %v98 = vsel %vm86, %v96, %v59
    %101 = vrot.lane.b32.xlu0 %v97, 97
    %v102 = vpop.permute.xlu0 %101
    %103 = vrot.lane.b32.xlu0 %v98, 97
    %v104 = vpop.permute.xlu0 %103
    %v107 = vsel %vm70, %v102, 0.0
    %v108 = vsel %vm70, %v104, 0.0
    %109 = vrot.lane.b32.xlu0 %v97, 127
    %v110 = vpop.permute.xlu0 %109
    %111 = vrot.lane.b32.xlu0 %v98, 127
    %v112 = vpop.permute.xlu0 %111
    %v115 = vsel %vm71, %v110, 0.0
    %v116 = vsel %vm71, %v112, 0.0
    %v117 = vadd.f32 %v58, %v77
    %v118 = vadd.f32 %v59, %v78
    %v119 = vadd.f32 %v117, %v84
    %v120 = vadd.f32 %v118, %v85
    %v121 = vadd.f32 %v119, %v107
    %v122 = vadd.f32 %v120, %v108
    %v123 = vadd.f32 %v121, %v115
    %v124 = vadd.f32 %v122, %v116
    %v125 = vsub.f32 %v123, 2.5
    %v126 = vsub.f32 %v124, 2.5
    %v127 = vmax.f32 %v125, 0.0
    %v128 = vmax.f32 %v126, 0.0
    %vm129 = vcmask 261120
    %v130 = vsel %vm129, %v127, inf
    %v131 = vsel %vm129, %v128, inf
    %v132 = vmin.f32 %v130, %v131
    %v133 = vrot.slane %v132, 4
    %v134 = vmin.f32 %v132, %v133
    %v135 = vrot.slane %v134, 2
    %v136 = vmin.f32 %v134, %v135
    %v137 = vrot.slane %v136, 1
    %v138 = vmin.f32 %v136, %v137
    %v139 = vsel %vm129, %v127, -inf
    %v140 = vsel %vm129, %v128, -inf
    %v141 = vmax.f32 %v139, %v140
    %v142 = vrot.slane %v141, 4
    %v143 = vmax.f32 %v141, %v142
    %v144 = vrot.slane %v143, 2
    %v145 = vmax.f32 %v143, %v144
    %v146 = vrot.slane %v145, 1
    %v147 = vmax.f32 %v145, %v146
    %vm148 = vcmp.ge.s32.totalorder %v65, 1
    %149 = vrot.lane.b32.xlu0 %v138, 32
    %v150 = vpop.permute.xlu0 %149
    %v151 = vsel %vm86, %v150, %v138
    %152 = vrot.lane.b32.xlu0 %v151, 32
    %v153 = vpop.permute.xlu0 %152
    %v154 = vsel %vm86, %v153, %v138
    %156 = vrot.lane.b32.xlu0 %v154, 97
    %v157 = vpop.permute.xlu0 %156
    %159 = vrot.lane.b32.xlu0 %v154, 113
    %v160 = vpop.permute.xlu0 %159
    %v162 = vsel %vm148, %v157, %v160
    %v163 = vmin.f32 %v138, %v162
    %164 = vrot.lane.b32.xlu0 %v147, 32
    %v165 = vpop.permute.xlu0 %164
    %v166 = vsel %vm86, %v165, %v147
    %167 = vrot.lane.b32.xlu0 %v166, 32
    %v168 = vpop.permute.xlu0 %167
    %v169 = vsel %vm86, %v168, %v147
    %171 = vrot.lane.b32.xlu0 %v169, 97
    %v172 = vpop.permute.xlu0 %171
    %174 = vrot.lane.b32.xlu0 %v169, 113
    %v175 = vpop.permute.xlu0 %174
    %v177 = vsel %vm148, %v172, %v175
    %v178 = vmax.f32 %v147, %v177
    %vm179 = vcmp.ge.s32.totalorder %v65, 2
    %180 = vrot.lane.b32.xlu0 %v163, 32
    %v181 = vpop.permute.xlu0 %180
    %v182 = vsel %vm86, %v181, %v163
    %183 = vrot.lane.b32.xlu0 %v182, 32
    %v184 = vpop.permute.xlu0 %183
    %v185 = vsel %vm86, %v184, %v163
    %187 = vrot.lane.b32.xlu0 %v185, 98
    %v188 = vpop.permute.xlu0 %187
    %190 = vrot.lane.b32.xlu0 %v185, 114
    %v191 = vpop.permute.xlu0 %190
    %v193 = vsel %vm179, %v188, %v191
    %v194 = vmin.f32 %v163, %v193
    %195 = vrot.lane.b32.xlu0 %v178, 32
    %v196 = vpop.permute.xlu0 %195
    %v197 = vsel %vm86, %v196, %v178
    %198 = vrot.lane.b32.xlu0 %v197, 32
    %v199 = vpop.permute.xlu0 %198
    %v200 = vsel %vm86, %v199, %v178
    %202 = vrot.lane.b32.xlu0 %v200, 98
    %v203 = vpop.permute.xlu0 %202
    %205 = vrot.lane.b32.xlu0 %v200, 114
    %v206 = vpop.permute.xlu0 %205
    %v208 = vsel %vm179, %v203, %v206
    %v209 = vmax.f32 %v178, %v208
    %vm210 = vcmp.ge.s32.totalorder %v65, 4
    %211 = vrot.lane.b32.xlu0 %v194, 32
    %v212 = vpop.permute.xlu0 %211
    %v213 = vsel %vm86, %v212, %v194
    %214 = vrot.lane.b32.xlu0 %v213, 32
    %v215 = vpop.permute.xlu0 %214
    %v216 = vsel %vm86, %v215, %v194
    %218 = vrot.lane.b32.xlu0 %v216, 100
    %v219 = vpop.permute.xlu0 %218
    %221 = vrot.lane.b32.xlu0 %v216, 116
    %v222 = vpop.permute.xlu0 %221
    %v224 = vsel %vm210, %v219, %v222
    %v225 = vmin.f32 %v194, %v224
    %226 = vrot.lane.b32.xlu0 %v209, 32
    %v227 = vpop.permute.xlu0 %226
    %v228 = vsel %vm86, %v227, %v209
    %229 = vrot.lane.b32.xlu0 %v228, 32
    %v230 = vpop.permute.xlu0 %229
    %v231 = vsel %vm86, %v230, %v209
    %233 = vrot.lane.b32.xlu0 %v231, 100
    %v234 = vpop.permute.xlu0 %233
    %236 = vrot.lane.b32.xlu0 %v231, 116
    %v237 = vpop.permute.xlu0 %236
    %v239 = vsel %vm210, %v234, %v237
    %v240 = vmax.f32 %v209, %v239
    %vm241 = vcmp.ge.s32.totalorder %v65, 8
    %242 = vrot.lane.b32.xlu0 %v225, 32
    %v243 = vpop.permute.xlu0 %242
    %v244 = vsel %vm86, %v243, %v225
    %245 = vrot.lane.b32.xlu0 %v244, 32
    %v246 = vpop.permute.xlu0 %245
    %v247 = vsel %vm86, %v246, %v225
    %249 = vrot.lane.b32.xlu0 %v247, 104
    %v250 = vpop.permute.xlu0 %249
    %252 = vrot.lane.b32.xlu0 %v247, 120
    %v253 = vpop.permute.xlu0 %252
    %v255 = vsel %vm241, %v250, %v253
    %v256 = vmin.f32 %v225, %v255
    %257 = vrot.lane.b32.xlu0 %v240, 32
    %v258 = vpop.permute.xlu0 %257
    %v259 = vsel %vm86, %v258, %v240
    %260 = vrot.lane.b32.xlu0 %v259, 32
    %v261 = vpop.permute.xlu0 %260
    %v262 = vsel %vm86, %v261, %v240
    %264 = vrot.lane.b32.xlu0 %v262, 104
    %v265 = vpop.permute.xlu0 %264
    %267 = vrot.lane.b32.xlu0 %v262, 120
    %v268 = vpop.permute.xlu0 %267
    %v270 = vsel %vm241, %v265, %v268
    %v271 = vmax.f32 %v240, %v270
    %v272 = vsub.f32 %v271, %v256
    %vm273 = vcmp.gt.f32.partialorder %v272, 0.0
    %v274 = vsel %vm273, 1.0, 0.2
    %v275 = vsel %vm273, %v272, 1.0
    %v276 = vrcp.pop %v275
    %v277 = vmul.f32 %v274, %v276
    %v278 = vsel %vm273, %v256, 0.0
    %v279 = vlaneseq
    %v280 = vshrl.u32 %v279, 7
    %v281 = vsub.s32 0, %v280
    %v282 = vrot.slane %v278, %v281
    %v283 = vsub.f32 %v127, %v282
    %v284 = vsub.f32 %v128, %v282
    %v285 = vlaneseq
    %v286 = vshrl.u32 %v285, 7
    %v287 = vsub.s32 0, %v286
    %v288 = vrot.slane %v277, %v287
    %v289 = vmul.f32 %v283, %v288
    %v290 = vmul.f32 %v284, %v288
    %v291 = vadd.f32 %v289, 0.0
    %v292 = vadd.f32 %v290, 0.0
    %v293 = vrot.slane %v289, 7
    %v294 = vrot.slane %v290, 7
    %v295 = vsel %vm74, %v293, %v294
    %v296 = vsel %vm74, %v294, %v293
    %v297 = vsel %vm66, %v296, 0.0
    %v298 = vsel %vm67, %v295, 0.0
    %v299 = vrot.slane %v289, 1
    %v300 = vrot.slane %v290, 1
    %v301 = vsel %vm81, %v299, %v300
    %v302 = vsel %vm81, %v300, %v299
    %v303 = vsel %vm68, %v301, 0.0
    %v304 = vsel %vm69, %v302, 0.0
    %305 = vrot.lane.b32.xlu0 %v289, 32
    %v306 = vpop.permute.xlu0 %305
    %v307 = vsel %vm86, %v306, %v289
    %308 = vrot.lane.b32.xlu0 %v290, 32
    %v309 = vpop.permute.xlu0 %308
    %v310 = vsel %vm86, %v309, %v290
    %311 = vrot.lane.b32.xlu0 %v307, 32
    %v312 = vpop.permute.xlu0 %311
    %313 = vrot.lane.b32.xlu0 %v310, 32
    %v314 = vpop.permute.xlu0 %313
    %v315 = vsel %vm86, %v312, %v289
    %v316 = vsel %vm86, %v314, %v290
    %319 = vrot.lane.b32.xlu0 %v315, 97
    %v320 = vpop.permute.xlu0 %319
    %321 = vrot.lane.b32.xlu0 %v316, 97
    %v322 = vpop.permute.xlu0 %321
    %v325 = vsel %vm70, %v320, 0.0
    %v326 = vsel %vm70, %v322, 0.0
    %327 = vrot.lane.b32.xlu0 %v315, 127
    %v328 = vpop.permute.xlu0 %327
    %329 = vrot.lane.b32.xlu0 %v316, 127
    %v330 = vpop.permute.xlu0 %329
    %v333 = vsel %vm71, %v328, 0.0
    %v334 = vsel %vm71, %v330, 0.0
    %v335 = vadd.f32 %v289, %v297
    %v336 = vadd.f32 %v290, %v298
    %v337 = vadd.f32 %v335, %v303
    %v338 = vadd.f32 %v336, %v304
    %v339 = vadd.f32 %v337, %v325
    %v340 = vadd.f32 %v338, %v326
    %v341 = vadd.f32 %v339, %v333
    %v342 = vadd.f32 %v340, %v334
    %v343 = vsub.f32 %v341, 2.5
    %v344 = vsub.f32 %v342, 2.5
    %v345 = vmax.f32 %v343, 0.0
    %v346 = vmax.f32 %v344, 0.0
    %v347 = vsel %vm129, %v345, inf
    %v348 = vsel %vm129, %v346, inf
    %v349 = vmin.f32 %v347, %v348
    %v350 = vrot.slane %v349, 4
    %v351 = vmin.f32 %v349, %v350
    %v352 = vrot.slane %v351, 2
    %v353 = vmin.f32 %v351, %v352
    %v354 = vrot.slane %v353, 1
    %v355 = vmin.f32 %v353, %v354
    %v356 = vsel %vm129, %v345, -inf
    %v357 = vsel %vm129, %v346, -inf
    %v358 = vmax.f32 %v356, %v357
    %v359 = vrot.slane %v358, 4
    %v360 = vmax.f32 %v358, %v359
    %v361 = vrot.slane %v360, 2
    %v362 = vmax.f32 %v360, %v361
    %v363 = vrot.slane %v362, 1
    %v364 = vmax.f32 %v362, %v363
    %365 = vrot.lane.b32.xlu0 %v355, 32
    %v366 = vpop.permute.xlu0 %365
    %v367 = vsel %vm86, %v366, %v355
    %368 = vrot.lane.b32.xlu0 %v367, 32
    %v369 = vpop.permute.xlu0 %368
    %v370 = vsel %vm86, %v369, %v355
    %372 = vrot.lane.b32.xlu0 %v370, 97
    %v373 = vpop.permute.xlu0 %372
    %375 = vrot.lane.b32.xlu0 %v370, 113
    %v376 = vpop.permute.xlu0 %375
    %v378 = vsel %vm148, %v373, %v376
    %v379 = vmin.f32 %v355, %v378
    %380 = vrot.lane.b32.xlu0 %v364, 32
    %v381 = vpop.permute.xlu0 %380
    %v382 = vsel %vm86, %v381, %v364
    %383 = vrot.lane.b32.xlu0 %v382, 32
    %v384 = vpop.permute.xlu0 %383
    %v385 = vsel %vm86, %v384, %v364
    %387 = vrot.lane.b32.xlu0 %v385, 97
    %v388 = vpop.permute.xlu0 %387
    %390 = vrot.lane.b32.xlu0 %v385, 113
    %v391 = vpop.permute.xlu0 %390
    %v393 = vsel %vm148, %v388, %v391
    %v394 = vmax.f32 %v364, %v393
    %395 = vrot.lane.b32.xlu0 %v379, 32
    %v396 = vpop.permute.xlu0 %395
    %v397 = vsel %vm86, %v396, %v379
    %398 = vrot.lane.b32.xlu0 %v397, 32
    %v399 = vpop.permute.xlu0 %398
    %v400 = vsel %vm86, %v399, %v379
    %402 = vrot.lane.b32.xlu0 %v400, 98
    %v403 = vpop.permute.xlu0 %402
    %405 = vrot.lane.b32.xlu0 %v400, 114
    %v406 = vpop.permute.xlu0 %405
    %v408 = vsel %vm179, %v403, %v406
    %v409 = vmin.f32 %v379, %v408
    %410 = vrot.lane.b32.xlu0 %v394, 32
    %v411 = vpop.permute.xlu0 %410
    %v412 = vsel %vm86, %v411, %v394
    %413 = vrot.lane.b32.xlu0 %v412, 32
    %v414 = vpop.permute.xlu0 %413
    %v415 = vsel %vm86, %v414, %v394
    %417 = vrot.lane.b32.xlu0 %v415, 98
    %v418 = vpop.permute.xlu0 %417
    %420 = vrot.lane.b32.xlu0 %v415, 114
    %v421 = vpop.permute.xlu0 %420
    %v423 = vsel %vm179, %v418, %v421
    %v424 = vmax.f32 %v394, %v423
    %425 = vrot.lane.b32.xlu0 %v409, 32
    %v426 = vpop.permute.xlu0 %425
    %v427 = vsel %vm86, %v426, %v409
    %428 = vrot.lane.b32.xlu0 %v427, 32
    %v429 = vpop.permute.xlu0 %428
    %v430 = vsel %vm86, %v429, %v409
    %432 = vrot.lane.b32.xlu0 %v430, 100
    %v433 = vpop.permute.xlu0 %432
    %435 = vrot.lane.b32.xlu0 %v430, 116
    %v436 = vpop.permute.xlu0 %435
    %v438 = vsel %vm210, %v433, %v436
    %v439 = vmin.f32 %v409, %v438
    %440 = vrot.lane.b32.xlu0 %v424, 32
    %v441 = vpop.permute.xlu0 %440
    %v442 = vsel %vm86, %v441, %v424
    %443 = vrot.lane.b32.xlu0 %v442, 32
    %v444 = vpop.permute.xlu0 %443
    %v445 = vsel %vm86, %v444, %v424
    %447 = vrot.lane.b32.xlu0 %v445, 100
    %v448 = vpop.permute.xlu0 %447
    %450 = vrot.lane.b32.xlu0 %v445, 116
    %v451 = vpop.permute.xlu0 %450
    %v453 = vsel %vm210, %v448, %v451
    %v454 = vmax.f32 %v424, %v453
    %455 = vrot.lane.b32.xlu0 %v439, 32
    %v456 = vpop.permute.xlu0 %455
    %v457 = vsel %vm86, %v456, %v439
    %458 = vrot.lane.b32.xlu0 %v457, 32
    %v459 = vpop.permute.xlu0 %458
    %v460 = vsel %vm86, %v459, %v439
    %462 = vrot.lane.b32.xlu0 %v460, 104
    %v463 = vpop.permute.xlu0 %462
    %465 = vrot.lane.b32.xlu0 %v460, 120
    %v466 = vpop.permute.xlu0 %465
    %v468 = vsel %vm241, %v463, %v466
    %v469 = vmin.f32 %v439, %v468
    %470 = vrot.lane.b32.xlu0 %v454, 32
    %v471 = vpop.permute.xlu0 %470
    %v472 = vsel %vm86, %v471, %v454
    %473 = vrot.lane.b32.xlu0 %v472, 32
    %v474 = vpop.permute.xlu0 %473
    %v475 = vsel %vm86, %v474, %v454
    %477 = vrot.lane.b32.xlu0 %v475, 104
    %v478 = vpop.permute.xlu0 %477
    %480 = vrot.lane.b32.xlu0 %v475, 120
    %v481 = vpop.permute.xlu0 %480
    %v483 = vsel %vm241, %v478, %v481
    %v484 = vmax.f32 %v454, %v483
    %v485 = vsub.f32 %v484, %v469
    %vm486 = vcmp.gt.f32.partialorder %v485, 0.0
    %v487 = vsel %vm486, 1.0, 0.2
    %v488 = vsel %vm486, %v485, 1.0
    %v489 = vrcp.pop %v488
    %v490 = vmul.f32 %v487, %v489
    %v491 = vsel %vm486, %v469, 0.0
    %v492 = vlaneseq
    %v493 = vshrl.u32 %v492, 7
    %v494 = vsub.s32 0, %v493
    %v495 = vrot.slane %v491, %v494
    %v496 = vsub.f32 %v345, %v495
    %v497 = vsub.f32 %v346, %v495
    %v498 = vlaneseq
    %v499 = vshrl.u32 %v498, 7
    %v500 = vsub.s32 0, %v499
    %v501 = vrot.slane %v490, %v500
    %v502 = vmul.f32 %v496, %v501
    %v503 = vmul.f32 %v497, %v501
    %v504 = vmul.f32 %v502, 4.0
    %v505 = vmul.f32 %v503, 4.0
    %v506 = vadd.f32 %v291, %v504
    %v507 = vadd.f32 %v292, %v505
    %v508 = vrot.slane %v502, 7
    %v509 = vrot.slane %v503, 7
    %v510 = vsel %vm74, %v508, %v509
    %v511 = vsel %vm74, %v509, %v508
    %v512 = vsel %vm66, %v511, 0.0
    %v513 = vsel %vm67, %v510, 0.0
    %v514 = vrot.slane %v502, 1
    %v515 = vrot.slane %v503, 1
    %v516 = vsel %vm81, %v514, %v515
    %v517 = vsel %vm81, %v515, %v514
    %v518 = vsel %vm68, %v516, 0.0
    %v519 = vsel %vm69, %v517, 0.0
    %520 = vrot.lane.b32.xlu0 %v502, 32
    %v521 = vpop.permute.xlu0 %520
    %v522 = vsel %vm86, %v521, %v502
    %523 = vrot.lane.b32.xlu0 %v503, 32
    %v524 = vpop.permute.xlu0 %523
    %v525 = vsel %vm86, %v524, %v503
    %526 = vrot.lane.b32.xlu0 %v522, 32
    %v527 = vpop.permute.xlu0 %526
    %528 = vrot.lane.b32.xlu0 %v525, 32
    %v529 = vpop.permute.xlu0 %528
    %v530 = vsel %vm86, %v527, %v502
    %v531 = vsel %vm86, %v529, %v503
    %534 = vrot.lane.b32.xlu0 %v530, 97
    %v535 = vpop.permute.xlu0 %534
    %536 = vrot.lane.b32.xlu0 %v531, 97
    %v537 = vpop.permute.xlu0 %536
    %v540 = vsel %vm70, %v535, 0.0
    %v541 = vsel %vm70, %v537, 0.0
    %542 = vrot.lane.b32.xlu0 %v530, 127
    %v543 = vpop.permute.xlu0 %542
    %544 = vrot.lane.b32.xlu0 %v531, 127
    %v545 = vpop.permute.xlu0 %544
    %v548 = vsel %vm71, %v543, 0.0
    %v549 = vsel %vm71, %v545, 0.0
    %v550 = vadd.f32 %v502, %v512
    %v551 = vadd.f32 %v503, %v513
    %v552 = vadd.f32 %v550, %v518
    %v553 = vadd.f32 %v551, %v519
    %v554 = vadd.f32 %v552, %v540
    %v555 = vadd.f32 %v553, %v541
    %v556 = vadd.f32 %v554, %v548
    %v557 = vadd.f32 %v555, %v549
    %v558 = vsub.f32 %v556, 2.5
    %v559 = vsub.f32 %v557, 2.5
    %v560 = vmax.f32 %v558, 0.0
    %v561 = vmax.f32 %v559, 0.0
    %v562 = vsel %vm129, %v560, inf
    %v563 = vsel %vm129, %v561, inf
    %v564 = vmin.f32 %v562, %v563
    %v565 = vrot.slane %v564, 4
    %v566 = vmin.f32 %v564, %v565
    %v567 = vrot.slane %v566, 2
    %v568 = vmin.f32 %v566, %v567
    %v569 = vrot.slane %v568, 1
    %v570 = vmin.f32 %v568, %v569
    %v571 = vsel %vm129, %v560, -inf
    %v572 = vsel %vm129, %v561, -inf
    %v573 = vmax.f32 %v571, %v572
    %v574 = vrot.slane %v573, 4
    %v575 = vmax.f32 %v573, %v574
    %v576 = vrot.slane %v575, 2
    %v577 = vmax.f32 %v575, %v576
    %v578 = vrot.slane %v577, 1
    %v579 = vmax.f32 %v577, %v578
    %580 = vrot.lane.b32.xlu0 %v570, 32
    %v581 = vpop.permute.xlu0 %580
    %v582 = vsel %vm86, %v581, %v570
    %583 = vrot.lane.b32.xlu0 %v582, 32
    %v584 = vpop.permute.xlu0 %583
    %v585 = vsel %vm86, %v584, %v570
    %587 = vrot.lane.b32.xlu0 %v585, 97
    %v588 = vpop.permute.xlu0 %587
    %590 = vrot.lane.b32.xlu0 %v585, 113
    %v591 = vpop.permute.xlu0 %590
    %v593 = vsel %vm148, %v588, %v591
    %v594 = vmin.f32 %v570, %v593
    %595 = vrot.lane.b32.xlu0 %v579, 32
    %v596 = vpop.permute.xlu0 %595
    %v597 = vsel %vm86, %v596, %v579
    %598 = vrot.lane.b32.xlu0 %v597, 32
    %v599 = vpop.permute.xlu0 %598
    %v600 = vsel %vm86, %v599, %v579
    %602 = vrot.lane.b32.xlu0 %v600, 97
    %v603 = vpop.permute.xlu0 %602
    %605 = vrot.lane.b32.xlu0 %v600, 113
    %v606 = vpop.permute.xlu0 %605
    %v608 = vsel %vm148, %v603, %v606
    %v609 = vmax.f32 %v579, %v608
    %610 = vrot.lane.b32.xlu0 %v594, 32
    %v611 = vpop.permute.xlu0 %610
    %v612 = vsel %vm86, %v611, %v594
    %613 = vrot.lane.b32.xlu0 %v612, 32
    %v614 = vpop.permute.xlu0 %613
    %v615 = vsel %vm86, %v614, %v594
    %617 = vrot.lane.b32.xlu0 %v615, 98
    %v618 = vpop.permute.xlu0 %617
    %620 = vrot.lane.b32.xlu0 %v615, 114
    %v621 = vpop.permute.xlu0 %620
    %v623 = vsel %vm179, %v618, %v621
    %v624 = vmin.f32 %v594, %v623
    %625 = vrot.lane.b32.xlu0 %v609, 32
    %v626 = vpop.permute.xlu0 %625
    %v627 = vsel %vm86, %v626, %v609
    %628 = vrot.lane.b32.xlu0 %v627, 32
    %v629 = vpop.permute.xlu0 %628
    %v630 = vsel %vm86, %v629, %v609
    %632 = vrot.lane.b32.xlu0 %v630, 98
    %v633 = vpop.permute.xlu0 %632
    %635 = vrot.lane.b32.xlu0 %v630, 114
    %v636 = vpop.permute.xlu0 %635
    %v638 = vsel %vm179, %v633, %v636
    %v639 = vmax.f32 %v609, %v638
    %640 = vrot.lane.b32.xlu0 %v624, 32
    %v641 = vpop.permute.xlu0 %640
    %v642 = vsel %vm86, %v641, %v624
    %643 = vrot.lane.b32.xlu0 %v642, 32
    %v644 = vpop.permute.xlu0 %643
    %v645 = vsel %vm86, %v644, %v624
    %647 = vrot.lane.b32.xlu0 %v645, 100
    %v648 = vpop.permute.xlu0 %647
    %650 = vrot.lane.b32.xlu0 %v645, 116
    %v651 = vpop.permute.xlu0 %650
    %v653 = vsel %vm210, %v648, %v651
    %v654 = vmin.f32 %v624, %v653
    %655 = vrot.lane.b32.xlu0 %v639, 32
    %v656 = vpop.permute.xlu0 %655
    %v657 = vsel %vm86, %v656, %v639
    %658 = vrot.lane.b32.xlu0 %v657, 32
    %v659 = vpop.permute.xlu0 %658
    %v660 = vsel %vm86, %v659, %v639
    %662 = vrot.lane.b32.xlu0 %v660, 100
    %v663 = vpop.permute.xlu0 %662
    %665 = vrot.lane.b32.xlu0 %v660, 116
    %v666 = vpop.permute.xlu0 %665
    %v668 = vsel %vm210, %v663, %v666
    %v669 = vmax.f32 %v639, %v668
    %670 = vrot.lane.b32.xlu0 %v654, 32
    %v671 = vpop.permute.xlu0 %670
    %v672 = vsel %vm86, %v671, %v654
    %673 = vrot.lane.b32.xlu0 %v672, 32
    %v674 = vpop.permute.xlu0 %673
    %v675 = vsel %vm86, %v674, %v654
    %677 = vrot.lane.b32.xlu0 %v675, 104
    %v678 = vpop.permute.xlu0 %677
    %680 = vrot.lane.b32.xlu0 %v675, 120
    %v681 = vpop.permute.xlu0 %680
    %v683 = vsel %vm241, %v678, %v681
    %v684 = vmin.f32 %v654, %v683
    %685 = vrot.lane.b32.xlu0 %v669, 32
    %v686 = vpop.permute.xlu0 %685
    %v687 = vsel %vm86, %v686, %v669
    %688 = vrot.lane.b32.xlu0 %v687, 32
    %v689 = vpop.permute.xlu0 %688
    %v690 = vsel %vm86, %v689, %v669
    %692 = vrot.lane.b32.xlu0 %v690, 104
    %v693 = vpop.permute.xlu0 %692
    %695 = vrot.lane.b32.xlu0 %v690, 120
    %v696 = vpop.permute.xlu0 %695
    %v698 = vsel %vm241, %v693, %v696
    %v699 = vmax.f32 %v669, %v698
    %v700 = vsub.f32 %v699, %v684
    %vm701 = vcmp.gt.f32.partialorder %v700, 0.0
    %v702 = vsel %vm701, 1.0, 0.2
    %v703 = vsel %vm701, %v700, 1.0
    %v704 = vrcp.pop %v703
    %v705 = vmul.f32 %v702, %v704
    %v706 = vsel %vm701, %v684, 0.0
    %v707 = vlaneseq
    %v708 = vshrl.u32 %v707, 7
    %v709 = vsub.s32 0, %v708
    %v710 = vrot.slane %v706, %v709
    %v711 = vsub.f32 %v560, %v710
    %v712 = vsub.f32 %v561, %v710
    %v713 = vlaneseq
    %v714 = vshrl.u32 %v713, 7
    %v715 = vsub.s32 0, %v714
    %v716 = vrot.slane %v705, %v715
    %v717 = vmul.f32 %v711, %v716
    %v718 = vmul.f32 %v712, %v716
    %v719 = vmul.f32 %v717, 9.0
    %v720 = vmul.f32 %v718, 9.0
    %v721 = vadd.f32 %v506, %v719
    %v722 = vadd.f32 %v507, %v720
    %v723 = vrot.slane %v717, 7
    %v724 = vrot.slane %v718, 7
    %v725 = vsel %vm74, %v723, %v724
    %v726 = vsel %vm74, %v724, %v723
    %v727 = vsel %vm66, %v726, 0.0
    %v728 = vsel %vm67, %v725, 0.0
    %v729 = vrot.slane %v717, 1
    %v730 = vrot.slane %v718, 1
    %v731 = vsel %vm81, %v729, %v730
    %v732 = vsel %vm81, %v730, %v729
    %v733 = vsel %vm68, %v731, 0.0
    %v734 = vsel %vm69, %v732, 0.0
    %735 = vrot.lane.b32.xlu0 %v717, 32
    %v736 = vpop.permute.xlu0 %735
    %v737 = vsel %vm86, %v736, %v717
    %738 = vrot.lane.b32.xlu0 %v718, 32
    %v739 = vpop.permute.xlu0 %738
    %v740 = vsel %vm86, %v739, %v718
    %741 = vrot.lane.b32.xlu0 %v737, 32
    %v742 = vpop.permute.xlu0 %741
    %743 = vrot.lane.b32.xlu0 %v740, 32
    %v744 = vpop.permute.xlu0 %743
    %v745 = vsel %vm86, %v742, %v717
    %v746 = vsel %vm86, %v744, %v718
    %749 = vrot.lane.b32.xlu0 %v745, 97
    %v750 = vpop.permute.xlu0 %749
    %751 = vrot.lane.b32.xlu0 %v746, 97
    %v752 = vpop.permute.xlu0 %751
    %v755 = vsel %vm70, %v750, 0.0
    %v756 = vsel %vm70, %v752, 0.0
    %757 = vrot.lane.b32.xlu0 %v745, 127
    %v758 = vpop.permute.xlu0 %757
    %759 = vrot.lane.b32.xlu0 %v746, 127
    %v760 = vpop.permute.xlu0 %759
    %v763 = vsel %vm71, %v758, 0.0
    %v764 = vsel %vm71, %v760, 0.0
    %v765 = vadd.f32 %v717, %v727
    %v766 = vadd.f32 %v718, %v728
    %v767 = vadd.f32 %v765, %v733
    %v768 = vadd.f32 %v766, %v734
    %v769 = vadd.f32 %v767, %v755
    %v770 = vadd.f32 %v768, %v756
    %v771 = vadd.f32 %v769, %v763
    %v772 = vadd.f32 %v770, %v764
    %v773 = vsub.f32 %v771, 2.5
    %v774 = vsub.f32 %v772, 2.5
    %v775 = vmax.f32 %v773, 0.0
    %v776 = vmax.f32 %v774, 0.0
    %v777 = vsel %vm129, %v775, inf
    %v778 = vsel %vm129, %v776, inf
    %v779 = vmin.f32 %v777, %v778
    %v780 = vrot.slane %v779, 4
    %v781 = vmin.f32 %v779, %v780
    %v782 = vrot.slane %v781, 2
    %v783 = vmin.f32 %v781, %v782
    %v784 = vrot.slane %v783, 1
    %v785 = vmin.f32 %v783, %v784
    %v786 = vsel %vm129, %v775, -inf
    %v787 = vsel %vm129, %v776, -inf
    %v788 = vmax.f32 %v786, %v787
    %v789 = vrot.slane %v788, 4
    %v790 = vmax.f32 %v788, %v789
    %v791 = vrot.slane %v790, 2
    %v792 = vmax.f32 %v790, %v791
    %v793 = vrot.slane %v792, 1
    %v794 = vmax.f32 %v792, %v793
    %795 = vrot.lane.b32.xlu0 %v785, 32
    %v796 = vpop.permute.xlu0 %795
    %v797 = vsel %vm86, %v796, %v785
    %798 = vrot.lane.b32.xlu0 %v797, 32
    %v799 = vpop.permute.xlu0 %798
    %v800 = vsel %vm86, %v799, %v785
    %802 = vrot.lane.b32.xlu0 %v800, 97
    %v803 = vpop.permute.xlu0 %802
    %805 = vrot.lane.b32.xlu0 %v800, 113
    %v806 = vpop.permute.xlu0 %805
    %v808 = vsel %vm148, %v803, %v806
    %v809 = vmin.f32 %v785, %v808
    %810 = vrot.lane.b32.xlu0 %v794, 32
    %v811 = vpop.permute.xlu0 %810
    %v812 = vsel %vm86, %v811, %v794
    %813 = vrot.lane.b32.xlu0 %v812, 32
    %v814 = vpop.permute.xlu0 %813
    %v815 = vsel %vm86, %v814, %v794
    %817 = vrot.lane.b32.xlu0 %v815, 97
    %v818 = vpop.permute.xlu0 %817
    %820 = vrot.lane.b32.xlu0 %v815, 113
    %v821 = vpop.permute.xlu0 %820
    %v823 = vsel %vm148, %v818, %v821
    %v824 = vmax.f32 %v794, %v823
    %825 = vrot.lane.b32.xlu0 %v809, 32
    %v826 = vpop.permute.xlu0 %825
    %v827 = vsel %vm86, %v826, %v809
    %828 = vrot.lane.b32.xlu0 %v827, 32
    %v829 = vpop.permute.xlu0 %828
    %v830 = vsel %vm86, %v829, %v809
    %832 = vrot.lane.b32.xlu0 %v830, 98
    %v833 = vpop.permute.xlu0 %832
    %835 = vrot.lane.b32.xlu0 %v830, 114
    %v836 = vpop.permute.xlu0 %835
    %v838 = vsel %vm179, %v833, %v836
    %v839 = vmin.f32 %v809, %v838
    %840 = vrot.lane.b32.xlu0 %v824, 32
    %v841 = vpop.permute.xlu0 %840
    %v842 = vsel %vm86, %v841, %v824
    %843 = vrot.lane.b32.xlu0 %v842, 32
    %v844 = vpop.permute.xlu0 %843
    %v845 = vsel %vm86, %v844, %v824
    %847 = vrot.lane.b32.xlu0 %v845, 98
    %v848 = vpop.permute.xlu0 %847
    %850 = vrot.lane.b32.xlu0 %v845, 114
    %v851 = vpop.permute.xlu0 %850
    %v853 = vsel %vm179, %v848, %v851
    %v854 = vmax.f32 %v824, %v853
    %855 = vrot.lane.b32.xlu0 %v839, 32
    %v856 = vpop.permute.xlu0 %855
    %v857 = vsel %vm86, %v856, %v839
    %858 = vrot.lane.b32.xlu0 %v857, 32
    %v859 = vpop.permute.xlu0 %858
    %v860 = vsel %vm86, %v859, %v839
    %862 = vrot.lane.b32.xlu0 %v860, 100
    %v863 = vpop.permute.xlu0 %862
    %865 = vrot.lane.b32.xlu0 %v860, 116
    %v866 = vpop.permute.xlu0 %865
    %v868 = vsel %vm210, %v863, %v866
    %v869 = vmin.f32 %v839, %v868
    %870 = vrot.lane.b32.xlu0 %v854, 32
    %v871 = vpop.permute.xlu0 %870
    %v872 = vsel %vm86, %v871, %v854
    %873 = vrot.lane.b32.xlu0 %v872, 32
    %v874 = vpop.permute.xlu0 %873
    %v875 = vsel %vm86, %v874, %v854
    %877 = vrot.lane.b32.xlu0 %v875, 100
    %v878 = vpop.permute.xlu0 %877
    %880 = vrot.lane.b32.xlu0 %v875, 116
    %v881 = vpop.permute.xlu0 %880
    %v883 = vsel %vm210, %v878, %v881
    %v884 = vmax.f32 %v854, %v883
    %885 = vrot.lane.b32.xlu0 %v869, 32
    %v886 = vpop.permute.xlu0 %885
    %v887 = vsel %vm86, %v886, %v869
    %888 = vrot.lane.b32.xlu0 %v887, 32
    %v889 = vpop.permute.xlu0 %888
    %v890 = vsel %vm86, %v889, %v869
    %892 = vrot.lane.b32.xlu0 %v890, 104
    %v893 = vpop.permute.xlu0 %892
    %895 = vrot.lane.b32.xlu0 %v890, 120
    %v896 = vpop.permute.xlu0 %895
    %v898 = vsel %vm241, %v893, %v896
    %v899 = vmin.f32 %v869, %v898
    %900 = vrot.lane.b32.xlu0 %v884, 32
    %v901 = vpop.permute.xlu0 %900
    %v902 = vsel %vm86, %v901, %v884
    %903 = vrot.lane.b32.xlu0 %v902, 32
    %v904 = vpop.permute.xlu0 %903
    %v905 = vsel %vm86, %v904, %v884
    %907 = vrot.lane.b32.xlu0 %v905, 104
    %v908 = vpop.permute.xlu0 %907
    %910 = vrot.lane.b32.xlu0 %v905, 120
    %v911 = vpop.permute.xlu0 %910
    %v913 = vsel %vm241, %v908, %v911
    %v914 = vmax.f32 %v884, %v913
    %v915 = vsub.f32 %v914, %v899
    %vm916 = vcmp.gt.f32.partialorder %v915, 0.0
    %v917 = vsel %vm916, 1.0, 0.2
    %v918 = vsel %vm916, %v915, 1.0
    %v919 = vrcp.pop %v918
    %v920 = vmul.f32 %v917, %v919
    %v921 = vsel %vm916, %v899, 0.0
    %v922 = vlaneseq
    %v923 = vshrl.u32 %v922, 7
    %v924 = vsub.s32 0, %v923
    %v925 = vrot.slane %v921, %v924
    %v926 = vsub.f32 %v775, %v925
    %v927 = vsub.f32 %v776, %v925
    %v928 = vlaneseq
    %v929 = vshrl.u32 %v928, 7
    %v930 = vsub.s32 0, %v929
    %v931 = vrot.slane %v920, %v930
    %v932 = vmul.f32 %v926, %v931
    %v933 = vmul.f32 %v927, %v931
    %v934 = vmul.f32 %v932, 16.0
    %v935 = vmul.f32 %v933, 16.0
    %v936 = vadd.f32 %v721, %v934
    %v937 = vadd.f32 %v722, %v935
    %v938 = vrot.slane %v932, 7
    %v939 = vrot.slane %v933, 7
    %v940 = vsel %vm74, %v938, %v939
    %v941 = vsel %vm74, %v939, %v938
    %v942 = vsel %vm66, %v941, 0.0
    %v943 = vsel %vm67, %v940, 0.0
    %v944 = vrot.slane %v932, 1
    %v945 = vrot.slane %v933, 1
    %v946 = vsel %vm81, %v944, %v945
    %v947 = vsel %vm81, %v945, %v944
    %v948 = vsel %vm68, %v946, 0.0
    %v949 = vsel %vm69, %v947, 0.0
    %950 = vrot.lane.b32.xlu0 %v932, 32
    %v951 = vpop.permute.xlu0 %950
    %v952 = vsel %vm86, %v951, %v932
    %953 = vrot.lane.b32.xlu0 %v933, 32
    %v954 = vpop.permute.xlu0 %953
    %v955 = vsel %vm86, %v954, %v933
    %956 = vrot.lane.b32.xlu0 %v952, 32
    %v957 = vpop.permute.xlu0 %956
    %958 = vrot.lane.b32.xlu0 %v955, 32
    %v959 = vpop.permute.xlu0 %958
    %v960 = vsel %vm86, %v957, %v932
    %v961 = vsel %vm86, %v959, %v933
    %964 = vrot.lane.b32.xlu0 %v960, 97
    %v965 = vpop.permute.xlu0 %964
    %966 = vrot.lane.b32.xlu0 %v961, 97
    %v967 = vpop.permute.xlu0 %966
    %v970 = vsel %vm70, %v965, 0.0
    %v971 = vsel %vm70, %v967, 0.0
    %972 = vrot.lane.b32.xlu0 %v960, 127
    %v973 = vpop.permute.xlu0 %972
    %974 = vrot.lane.b32.xlu0 %v961, 127
    %v975 = vpop.permute.xlu0 %974
    %v978 = vsel %vm71, %v973, 0.0
    %v979 = vsel %vm71, %v975, 0.0
    %v980 = vadd.f32 %v932, %v942
    %v981 = vadd.f32 %v933, %v943
    %v982 = vadd.f32 %v980, %v948
    %v983 = vadd.f32 %v981, %v949
    %v984 = vadd.f32 %v982, %v970
    %v985 = vadd.f32 %v983, %v971
    %v986 = vadd.f32 %v984, %v978
    %v987 = vadd.f32 %v985, %v979
    %v988 = vsub.f32 %v986, 2.5
    %v989 = vsub.f32 %v987, 2.5
    %v990 = vmax.f32 %v988, 0.0
    %v991 = vmax.f32 %v989, 0.0
    %v992 = vsel %vm129, %v990, inf
    %v993 = vsel %vm129, %v991, inf
    %v994 = vmin.f32 %v992, %v993
    %v995 = vrot.slane %v994, 4
    %v996 = vmin.f32 %v994, %v995
    %v997 = vrot.slane %v996, 2
    %v998 = vmin.f32 %v996, %v997
    %v999 = vrot.slane %v998, 1
    %v1000 = vmin.f32 %v998, %v999
    %v1001 = vsel %vm129, %v990, -inf
    %v1002 = vsel %vm129, %v991, -inf
    %v1003 = vmax.f32 %v1001, %v1002
    %v1004 = vrot.slane %v1003, 4
    %v1005 = vmax.f32 %v1003, %v1004
    %v1006 = vrot.slane %v1005, 2
    %v1007 = vmax.f32 %v1005, %v1006
    %v1008 = vrot.slane %v1007, 1
    %v1009 = vmax.f32 %v1007, %v1008
    %1010 = vrot.lane.b32.xlu0 %v1000, 32
    %v1011 = vpop.permute.xlu0 %1010
    %v1012 = vsel %vm86, %v1011, %v1000
    %1013 = vrot.lane.b32.xlu0 %v1012, 32
    %v1014 = vpop.permute.xlu0 %1013
    %v1015 = vsel %vm86, %v1014, %v1000
    %1017 = vrot.lane.b32.xlu0 %v1015, 97
    %v1018 = vpop.permute.xlu0 %1017
    %1020 = vrot.lane.b32.xlu0 %v1015, 113
    %v1021 = vpop.permute.xlu0 %1020
    %v1023 = vsel %vm148, %v1018, %v1021
    %v1024 = vmin.f32 %v1000, %v1023
    %1025 = vrot.lane.b32.xlu0 %v1009, 32
    %v1026 = vpop.permute.xlu0 %1025
    %v1027 = vsel %vm86, %v1026, %v1009
    %1028 = vrot.lane.b32.xlu0 %v1027, 32
    %v1029 = vpop.permute.xlu0 %1028
    %v1030 = vsel %vm86, %v1029, %v1009
    %1032 = vrot.lane.b32.xlu0 %v1030, 97
    %v1033 = vpop.permute.xlu0 %1032
    %1035 = vrot.lane.b32.xlu0 %v1030, 113
    %v1036 = vpop.permute.xlu0 %1035
    %v1038 = vsel %vm148, %v1033, %v1036
    %v1039 = vmax.f32 %v1009, %v1038
    %1040 = vrot.lane.b32.xlu0 %v1024, 32
    %v1041 = vpop.permute.xlu0 %1040
    %v1042 = vsel %vm86, %v1041, %v1024
    %1043 = vrot.lane.b32.xlu0 %v1042, 32
    %v1044 = vpop.permute.xlu0 %1043
    %v1045 = vsel %vm86, %v1044, %v1024
    %1047 = vrot.lane.b32.xlu0 %v1045, 98
    %v1048 = vpop.permute.xlu0 %1047
    %1050 = vrot.lane.b32.xlu0 %v1045, 114
    %v1051 = vpop.permute.xlu0 %1050
    %v1053 = vsel %vm179, %v1048, %v1051
    %v1054 = vmin.f32 %v1024, %v1053
    %1055 = vrot.lane.b32.xlu0 %v1039, 32
    %v1056 = vpop.permute.xlu0 %1055
    %v1057 = vsel %vm86, %v1056, %v1039
    %1058 = vrot.lane.b32.xlu0 %v1057, 32
    %v1059 = vpop.permute.xlu0 %1058
    %v1060 = vsel %vm86, %v1059, %v1039
    %1062 = vrot.lane.b32.xlu0 %v1060, 98
    %v1063 = vpop.permute.xlu0 %1062
    %1065 = vrot.lane.b32.xlu0 %v1060, 114
    %v1066 = vpop.permute.xlu0 %1065
    %v1068 = vsel %vm179, %v1063, %v1066
    %v1069 = vmax.f32 %v1039, %v1068
    %1070 = vrot.lane.b32.xlu0 %v1054, 32
    %v1071 = vpop.permute.xlu0 %1070
    %v1072 = vsel %vm86, %v1071, %v1054
    %1073 = vrot.lane.b32.xlu0 %v1072, 32
    %v1074 = vpop.permute.xlu0 %1073
    %v1075 = vsel %vm86, %v1074, %v1054
    %1077 = vrot.lane.b32.xlu0 %v1075, 100
    %v1078 = vpop.permute.xlu0 %1077
    %1080 = vrot.lane.b32.xlu0 %v1075, 116
    %v1081 = vpop.permute.xlu0 %1080
    %v1083 = vsel %vm210, %v1078, %v1081
    %v1084 = vmin.f32 %v1054, %v1083
    %1085 = vrot.lane.b32.xlu0 %v1069, 32
    %v1086 = vpop.permute.xlu0 %1085
    %v1087 = vsel %vm86, %v1086, %v1069
    %1088 = vrot.lane.b32.xlu0 %v1087, 32
    %v1089 = vpop.permute.xlu0 %1088
    %v1090 = vsel %vm86, %v1089, %v1069
    %1092 = vrot.lane.b32.xlu0 %v1090, 100
    %v1093 = vpop.permute.xlu0 %1092
    %1095 = vrot.lane.b32.xlu0 %v1090, 116
    %v1096 = vpop.permute.xlu0 %1095
    %v1098 = vsel %vm210, %v1093, %v1096
    %v1099 = vmax.f32 %v1069, %v1098
    %1100 = vrot.lane.b32.xlu0 %v1084, 32
    %v1101 = vpop.permute.xlu0 %1100
    %v1102 = vsel %vm86, %v1101, %v1084
    %1103 = vrot.lane.b32.xlu0 %v1102, 32
    %v1104 = vpop.permute.xlu0 %1103
    %v1105 = vsel %vm86, %v1104, %v1084
    %1107 = vrot.lane.b32.xlu0 %v1105, 104
    %v1108 = vpop.permute.xlu0 %1107
    %1110 = vrot.lane.b32.xlu0 %v1105, 120
    %v1111 = vpop.permute.xlu0 %1110
    %v1113 = vsel %vm241, %v1108, %v1111
    %v1114 = vmin.f32 %v1084, %v1113
    %1115 = vrot.lane.b32.xlu0 %v1099, 32
    %v1116 = vpop.permute.xlu0 %1115
    %v1117 = vsel %vm86, %v1116, %v1099
    %1118 = vrot.lane.b32.xlu0 %v1117, 32
    %v1119 = vpop.permute.xlu0 %1118
    %v1120 = vsel %vm86, %v1119, %v1099
    %1122 = vrot.lane.b32.xlu0 %v1120, 104
    %v1123 = vpop.permute.xlu0 %1122
    %1125 = vrot.lane.b32.xlu0 %v1120, 120
    %v1126 = vpop.permute.xlu0 %1125
    %v1128 = vsel %vm241, %v1123, %v1126
    %v1129 = vmax.f32 %v1099, %v1128
    %v1130 = vsub.f32 %v1129, %v1114
    %vm1131 = vcmp.gt.f32.partialorder %v1130, 0.0
    %v1132 = vsel %vm1131, 1.0, 0.2
    %v1133 = vsel %vm1131, %v1130, 1.0
    %v1134 = vrcp.pop %v1133
    %v1135 = vmul.f32 %v1132, %v1134
    %v1136 = vsel %vm1131, %v1114, 0.0
    %v1137 = vlaneseq
    %v1138 = vshrl.u32 %v1137, 7
    %v1139 = vsub.s32 0, %v1138
    %v1140 = vrot.slane %v1136, %v1139
    %v1141 = vsub.f32 %v990, %v1140
    %v1142 = vsub.f32 %v991, %v1140
    %v1143 = vlaneseq
    %v1144 = vshrl.u32 %v1143, 7
    %v1145 = vsub.s32 0, %v1144
    %v1146 = vrot.slane %v1135, %v1145
    %v1147 = vmul.f32 %v1141, %v1146
    %v1148 = vmul.f32 %v1142, %v1146
    %v1149 = vmul.f32 %v1147, 25.0
    %v1150 = vmul.f32 %v1148, 25.0
    %v1151 = vadd.f32 %v936, %v1149
    %v1152 = vadd.f32 %v937, %v1150
    %v1153 = vrot.slane %v1147, 7
    %v1154 = vrot.slane %v1148, 7
    %v1155 = vsel %vm74, %v1153, %v1154
    %v1156 = vsel %vm74, %v1154, %v1153
    %v1157 = vsel %vm66, %v1156, 0.0
    %v1158 = vsel %vm67, %v1155, 0.0
    %v1159 = vrot.slane %v1147, 1
    %v1160 = vrot.slane %v1148, 1
    %v1161 = vsel %vm81, %v1159, %v1160
    %v1162 = vsel %vm81, %v1160, %v1159
    %v1163 = vsel %vm68, %v1161, 0.0
    %v1164 = vsel %vm69, %v1162, 0.0
    %1165 = vrot.lane.b32.xlu0 %v1147, 32
    %v1166 = vpop.permute.xlu0 %1165
    %v1167 = vsel %vm86, %v1166, %v1147
    %1168 = vrot.lane.b32.xlu0 %v1148, 32
    %v1169 = vpop.permute.xlu0 %1168
    %v1170 = vsel %vm86, %v1169, %v1148
    %1171 = vrot.lane.b32.xlu0 %v1167, 32
    %v1172 = vpop.permute.xlu0 %1171
    %1173 = vrot.lane.b32.xlu0 %v1170, 32
    %v1174 = vpop.permute.xlu0 %1173
    %v1175 = vsel %vm86, %v1172, %v1147
    %v1176 = vsel %vm86, %v1174, %v1148
    %1179 = vrot.lane.b32.xlu0 %v1175, 97
    %v1180 = vpop.permute.xlu0 %1179
    %1181 = vrot.lane.b32.xlu0 %v1176, 97
    %v1182 = vpop.permute.xlu0 %1181
    %v1185 = vsel %vm70, %v1180, 0.0
    %v1186 = vsel %vm70, %v1182, 0.0
    %1187 = vrot.lane.b32.xlu0 %v1175, 127
    %v1188 = vpop.permute.xlu0 %1187
    %1189 = vrot.lane.b32.xlu0 %v1176, 127
    %v1190 = vpop.permute.xlu0 %1189
    %v1193 = vsel %vm71, %v1188, 0.0
    %v1194 = vsel %vm71, %v1190, 0.0
    %v1195 = vadd.f32 %v1147, %v1157
    %v1196 = vadd.f32 %v1148, %v1158
    %v1197 = vadd.f32 %v1195, %v1163
    %v1198 = vadd.f32 %v1196, %v1164
    %v1199 = vadd.f32 %v1197, %v1185
    %v1200 = vadd.f32 %v1198, %v1186
    %v1201 = vadd.f32 %v1199, %v1193
    %v1202 = vadd.f32 %v1200, %v1194
    %v1203 = vsub.f32 %v1201, 2.5
    %v1204 = vsub.f32 %v1202, 2.5
    %v1205 = vmax.f32 %v1203, 0.0
    %v1206 = vmax.f32 %v1204, 0.0
    %v1207 = vsel %vm129, %v1205, inf
    %v1208 = vsel %vm129, %v1206, inf
    %v1209 = vmin.f32 %v1207, %v1208
    %v1210 = vrot.slane %v1209, 4
    %v1211 = vmin.f32 %v1209, %v1210
    %v1212 = vrot.slane %v1211, 2
    %v1213 = vmin.f32 %v1211, %v1212
    %v1214 = vrot.slane %v1213, 1
    %v1215 = vmin.f32 %v1213, %v1214
    %v1216 = vsel %vm129, %v1205, -inf
    %v1217 = vsel %vm129, %v1206, -inf
    %v1218 = vmax.f32 %v1216, %v1217
    %v1219 = vrot.slane %v1218, 4
    %v1220 = vmax.f32 %v1218, %v1219
    %v1221 = vrot.slane %v1220, 2
    %v1222 = vmax.f32 %v1220, %v1221
    %v1223 = vrot.slane %v1222, 1
    %v1224 = vmax.f32 %v1222, %v1223
    %1225 = vrot.lane.b32.xlu0 %v1215, 32
    %v1226 = vpop.permute.xlu0 %1225
    %v1227 = vsel %vm86, %v1226, %v1215
    %1228 = vrot.lane.b32.xlu0 %v1227, 32
    %v1229 = vpop.permute.xlu0 %1228
    %v1230 = vsel %vm86, %v1229, %v1215
    %1232 = vrot.lane.b32.xlu0 %v1230, 97
    %v1233 = vpop.permute.xlu0 %1232
    %1235 = vrot.lane.b32.xlu0 %v1230, 113
    %v1236 = vpop.permute.xlu0 %1235
    %v1238 = vsel %vm148, %v1233, %v1236
    %v1239 = vmin.f32 %v1215, %v1238
    %1240 = vrot.lane.b32.xlu0 %v1224, 32
    %v1241 = vpop.permute.xlu0 %1240
    %v1242 = vsel %vm86, %v1241, %v1224
    %1243 = vrot.lane.b32.xlu0 %v1242, 32
    %v1244 = vpop.permute.xlu0 %1243
    %v1245 = vsel %vm86, %v1244, %v1224
    %1247 = vrot.lane.b32.xlu0 %v1245, 97
    %v1248 = vpop.permute.xlu0 %1247
    %1250 = vrot.lane.b32.xlu0 %v1245, 113
    %v1251 = vpop.permute.xlu0 %1250
    %v1253 = vsel %vm148, %v1248, %v1251
    %v1254 = vmax.f32 %v1224, %v1253
    %1255 = vrot.lane.b32.xlu0 %v1239, 32
    %v1256 = vpop.permute.xlu0 %1255
    %v1257 = vsel %vm86, %v1256, %v1239
    %1258 = vrot.lane.b32.xlu0 %v1257, 32
    %v1259 = vpop.permute.xlu0 %1258
    %v1260 = vsel %vm86, %v1259, %v1239
    %1262 = vrot.lane.b32.xlu0 %v1260, 98
    %v1263 = vpop.permute.xlu0 %1262
    %1265 = vrot.lane.b32.xlu0 %v1260, 114
    %v1266 = vpop.permute.xlu0 %1265
    %v1268 = vsel %vm179, %v1263, %v1266
    %v1269 = vmin.f32 %v1239, %v1268
    %1270 = vrot.lane.b32.xlu0 %v1254, 32
    %v1271 = vpop.permute.xlu0 %1270
    %v1272 = vsel %vm86, %v1271, %v1254
    %1273 = vrot.lane.b32.xlu0 %v1272, 32
    %v1274 = vpop.permute.xlu0 %1273
    %v1275 = vsel %vm86, %v1274, %v1254
    %1277 = vrot.lane.b32.xlu0 %v1275, 98
    %v1278 = vpop.permute.xlu0 %1277
    %1280 = vrot.lane.b32.xlu0 %v1275, 114
    %v1281 = vpop.permute.xlu0 %1280
    %v1283 = vsel %vm179, %v1278, %v1281
    %v1284 = vmax.f32 %v1254, %v1283
    %1285 = vrot.lane.b32.xlu0 %v1269, 32
    %v1286 = vpop.permute.xlu0 %1285
    %v1287 = vsel %vm86, %v1286, %v1269
    %1288 = vrot.lane.b32.xlu0 %v1287, 32
    %v1289 = vpop.permute.xlu0 %1288
    %v1290 = vsel %vm86, %v1289, %v1269
    %1292 = vrot.lane.b32.xlu0 %v1290, 100
    %v1293 = vpop.permute.xlu0 %1292
    %1295 = vrot.lane.b32.xlu0 %v1290, 116
    %v1296 = vpop.permute.xlu0 %1295
    %v1298 = vsel %vm210, %v1293, %v1296
    %v1299 = vmin.f32 %v1269, %v1298
    %1300 = vrot.lane.b32.xlu0 %v1284, 32
    %v1301 = vpop.permute.xlu0 %1300
    %v1302 = vsel %vm86, %v1301, %v1284
    %1303 = vrot.lane.b32.xlu0 %v1302, 32
    %v1304 = vpop.permute.xlu0 %1303
    %v1305 = vsel %vm86, %v1304, %v1284
    %1307 = vrot.lane.b32.xlu0 %v1305, 100
    %v1308 = vpop.permute.xlu0 %1307
    %1310 = vrot.lane.b32.xlu0 %v1305, 116
    %v1311 = vpop.permute.xlu0 %1310
    %v1313 = vsel %vm210, %v1308, %v1311
    %v1314 = vmax.f32 %v1284, %v1313
    %1315 = vrot.lane.b32.xlu0 %v1299, 32
    %v1316 = vpop.permute.xlu0 %1315
    %v1317 = vsel %vm86, %v1316, %v1299
    %1318 = vrot.lane.b32.xlu0 %v1317, 32
    %v1319 = vpop.permute.xlu0 %1318
    %v1320 = vsel %vm86, %v1319, %v1299
    %1322 = vrot.lane.b32.xlu0 %v1320, 104
    %v1323 = vpop.permute.xlu0 %1322
    %1325 = vrot.lane.b32.xlu0 %v1320, 120
    %v1326 = vpop.permute.xlu0 %1325
    %v1328 = vsel %vm241, %v1323, %v1326
    %v1329 = vmin.f32 %v1299, %v1328
    %1330 = vrot.lane.b32.xlu0 %v1314, 32
    %v1331 = vpop.permute.xlu0 %1330
    %v1332 = vsel %vm86, %v1331, %v1314
    %1333 = vrot.lane.b32.xlu0 %v1332, 32
    %v1334 = vpop.permute.xlu0 %1333
    %v1335 = vsel %vm86, %v1334, %v1314
    %1337 = vrot.lane.b32.xlu0 %v1335, 104
    %v1338 = vpop.permute.xlu0 %1337
    %1340 = vrot.lane.b32.xlu0 %v1335, 120
    %v1341 = vpop.permute.xlu0 %1340
    %v1343 = vsel %vm241, %v1338, %v1341
    %v1344 = vmax.f32 %v1314, %v1343
    %v1345 = vsub.f32 %v1344, %v1329
    %vm1346 = vcmp.gt.f32.partialorder %v1345, 0.0
    %v1347 = vsel %vm1346, 1.0, 0.2
    %v1348 = vsel %vm1346, %v1345, 1.0
    %v1349 = vrcp.pop %v1348
    %v1350 = vmul.f32 %v1347, %v1349
    %v1351 = vsel %vm1346, %v1329, 0.0
    %v1352 = vlaneseq
    %v1353 = vshrl.u32 %v1352, 7
    %v1354 = vsub.s32 0, %v1353
    %v1355 = vrot.slane %v1351, %v1354
    %v1356 = vsub.f32 %v1205, %v1355
    %v1357 = vsub.f32 %v1206, %v1355
    %v1358 = vlaneseq
    %v1359 = vshrl.u32 %v1358, 7
    %v1360 = vsub.s32 0, %v1359
    %v1361 = vrot.slane %v1350, %v1360
    %v1362 = vmul.f32 %v1356, %v1361
    %v1363 = vmul.f32 %v1357, %v1361
    %v1364 = vmul.f32 %v1362, 36.0
    %v1365 = vmul.f32 %v1363, 36.0
    %v1366 = vadd.f32 %v1151, %v1364
    %v1367 = vadd.f32 %v1152, %v1365
    %v1368 = vrot.slane %v1362, 7
    %v1369 = vrot.slane %v1363, 7
    %v1370 = vsel %vm74, %v1368, %v1369
    %v1371 = vsel %vm74, %v1369, %v1368
    %v1372 = vsel %vm66, %v1371, 0.0
    %v1373 = vsel %vm67, %v1370, 0.0
    %v1374 = vrot.slane %v1362, 1
    %v1375 = vrot.slane %v1363, 1
    %v1376 = vsel %vm81, %v1374, %v1375
    %v1377 = vsel %vm81, %v1375, %v1374
    %v1378 = vsel %vm68, %v1376, 0.0
    %v1379 = vsel %vm69, %v1377, 0.0
    %1380 = vrot.lane.b32.xlu0 %v1362, 32
    %v1381 = vpop.permute.xlu0 %1380
    %v1382 = vsel %vm86, %v1381, %v1362
    %1383 = vrot.lane.b32.xlu0 %v1363, 32
    %v1384 = vpop.permute.xlu0 %1383
    %v1385 = vsel %vm86, %v1384, %v1363
    %1386 = vrot.lane.b32.xlu0 %v1382, 32
    %v1387 = vpop.permute.xlu0 %1386
    %1388 = vrot.lane.b32.xlu0 %v1385, 32
    %v1389 = vpop.permute.xlu0 %1388
    %v1390 = vsel %vm86, %v1387, %v1362
    %v1391 = vsel %vm86, %v1389, %v1363
    %1394 = vrot.lane.b32.xlu0 %v1390, 97
    %v1395 = vpop.permute.xlu0 %1394
    %1396 = vrot.lane.b32.xlu0 %v1391, 97
    %v1397 = vpop.permute.xlu0 %1396
    %v1400 = vsel %vm70, %v1395, 0.0
    %v1401 = vsel %vm70, %v1397, 0.0
    %1402 = vrot.lane.b32.xlu0 %v1390, 127
    %v1403 = vpop.permute.xlu0 %1402
    %1404 = vrot.lane.b32.xlu0 %v1391, 127
    %v1405 = vpop.permute.xlu0 %1404
    %v1408 = vsel %vm71, %v1403, 0.0
    %v1409 = vsel %vm71, %v1405, 0.0
    %v1410 = vadd.f32 %v1362, %v1372
    %v1411 = vadd.f32 %v1363, %v1373
    %v1412 = vadd.f32 %v1410, %v1378
    %v1413 = vadd.f32 %v1411, %v1379
    %v1414 = vadd.f32 %v1412, %v1400
    %v1415 = vadd.f32 %v1413, %v1401
    %v1416 = vadd.f32 %v1414, %v1408
    %v1417 = vadd.f32 %v1415, %v1409
    %v1418 = vsub.f32 %v1416, 2.5
    %v1419 = vsub.f32 %v1417, 2.5
    %v1420 = vmax.f32 %v1418, 0.0
    %v1421 = vmax.f32 %v1419, 0.0
    %v1422 = vsel %vm129, %v1420, inf
    %v1423 = vsel %vm129, %v1421, inf
    %v1424 = vmin.f32 %v1422, %v1423
    %v1425 = vrot.slane %v1424, 4
    %v1426 = vmin.f32 %v1424, %v1425
    %v1427 = vrot.slane %v1426, 2
    %v1428 = vmin.f32 %v1426, %v1427
    %v1429 = vrot.slane %v1428, 1
    %v1430 = vmin.f32 %v1428, %v1429
    %v1431 = vsel %vm129, %v1420, -inf
    %v1432 = vsel %vm129, %v1421, -inf
    %v1433 = vmax.f32 %v1431, %v1432
    %v1434 = vrot.slane %v1433, 4
    %v1435 = vmax.f32 %v1433, %v1434
    %v1436 = vrot.slane %v1435, 2
    %v1437 = vmax.f32 %v1435, %v1436
    %v1438 = vrot.slane %v1437, 1
    %v1439 = vmax.f32 %v1437, %v1438
    %1440 = vrot.lane.b32.xlu0 %v1430, 32
    %v1441 = vpop.permute.xlu0 %1440
    %v1442 = vsel %vm86, %v1441, %v1430
    %1443 = vrot.lane.b32.xlu0 %v1442, 32
    %v1444 = vpop.permute.xlu0 %1443
    %v1445 = vsel %vm86, %v1444, %v1430
    %1447 = vrot.lane.b32.xlu0 %v1445, 97
    %v1448 = vpop.permute.xlu0 %1447
    %1450 = vrot.lane.b32.xlu0 %v1445, 113
    %v1451 = vpop.permute.xlu0 %1450
    %v1453 = vsel %vm148, %v1448, %v1451
    %v1454 = vmin.f32 %v1430, %v1453
    %1455 = vrot.lane.b32.xlu0 %v1439, 32
    %v1456 = vpop.permute.xlu0 %1455
    %v1457 = vsel %vm86, %v1456, %v1439
    %1458 = vrot.lane.b32.xlu0 %v1457, 32
    %v1459 = vpop.permute.xlu0 %1458
    %v1460 = vsel %vm86, %v1459, %v1439
    %1462 = vrot.lane.b32.xlu0 %v1460, 97
    %v1463 = vpop.permute.xlu0 %1462
    %1465 = vrot.lane.b32.xlu0 %v1460, 113
    %v1466 = vpop.permute.xlu0 %1465
    %v1468 = vsel %vm148, %v1463, %v1466
    %v1469 = vmax.f32 %v1439, %v1468
    %1470 = vrot.lane.b32.xlu0 %v1454, 32
    %v1471 = vpop.permute.xlu0 %1470
    %v1472 = vsel %vm86, %v1471, %v1454
    %1473 = vrot.lane.b32.xlu0 %v1472, 32
    %v1474 = vpop.permute.xlu0 %1473
    %v1475 = vsel %vm86, %v1474, %v1454
    %1477 = vrot.lane.b32.xlu0 %v1475, 98
    %v1478 = vpop.permute.xlu0 %1477
    %1480 = vrot.lane.b32.xlu0 %v1475, 114
    %v1481 = vpop.permute.xlu0 %1480
    %v1483 = vsel %vm179, %v1478, %v1481
    %v1484 = vmin.f32 %v1454, %v1483
    %1485 = vrot.lane.b32.xlu0 %v1469, 32
    %v1486 = vpop.permute.xlu0 %1485
    %v1487 = vsel %vm86, %v1486, %v1469
    %1488 = vrot.lane.b32.xlu0 %v1487, 32
    %v1489 = vpop.permute.xlu0 %1488
    %v1490 = vsel %vm86, %v1489, %v1469
    %1492 = vrot.lane.b32.xlu0 %v1490, 98
    %v1493 = vpop.permute.xlu0 %1492
    %1495 = vrot.lane.b32.xlu0 %v1490, 114
    %v1496 = vpop.permute.xlu0 %1495
    %v1498 = vsel %vm179, %v1493, %v1496
    %v1499 = vmax.f32 %v1469, %v1498
    %1500 = vrot.lane.b32.xlu0 %v1484, 32
    %v1501 = vpop.permute.xlu0 %1500
    %v1502 = vsel %vm86, %v1501, %v1484
    %1503 = vrot.lane.b32.xlu0 %v1502, 32
    %v1504 = vpop.permute.xlu0 %1503
    %v1505 = vsel %vm86, %v1504, %v1484
    %1507 = vrot.lane.b32.xlu0 %v1505, 100
    %v1508 = vpop.permute.xlu0 %1507
    %1510 = vrot.lane.b32.xlu0 %v1505, 116
    %v1511 = vpop.permute.xlu0 %1510
    %v1513 = vsel %vm210, %v1508, %v1511
    %v1514 = vmin.f32 %v1484, %v1513
    %1515 = vrot.lane.b32.xlu0 %v1499, 32
    %v1516 = vpop.permute.xlu0 %1515
    %v1517 = vsel %vm86, %v1516, %v1499
    %1518 = vrot.lane.b32.xlu0 %v1517, 32
    %v1519 = vpop.permute.xlu0 %1518
    %v1520 = vsel %vm86, %v1519, %v1499
    %1522 = vrot.lane.b32.xlu0 %v1520, 100
    %v1523 = vpop.permute.xlu0 %1522
    %1525 = vrot.lane.b32.xlu0 %v1520, 116
    %v1526 = vpop.permute.xlu0 %1525
    %v1528 = vsel %vm210, %v1523, %v1526
    %v1529 = vmax.f32 %v1499, %v1528
    %1530 = vrot.lane.b32.xlu0 %v1514, 32
    %v1531 = vpop.permute.xlu0 %1530
    %v1532 = vsel %vm86, %v1531, %v1514
    %1533 = vrot.lane.b32.xlu0 %v1532, 32
    %v1534 = vpop.permute.xlu0 %1533
    %v1535 = vsel %vm86, %v1534, %v1514
    %1537 = vrot.lane.b32.xlu0 %v1535, 104
    %v1538 = vpop.permute.xlu0 %1537
    %1540 = vrot.lane.b32.xlu0 %v1535, 120
    %v1541 = vpop.permute.xlu0 %1540
    %v1543 = vsel %vm241, %v1538, %v1541
    %v1544 = vmin.f32 %v1514, %v1543
    %1545 = vrot.lane.b32.xlu0 %v1529, 32
    %v1546 = vpop.permute.xlu0 %1545
    %v1547 = vsel %vm86, %v1546, %v1529
    %1548 = vrot.lane.b32.xlu0 %v1547, 32
    %v1549 = vpop.permute.xlu0 %1548
    %v1550 = vsel %vm86, %v1549, %v1529
    %1552 = vrot.lane.b32.xlu0 %v1550, 104
    %v1553 = vpop.permute.xlu0 %1552
    %1555 = vrot.lane.b32.xlu0 %v1550, 120
    %v1556 = vpop.permute.xlu0 %1555
    %v1558 = vsel %vm241, %v1553, %v1556
    %v1559 = vmax.f32 %v1529, %v1558
    %v1560 = vsub.f32 %v1559, %v1544
    %vm1561 = vcmp.gt.f32.partialorder %v1560, 0.0
    %v1562 = vsel %vm1561, 1.0, 0.2
    %v1563 = vsel %vm1561, %v1560, 1.0
    %v1564 = vrcp.pop %v1563
    %v1565 = vmul.f32 %v1562, %v1564
    %v1566 = vsel %vm1561, %v1544, 0.0
    %v1567 = vlaneseq
    %v1568 = vshrl.u32 %v1567, 7
    %v1569 = vsub.s32 0, %v1568
    %v1570 = vrot.slane %v1566, %v1569
    %v1571 = vsub.f32 %v1420, %v1570
    %v1572 = vsub.f32 %v1421, %v1570
    %v1573 = vlaneseq
    %v1574 = vshrl.u32 %v1573, 7
    %v1575 = vsub.s32 0, %v1574
    %v1576 = vrot.slane %v1565, %v1575
    %v1577 = vmul.f32 %v1571, %v1576
    %v1578 = vmul.f32 %v1572, %v1576
    %v1579 = vmul.f32 %v1577, 49.0
    %v1580 = vmul.f32 %v1578, 49.0
    %v1581 = vadd.f32 %v1366, %v1579
    %v1582 = vadd.f32 %v1367, %v1580
    %v1583 = vrot.slane %v1577, 7
    %v1584 = vrot.slane %v1578, 7
    %v1585 = vsel %vm74, %v1583, %v1584
    %v1586 = vsel %vm74, %v1584, %v1583
    %v1587 = vsel %vm66, %v1586, 0.0
    %v1588 = vsel %vm67, %v1585, 0.0
    %v1589 = vrot.slane %v1577, 1
    %v1590 = vrot.slane %v1578, 1
    %v1591 = vsel %vm81, %v1589, %v1590
    %v1592 = vsel %vm81, %v1590, %v1589
    %v1593 = vsel %vm68, %v1591, 0.0
    %v1594 = vsel %vm69, %v1592, 0.0
    %1595 = vrot.lane.b32.xlu0 %v1577, 32
    %v1596 = vpop.permute.xlu0 %1595
    %v1597 = vsel %vm86, %v1596, %v1577
    %1598 = vrot.lane.b32.xlu0 %v1578, 32
    %v1599 = vpop.permute.xlu0 %1598
    %v1600 = vsel %vm86, %v1599, %v1578
    %1601 = vrot.lane.b32.xlu0 %v1597, 32
    %v1602 = vpop.permute.xlu0 %1601
    %1603 = vrot.lane.b32.xlu0 %v1600, 32
    %v1604 = vpop.permute.xlu0 %1603
    %v1605 = vsel %vm86, %v1602, %v1577
    %v1606 = vsel %vm86, %v1604, %v1578
    %1609 = vrot.lane.b32.xlu0 %v1605, 97
    %v1610 = vpop.permute.xlu0 %1609
    %1611 = vrot.lane.b32.xlu0 %v1606, 97
    %v1612 = vpop.permute.xlu0 %1611
    %v1615 = vsel %vm70, %v1610, 0.0
    %v1616 = vsel %vm70, %v1612, 0.0
    %1617 = vrot.lane.b32.xlu0 %v1605, 127
    %v1618 = vpop.permute.xlu0 %1617
    %1619 = vrot.lane.b32.xlu0 %v1606, 127
    %v1620 = vpop.permute.xlu0 %1619
    %v1623 = vsel %vm71, %v1618, 0.0
    %v1624 = vsel %vm71, %v1620, 0.0
    %v1625 = vadd.f32 %v1577, %v1587
    %v1626 = vadd.f32 %v1578, %v1588
    %v1627 = vadd.f32 %v1625, %v1593
    %v1628 = vadd.f32 %v1626, %v1594
    %v1629 = vadd.f32 %v1627, %v1615
    %v1630 = vadd.f32 %v1628, %v1616
    %v1631 = vadd.f32 %v1629, %v1623
    %v1632 = vadd.f32 %v1630, %v1624
    %v1633 = vsub.f32 %v1631, 2.5
    %v1634 = vsub.f32 %v1632, 2.5
    %v1635 = vmax.f32 %v1633, 0.0
    %v1636 = vmax.f32 %v1634, 0.0
    %v1637 = vsel %vm129, %v1635, inf
    %v1638 = vsel %vm129, %v1636, inf
    %v1639 = vmin.f32 %v1637, %v1638
    %v1640 = vrot.slane %v1639, 4
    %v1641 = vmin.f32 %v1639, %v1640
    %v1642 = vrot.slane %v1641, 2
    %v1643 = vmin.f32 %v1641, %v1642
    %v1644 = vrot.slane %v1643, 1
    %v1645 = vmin.f32 %v1643, %v1644
    %v1646 = vsel %vm129, %v1635, -inf
    %v1647 = vsel %vm129, %v1636, -inf
    %v1648 = vmax.f32 %v1646, %v1647
    %v1649 = vrot.slane %v1648, 4
    %v1650 = vmax.f32 %v1648, %v1649
    %v1651 = vrot.slane %v1650, 2
    %v1652 = vmax.f32 %v1650, %v1651
    %v1653 = vrot.slane %v1652, 1
    %v1654 = vmax.f32 %v1652, %v1653
    %1655 = vrot.lane.b32.xlu0 %v1645, 32
    %v1656 = vpop.permute.xlu0 %1655
    %v1657 = vsel %vm86, %v1656, %v1645
    %1658 = vrot.lane.b32.xlu0 %v1657, 32
    %v1659 = vpop.permute.xlu0 %1658
    %v1660 = vsel %vm86, %v1659, %v1645
    %1662 = vrot.lane.b32.xlu0 %v1660, 97
    %v1663 = vpop.permute.xlu0 %1662
    %1665 = vrot.lane.b32.xlu0 %v1660, 113
    %v1666 = vpop.permute.xlu0 %1665
    %v1668 = vsel %vm148, %v1663, %v1666
    %v1669 = vmin.f32 %v1645, %v1668
    %1670 = vrot.lane.b32.xlu0 %v1654, 32
    %v1671 = vpop.permute.xlu0 %1670
    %v1672 = vsel %vm86, %v1671, %v1654
    %1673 = vrot.lane.b32.xlu0 %v1672, 32
    %v1674 = vpop.permute.xlu0 %1673
    %v1675 = vsel %vm86, %v1674, %v1654
    %1677 = vrot.lane.b32.xlu0 %v1675, 97
    %v1678 = vpop.permute.xlu0 %1677
    %1680 = vrot.lane.b32.xlu0 %v1675, 113
    %v1681 = vpop.permute.xlu0 %1680
    %v1683 = vsel %vm148, %v1678, %v1681
    %v1684 = vmax.f32 %v1654, %v1683
    %1685 = vrot.lane.b32.xlu0 %v1669, 32
    %v1686 = vpop.permute.xlu0 %1685
    %v1687 = vsel %vm86, %v1686, %v1669
    %1688 = vrot.lane.b32.xlu0 %v1687, 32
    %v1689 = vpop.permute.xlu0 %1688
    %v1690 = vsel %vm86, %v1689, %v1669
    %1692 = vrot.lane.b32.xlu0 %v1690, 98
    %v1693 = vpop.permute.xlu0 %1692
    %1695 = vrot.lane.b32.xlu0 %v1690, 114
    %v1696 = vpop.permute.xlu0 %1695
    %v1698 = vsel %vm179, %v1693, %v1696
    %v1699 = vmin.f32 %v1669, %v1698
    %1700 = vrot.lane.b32.xlu0 %v1684, 32
    %v1701 = vpop.permute.xlu0 %1700
    %v1702 = vsel %vm86, %v1701, %v1684
    %1703 = vrot.lane.b32.xlu0 %v1702, 32
    %v1704 = vpop.permute.xlu0 %1703
    %v1705 = vsel %vm86, %v1704, %v1684
    %1707 = vrot.lane.b32.xlu0 %v1705, 98
    %v1708 = vpop.permute.xlu0 %1707
    %1710 = vrot.lane.b32.xlu0 %v1705, 114
    %v1711 = vpop.permute.xlu0 %1710
    %v1713 = vsel %vm179, %v1708, %v1711
    %v1714 = vmax.f32 %v1684, %v1713
    %1715 = vrot.lane.b32.xlu0 %v1699, 32
    %v1716 = vpop.permute.xlu0 %1715
    %v1717 = vsel %vm86, %v1716, %v1699
    %1718 = vrot.lane.b32.xlu0 %v1717, 32
    %v1719 = vpop.permute.xlu0 %1718
    %v1720 = vsel %vm86, %v1719, %v1699
    %1722 = vrot.lane.b32.xlu0 %v1720, 100
    %v1723 = vpop.permute.xlu0 %1722
    %1725 = vrot.lane.b32.xlu0 %v1720, 116
    %v1726 = vpop.permute.xlu0 %1725
    %v1728 = vsel %vm210, %v1723, %v1726
    %v1729 = vmin.f32 %v1699, %v1728
    %1730 = vrot.lane.b32.xlu0 %v1714, 32
    %v1731 = vpop.permute.xlu0 %1730
    %v1732 = vsel %vm86, %v1731, %v1714
    %1733 = vrot.lane.b32.xlu0 %v1732, 32
    %v1734 = vpop.permute.xlu0 %1733
    %v1735 = vsel %vm86, %v1734, %v1714
    %1737 = vrot.lane.b32.xlu0 %v1735, 100
    %v1738 = vpop.permute.xlu0 %1737
    %1740 = vrot.lane.b32.xlu0 %v1735, 116
    %v1741 = vpop.permute.xlu0 %1740
    %v1743 = vsel %vm210, %v1738, %v1741
    %v1744 = vmax.f32 %v1714, %v1743
    %1745 = vrot.lane.b32.xlu0 %v1729, 32
    %v1746 = vpop.permute.xlu0 %1745
    %v1747 = vsel %vm86, %v1746, %v1729
    %1748 = vrot.lane.b32.xlu0 %v1747, 32
    %v1749 = vpop.permute.xlu0 %1748
    %v1750 = vsel %vm86, %v1749, %v1729
    %1752 = vrot.lane.b32.xlu0 %v1750, 104
    %v1753 = vpop.permute.xlu0 %1752
    %1755 = vrot.lane.b32.xlu0 %v1750, 120
    %v1756 = vpop.permute.xlu0 %1755
    %v1758 = vsel %vm241, %v1753, %v1756
    %v1759 = vmin.f32 %v1729, %v1758
    %1760 = vrot.lane.b32.xlu0 %v1744, 32
    %v1761 = vpop.permute.xlu0 %1760
    %v1762 = vsel %vm86, %v1761, %v1744
    %1763 = vrot.lane.b32.xlu0 %v1762, 32
    %v1764 = vpop.permute.xlu0 %1763
    %v1765 = vsel %vm86, %v1764, %v1744
    %1767 = vrot.lane.b32.xlu0 %v1765, 104
    %v1768 = vpop.permute.xlu0 %1767
    %1770 = vrot.lane.b32.xlu0 %v1765, 120
    %v1771 = vpop.permute.xlu0 %1770
    %v1773 = vsel %vm241, %v1768, %v1771
    %v1774 = vmax.f32 %v1744, %v1773
    %v1775 = vsub.f32 %v1774, %v1759
    %vm1776 = vcmp.gt.f32.partialorder %v1775, 0.0
    %v1777 = vsel %vm1776, 1.0, 0.2
    %v1778 = vsel %vm1776, %v1775, 1.0
    %v1779 = vrcp.pop %v1778
    %v1780 = vmul.f32 %v1777, %v1779
    %v1781 = vsel %vm1776, %v1759, 0.0
    %v1782 = vlaneseq
    %v1783 = vshrl.u32 %v1782, 7
    %v1784 = vsub.s32 0, %v1783
    %v1785 = vrot.slane %v1781, %v1784
    %v1786 = vsub.f32 %v1635, %v1785
    %v1787 = vsub.f32 %v1636, %v1785
    %v1788 = vlaneseq
    %v1789 = vshrl.u32 %v1788, 7
    %v1790 = vsub.s32 0, %v1789
    %v1791 = vrot.slane %v1780, %v1790
    %v1792 = vmul.f32 %v1786, %v1791
    %v1793 = vmul.f32 %v1787, %v1791
    %v1794 = vmul.f32 %v1792, 64.0
    %v1795 = vmul.f32 %v1793, 64.0
    %v1796 = vadd.f32 %v1581, %v1794
    %v1797 = vadd.f32 %v1582, %v1795
    %v1798 = vrot.slane %v1792, 7
    %v1799 = vrot.slane %v1793, 7
    %v1800 = vsel %vm74, %v1798, %v1799
    %v1801 = vsel %vm74, %v1799, %v1798
    %v1802 = vsel %vm66, %v1801, 0.0
    %v1803 = vsel %vm67, %v1800, 0.0
    %v1804 = vrot.slane %v1792, 1
    %v1805 = vrot.slane %v1793, 1
    %v1806 = vsel %vm81, %v1804, %v1805
    %v1807 = vsel %vm81, %v1805, %v1804
    %v1808 = vsel %vm68, %v1806, 0.0
    %v1809 = vsel %vm69, %v1807, 0.0
    %1810 = vrot.lane.b32.xlu0 %v1792, 32
    %v1811 = vpop.permute.xlu0 %1810
    %v1812 = vsel %vm86, %v1811, %v1792
    %1813 = vrot.lane.b32.xlu0 %v1793, 32
    %v1814 = vpop.permute.xlu0 %1813
    %v1815 = vsel %vm86, %v1814, %v1793
    %1816 = vrot.lane.b32.xlu0 %v1812, 32
    %v1817 = vpop.permute.xlu0 %1816
    %1818 = vrot.lane.b32.xlu0 %v1815, 32
    %v1819 = vpop.permute.xlu0 %1818
    %v1820 = vsel %vm86, %v1817, %v1792
    %v1821 = vsel %vm86, %v1819, %v1793
    %1824 = vrot.lane.b32.xlu0 %v1820, 97
    %v1825 = vpop.permute.xlu0 %1824
    %1826 = vrot.lane.b32.xlu0 %v1821, 97
    %v1827 = vpop.permute.xlu0 %1826
    %v1830 = vsel %vm70, %v1825, 0.0
    %v1831 = vsel %vm70, %v1827, 0.0
    %1832 = vrot.lane.b32.xlu0 %v1820, 127
    %v1833 = vpop.permute.xlu0 %1832
    %1834 = vrot.lane.b32.xlu0 %v1821, 127
    %v1835 = vpop.permute.xlu0 %1834
    %v1838 = vsel %vm71, %v1833, 0.0
    %v1839 = vsel %vm71, %v1835, 0.0
    %v1840 = vadd.f32 %v1792, %v1802
    %v1841 = vadd.f32 %v1793, %v1803
    %v1842 = vadd.f32 %v1840, %v1808
    %v1843 = vadd.f32 %v1841, %v1809
    %v1844 = vadd.f32 %v1842, %v1830
    %v1845 = vadd.f32 %v1843, %v1831
    %v1846 = vadd.f32 %v1844, %v1838
    %v1847 = vadd.f32 %v1845, %v1839
    %v1848 = vsub.f32 %v1846, 2.5
    %v1849 = vsub.f32 %v1847, 2.5
    %v1850 = vmax.f32 %v1848, 0.0
    %v1851 = vmax.f32 %v1849, 0.0
    %v1852 = vsel %vm129, %v1850, inf
    %v1853 = vsel %vm129, %v1851, inf
    %v1854 = vmin.f32 %v1852, %v1853
    %v1855 = vrot.slane %v1854, 4
    %v1856 = vmin.f32 %v1854, %v1855
    %v1857 = vrot.slane %v1856, 2
    %v1858 = vmin.f32 %v1856, %v1857
    %v1859 = vrot.slane %v1858, 1
    %v1860 = vmin.f32 %v1858, %v1859
    %v1861 = vsel %vm129, %v1850, -inf
    %v1862 = vsel %vm129, %v1851, -inf
    %v1863 = vmax.f32 %v1861, %v1862
    %v1864 = vrot.slane %v1863, 4
    %v1865 = vmax.f32 %v1863, %v1864
    %v1866 = vrot.slane %v1865, 2
    %v1867 = vmax.f32 %v1865, %v1866
    %v1868 = vrot.slane %v1867, 1
    %v1869 = vmax.f32 %v1867, %v1868
    %1870 = vrot.lane.b32.xlu0 %v1860, 32
    %v1871 = vpop.permute.xlu0 %1870
    %v1872 = vsel %vm86, %v1871, %v1860
    %1873 = vrot.lane.b32.xlu0 %v1872, 32
    %v1874 = vpop.permute.xlu0 %1873
    %v1875 = vsel %vm86, %v1874, %v1860
    %1877 = vrot.lane.b32.xlu0 %v1875, 97
    %v1878 = vpop.permute.xlu0 %1877
    %1880 = vrot.lane.b32.xlu0 %v1875, 113
    %v1881 = vpop.permute.xlu0 %1880
    %v1883 = vsel %vm148, %v1878, %v1881
    %v1884 = vmin.f32 %v1860, %v1883
    %1885 = vrot.lane.b32.xlu0 %v1869, 32
    %v1886 = vpop.permute.xlu0 %1885
    %v1887 = vsel %vm86, %v1886, %v1869
    %1888 = vrot.lane.b32.xlu0 %v1887, 32
    %v1889 = vpop.permute.xlu0 %1888
    %v1890 = vsel %vm86, %v1889, %v1869
    %1892 = vrot.lane.b32.xlu0 %v1890, 97
    %v1893 = vpop.permute.xlu0 %1892
    %1895 = vrot.lane.b32.xlu0 %v1890, 113
    %v1896 = vpop.permute.xlu0 %1895
    %v1898 = vsel %vm148, %v1893, %v1896
    %v1899 = vmax.f32 %v1869, %v1898
    %1900 = vrot.lane.b32.xlu0 %v1884, 32
    %v1901 = vpop.permute.xlu0 %1900
    %v1902 = vsel %vm86, %v1901, %v1884
    %1903 = vrot.lane.b32.xlu0 %v1902, 32
    %v1904 = vpop.permute.xlu0 %1903
    %v1905 = vsel %vm86, %v1904, %v1884
    %1907 = vrot.lane.b32.xlu0 %v1905, 98
    %v1908 = vpop.permute.xlu0 %1907
    %1910 = vrot.lane.b32.xlu0 %v1905, 114
    %v1911 = vpop.permute.xlu0 %1910
    %v1913 = vsel %vm179, %v1908, %v1911
    %v1914 = vmin.f32 %v1884, %v1913
    %1915 = vrot.lane.b32.xlu0 %v1899, 32
    %v1916 = vpop.permute.xlu0 %1915
    %v1917 = vsel %vm86, %v1916, %v1899
    %1918 = vrot.lane.b32.xlu0 %v1917, 32
    %v1919 = vpop.permute.xlu0 %1918
    %v1920 = vsel %vm86, %v1919, %v1899
    %1922 = vrot.lane.b32.xlu0 %v1920, 98
    %v1923 = vpop.permute.xlu0 %1922
    %1925 = vrot.lane.b32.xlu0 %v1920, 114
    %v1926 = vpop.permute.xlu0 %1925
    %v1928 = vsel %vm179, %v1923, %v1926
    %v1929 = vmax.f32 %v1899, %v1928
    %1930 = vrot.lane.b32.xlu0 %v1914, 32
    %v1931 = vpop.permute.xlu0 %1930
    %v1932 = vsel %vm86, %v1931, %v1914
    %1933 = vrot.lane.b32.xlu0 %v1932, 32
    %v1934 = vpop.permute.xlu0 %1933
    %v1935 = vsel %vm86, %v1934, %v1914
    %1937 = vrot.lane.b32.xlu0 %v1935, 100
    %v1938 = vpop.permute.xlu0 %1937
    %1940 = vrot.lane.b32.xlu0 %v1935, 116
    %v1941 = vpop.permute.xlu0 %1940
    %v1943 = vsel %vm210, %v1938, %v1941
    %v1944 = vmin.f32 %v1914, %v1943
    %1945 = vrot.lane.b32.xlu0 %v1929, 32
    %v1946 = vpop.permute.xlu0 %1945
    %v1947 = vsel %vm86, %v1946, %v1929
    %1948 = vrot.lane.b32.xlu0 %v1947, 32
    %v1949 = vpop.permute.xlu0 %1948
    %v1950 = vsel %vm86, %v1949, %v1929
    %1952 = vrot.lane.b32.xlu0 %v1950, 100
    %v1953 = vpop.permute.xlu0 %1952
    %1955 = vrot.lane.b32.xlu0 %v1950, 116
    %v1956 = vpop.permute.xlu0 %1955
    %v1958 = vsel %vm210, %v1953, %v1956
    %v1959 = vmax.f32 %v1929, %v1958
    %1960 = vrot.lane.b32.xlu0 %v1944, 32
    %v1961 = vpop.permute.xlu0 %1960
    %v1962 = vsel %vm86, %v1961, %v1944
    %1963 = vrot.lane.b32.xlu0 %v1962, 32
    %v1964 = vpop.permute.xlu0 %1963
    %v1965 = vsel %vm86, %v1964, %v1944
    %1967 = vrot.lane.b32.xlu0 %v1965, 104
    %v1968 = vpop.permute.xlu0 %1967
    %1970 = vrot.lane.b32.xlu0 %v1965, 120
    %v1971 = vpop.permute.xlu0 %1970
    %v1973 = vsel %vm241, %v1968, %v1971
    %v1974 = vmin.f32 %v1944, %v1973
    %1975 = vrot.lane.b32.xlu0 %v1959, 32
    %v1976 = vpop.permute.xlu0 %1975
    %v1977 = vsel %vm86, %v1976, %v1959
    %1978 = vrot.lane.b32.xlu0 %v1977, 32
    %v1979 = vpop.permute.xlu0 %1978
    %v1980 = vsel %vm86, %v1979, %v1959
    %1982 = vrot.lane.b32.xlu0 %v1980, 104
    %v1983 = vpop.permute.xlu0 %1982
    %1985 = vrot.lane.b32.xlu0 %v1980, 120
    %v1986 = vpop.permute.xlu0 %1985
    %v1988 = vsel %vm241, %v1983, %v1986
    %v1989 = vmax.f32 %v1959, %v1988
    %v1990 = vsub.f32 %v1989, %v1974
    %vm1991 = vcmp.gt.f32.partialorder %v1990, 0.0
    %v1992 = vsel %vm1991, 1.0, 0.2
    %v1993 = vsel %vm1991, %v1990, 1.0
    %v1994 = vrcp.pop %v1993
    %v1995 = vmul.f32 %v1992, %v1994
    %v1996 = vsel %vm1991, %v1974, 0.0
    %v1997 = vlaneseq
    %v1998 = vshrl.u32 %v1997, 7
    %v1999 = vsub.s32 0, %v1998
    %v2000 = vrot.slane %v1996, %v1999
    %v2001 = vsub.f32 %v1850, %v2000
    %v2002 = vsub.f32 %v1851, %v2000
    %v2003 = vlaneseq
    %v2004 = vshrl.u32 %v2003, 7
    %v2005 = vsub.s32 0, %v2004
    %v2006 = vrot.slane %v1995, %v2005
    %v2007 = vmul.f32 %v2001, %v2006
    %v2008 = vmul.f32 %v2002, %v2006
    %v2009 = vmul.f32 %v2007, 81.0
    %v2010 = vmul.f32 %v2008, 81.0
    %v2011 = vadd.f32 %v1796, %v2009
    %v2012 = vadd.f32 %v1797, %v2010
    %v2013 = vrot.slane %v2007, 7
    %v2014 = vrot.slane %v2008, 7
    %v2015 = vsel %vm74, %v2013, %v2014
    %v2016 = vsel %vm74, %v2014, %v2013
    %v2017 = vsel %vm66, %v2016, 0.0
    %v2018 = vsel %vm67, %v2015, 0.0
    %v2019 = vrot.slane %v2007, 1
    %v2020 = vrot.slane %v2008, 1
    %v2021 = vsel %vm81, %v2019, %v2020
    %v2022 = vsel %vm81, %v2020, %v2019
    %v2023 = vsel %vm68, %v2021, 0.0
    %v2024 = vsel %vm69, %v2022, 0.0
    %2025 = vrot.lane.b32.xlu0 %v2007, 32
    %v2026 = vpop.permute.xlu0 %2025
    %v2027 = vsel %vm86, %v2026, %v2007
    %2028 = vrot.lane.b32.xlu0 %v2008, 32
    %v2029 = vpop.permute.xlu0 %2028
    %v2030 = vsel %vm86, %v2029, %v2008
    %2031 = vrot.lane.b32.xlu0 %v2027, 32
    %v2032 = vpop.permute.xlu0 %2031
    %2033 = vrot.lane.b32.xlu0 %v2030, 32
    %v2034 = vpop.permute.xlu0 %2033
    %v2035 = vsel %vm86, %v2032, %v2007
    %v2036 = vsel %vm86, %v2034, %v2008
    %2039 = vrot.lane.b32.xlu0 %v2035, 97
    %v2040 = vpop.permute.xlu0 %2039
    %2041 = vrot.lane.b32.xlu0 %v2036, 97
    %v2042 = vpop.permute.xlu0 %2041
    %v2045 = vsel %vm70, %v2040, 0.0
    %v2046 = vsel %vm70, %v2042, 0.0
    %2047 = vrot.lane.b32.xlu0 %v2035, 127
    %v2048 = vpop.permute.xlu0 %2047
    %2049 = vrot.lane.b32.xlu0 %v2036, 127
    %v2050 = vpop.permute.xlu0 %2049
    %v2053 = vsel %vm71, %v2048, 0.0
    %v2054 = vsel %vm71, %v2050, 0.0
    %v2055 = vadd.f32 %v2007, %v2017
    %v2056 = vadd.f32 %v2008, %v2018
    %v2057 = vadd.f32 %v2055, %v2023
    %v2058 = vadd.f32 %v2056, %v2024
    %v2059 = vadd.f32 %v2057, %v2045
    %v2060 = vadd.f32 %v2058, %v2046
    %v2061 = vadd.f32 %v2059, %v2053
    %v2062 = vadd.f32 %v2060, %v2054
    %v2063 = vsub.f32 %v2061, 2.5
    %v2064 = vsub.f32 %v2062, 2.5
    %v2065 = vmax.f32 %v2063, 0.0
    %v2066 = vmax.f32 %v2064, 0.0
    %v2067 = vsel %vm129, %v2065, inf
    %v2068 = vsel %vm129, %v2066, inf
    %v2069 = vmin.f32 %v2067, %v2068
    %v2070 = vrot.slane %v2069, 4
    %v2071 = vmin.f32 %v2069, %v2070
    %v2072 = vrot.slane %v2071, 2
    %v2073 = vmin.f32 %v2071, %v2072
    %v2074 = vrot.slane %v2073, 1
    %v2075 = vmin.f32 %v2073, %v2074
    %v2076 = vsel %vm129, %v2065, -inf
    %v2077 = vsel %vm129, %v2066, -inf
    %v2078 = vmax.f32 %v2076, %v2077
    %v2079 = vrot.slane %v2078, 4
    %v2080 = vmax.f32 %v2078, %v2079
    %v2081 = vrot.slane %v2080, 2
    %v2082 = vmax.f32 %v2080, %v2081
    %v2083 = vrot.slane %v2082, 1
    %v2084 = vmax.f32 %v2082, %v2083
    %2085 = vrot.lane.b32.xlu0 %v2075, 32
    %v2086 = vpop.permute.xlu0 %2085
    %v2087 = vsel %vm86, %v2086, %v2075
    %2088 = vrot.lane.b32.xlu0 %v2087, 32
    %v2089 = vpop.permute.xlu0 %2088
    %v2090 = vsel %vm86, %v2089, %v2075
    %2092 = vrot.lane.b32.xlu0 %v2090, 97
    %v2093 = vpop.permute.xlu0 %2092
    %2095 = vrot.lane.b32.xlu0 %v2090, 113
    %v2096 = vpop.permute.xlu0 %2095
    %v2098 = vsel %vm148, %v2093, %v2096
    %v2099 = vmin.f32 %v2075, %v2098
    %2100 = vrot.lane.b32.xlu0 %v2084, 32
    %v2101 = vpop.permute.xlu0 %2100
    %v2102 = vsel %vm86, %v2101, %v2084
    %2103 = vrot.lane.b32.xlu0 %v2102, 32
    %v2104 = vpop.permute.xlu0 %2103
    %v2105 = vsel %vm86, %v2104, %v2084
    %2107 = vrot.lane.b32.xlu0 %v2105, 97
    %v2108 = vpop.permute.xlu0 %2107
    %2110 = vrot.lane.b32.xlu0 %v2105, 113
    %v2111 = vpop.permute.xlu0 %2110
    %v2113 = vsel %vm148, %v2108, %v2111
    %v2114 = vmax.f32 %v2084, %v2113
    %2115 = vrot.lane.b32.xlu0 %v2099, 32
    %v2116 = vpop.permute.xlu0 %2115
    %v2117 = vsel %vm86, %v2116, %v2099
    %2118 = vrot.lane.b32.xlu0 %v2117, 32
    %v2119 = vpop.permute.xlu0 %2118
    %v2120 = vsel %vm86, %v2119, %v2099
    %2122 = vrot.lane.b32.xlu0 %v2120, 98
    %v2123 = vpop.permute.xlu0 %2122
    %2125 = vrot.lane.b32.xlu0 %v2120, 114
    %v2126 = vpop.permute.xlu0 %2125
    %v2128 = vsel %vm179, %v2123, %v2126
    %v2129 = vmin.f32 %v2099, %v2128
    %2130 = vrot.lane.b32.xlu0 %v2114, 32
    %v2131 = vpop.permute.xlu0 %2130
    %v2132 = vsel %vm86, %v2131, %v2114
    %2133 = vrot.lane.b32.xlu0 %v2132, 32
    %v2134 = vpop.permute.xlu0 %2133
    %v2135 = vsel %vm86, %v2134, %v2114
    %2137 = vrot.lane.b32.xlu0 %v2135, 98
    %v2138 = vpop.permute.xlu0 %2137
    %2140 = vrot.lane.b32.xlu0 %v2135, 114
    %v2141 = vpop.permute.xlu0 %2140
    %v2143 = vsel %vm179, %v2138, %v2141
    %v2144 = vmax.f32 %v2114, %v2143
    %2145 = vrot.lane.b32.xlu0 %v2129, 32
    %v2146 = vpop.permute.xlu0 %2145
    %v2147 = vsel %vm86, %v2146, %v2129
    %2148 = vrot.lane.b32.xlu0 %v2147, 32
    %v2149 = vpop.permute.xlu0 %2148
    %v2150 = vsel %vm86, %v2149, %v2129
    %2152 = vrot.lane.b32.xlu0 %v2150, 100
    %v2153 = vpop.permute.xlu0 %2152
    %2155 = vrot.lane.b32.xlu0 %v2150, 116
    %v2156 = vpop.permute.xlu0 %2155
    %v2158 = vsel %vm210, %v2153, %v2156
    %v2159 = vmin.f32 %v2129, %v2158
    %2160 = vrot.lane.b32.xlu0 %v2144, 32
    %v2161 = vpop.permute.xlu0 %2160
    %v2162 = vsel %vm86, %v2161, %v2144
    %2163 = vrot.lane.b32.xlu0 %v2162, 32
    %v2164 = vpop.permute.xlu0 %2163
    %v2165 = vsel %vm86, %v2164, %v2144
    %2167 = vrot.lane.b32.xlu0 %v2165, 100
    %v2168 = vpop.permute.xlu0 %2167
    %2170 = vrot.lane.b32.xlu0 %v2165, 116
    %v2171 = vpop.permute.xlu0 %2170
    %v2173 = vsel %vm210, %v2168, %v2171
    %v2174 = vmax.f32 %v2144, %v2173
    %2175 = vrot.lane.b32.xlu0 %v2159, 32
    %v2176 = vpop.permute.xlu0 %2175
    %v2177 = vsel %vm86, %v2176, %v2159
    %2178 = vrot.lane.b32.xlu0 %v2177, 32
    %v2179 = vpop.permute.xlu0 %2178
    %v2180 = vsel %vm86, %v2179, %v2159
    %2182 = vrot.lane.b32.xlu0 %v2180, 104
    %v2183 = vpop.permute.xlu0 %2182
    %2185 = vrot.lane.b32.xlu0 %v2180, 120
    %v2186 = vpop.permute.xlu0 %2185
    %v2188 = vsel %vm241, %v2183, %v2186
    %v2189 = vmin.f32 %v2159, %v2188
    %2190 = vrot.lane.b32.xlu0 %v2174, 32
    %v2191 = vpop.permute.xlu0 %2190
    %v2192 = vsel %vm86, %v2191, %v2174
    %2193 = vrot.lane.b32.xlu0 %v2192, 32
    %v2194 = vpop.permute.xlu0 %2193
    %v2195 = vsel %vm86, %v2194, %v2174
    %2197 = vrot.lane.b32.xlu0 %v2195, 104
    %v2198 = vpop.permute.xlu0 %2197
    %2200 = vrot.lane.b32.xlu0 %v2195, 120
    %v2201 = vpop.permute.xlu0 %2200
    %v2203 = vsel %vm241, %v2198, %v2201
    %v2204 = vmax.f32 %v2174, %v2203
    %v2205 = vsub.f32 %v2204, %v2189
    %vm2206 = vcmp.gt.f32.partialorder %v2205, 0.0
    %v2207 = vsel %vm2206, 1.0, 0.2
    %v2208 = vsel %vm2206, %v2205, 1.0
    %v2209 = vrcp.pop %v2208
    %v2210 = vmul.f32 %v2207, %v2209
    %v2211 = vsel %vm2206, %v2189, 0.0
    %v2212 = vlaneseq
    %v2213 = vshrl.u32 %v2212, 7
    %v2214 = vsub.s32 0, %v2213
    %v2215 = vrot.slane %v2211, %v2214
    %v2216 = vsub.f32 %v2065, %v2215
    %v2217 = vsub.f32 %v2066, %v2215
    %v2218 = vlaneseq
    %v2219 = vshrl.u32 %v2218, 7
    %v2220 = vsub.s32 0, %v2219
    %v2221 = vrot.slane %v2210, %v2220
    %v2222 = vmul.f32 %v2216, %v2221
    %v2223 = vmul.f32 %v2217, %v2221
    %v2224 = vmul.f32 %v2222, 100.0
    %v2225 = vmul.f32 %v2223, 100.0
    %v2226 = vadd.f32 %v2011, %v2224
    %v2227 = vadd.f32 %v2012, %v2225
    %v2228 = vsel %vm129, %v2226, 0.0
    %v2229 = vsel %vm129, %v2227, 0.0
    %v2230 = vadd.f32 %v2228, %v2229
    %v2231 = vrot.slane %v2230, 4
    %v2232 = vadd.f32 %v2230, %v2231
    %v2233 = vrot.slane %v2232, 2
    %v2234 = vadd.f32 %v2232, %v2233
    %v2235 = vrot.slane %v2234, 1
    %v2236 = vadd.f32 %v2234, %v2235
    %v2237 = vsel %vm129, %v2236, 0.0
    %2238 = vadd.xlane.f32.xlu0 %v2237
    %v2239 = vpop.xlane.xlu0 %2238
    %vm2240 = vcmask 0
    %2241 = vst.msk [vmem:[#allocation7] sm:$0x1] %vm2240, %v2239
    // Predicated region
    $region18: #{tpu_custom_call.1} parent=1 // pred_check
      _
    $region19: #{tpu_custom_call.1} parent=1 // pred_check_branch
      %2243 = sbr.rel (0) target = $region21
    $region20: #{tpu_custom_call.1} parent=1 // pred_region
      %s2245 = ssub.s32 16, 16
      %2246 = vsyncadd [#allocation4], %s2245
      %s2248 = sshll.u32 [#allocation7], 4
      %s2249 = int_to_ptr.vmem [resolvable:$true] %s2248
      %2251 = dma.vmem_to_hbm [thread:$0]  %s2249, 16, %s2, [#allocation4]
    $region21: #{tpu_custom_call.1} parent=1 // pred_fallthru
      _
    // Predicated region
    $region22: #{tpu_custom_call.1} parent=1 // pred_check
      _
    $region23: #{tpu_custom_call.1} parent=1 // pred_check_branch
      %2253 = sbr.rel (0) target = $region25
    $region24: #{tpu_custom_call.1} parent=1 // pred_region
      %2254 = dma.done [#allocation4], 16
    $region25: #{tpu_custom_call.1} parent=1 // pred_fallthru
      _
    %2255 = vsyncpa [#allocation3], 1
    %2256 = vsyncpa [#allocation6], 1
    %2257 = vsyncpa [#allocation4], 1

</llo_original>
